<compile_context>
chip_gen: v5e
topology: v5e:2x2
jax: 0.10.0
libtpu: 0.0.40
codegen_flags: <defaults>
</compile_context>

<pallas_src>
import functools

import jax
import jax.numpy as jnp
from jax.experimental import pallas as pl
from jax.experimental.pallas import tpu as pltpu


def _vmem_limit_bytes():
    """Per-generation VMEM budget: ~75% of physical (96 MiB v5e/v6e, 48 MiB v7x)."""
    cap = 128 * 1024 * 1024
    try:
        cap = int(pltpu.get_tpu_info().vmem_capacity_bytes)
    except Exception:  # pragma: no cover - interpret mode / older jaxlib
        pass
    return max(32 * 1024 * 1024, int(cap * 0.75))


def _pick_block(n, max_block, fits=None):
    """Largest multiple-of-8 divisor of n <= max_block passing `fits`.

    Falls back to n itself (single block) when n has no such divisor (tiny or
    non-multiple-of-8 batch), or to the smallest candidate if nothing fits.
    """
    cands = [b for b in range(8, min(n, max_block) + 1, 8) if n % b == 0]
    if not cands:
        return n
    if fits is not None:
        ok = [b for b in cands if fits(b)]
        return ok[-1] if ok else cands[0]
    return cands[-1]


# -----------------------------------------------------------------------------
# Length-masked LSTM (replaces DynamicRNN + packed nn.LSTM, num_layers=1).
# Semantics match pack_padded_sequence / pad_packed_sequence:
#   * outputs[t] = h_t for t < len, 0 for t >= len
#   * h_last     = hidden state at step len-1
# x is time-major (T, N, E) bf16; outputs are batch-first f32.
# -----------------------------------------------------------------------------
def _lstm_kernel(return_outputs, x_ref, len_ref, wih_ref, whh_ref, b_ref, *out_refs):
    if return_outputs:
        out_ref, hlast_ref = out_refs          # (N, T*H), (N, H)
    else:
        (hlast_ref,) = out_refs                # (N, H)

    T, N, E = x_ref.shape
    H = hlast_ref.shape[-1]

    # Hoisted input projection: ONE (T*N, E) @ (E, 4H) bf16 matmul covers every
    # step; accumulate in f32 and add the (f32) fused bias.
    proj = jnp.dot(x_ref[...].reshape(T * N, E), wih_ref[...],
                   preferred_element_type=jnp.float32) + b_ref[...]     # (T*N, 4H) f32

    whh = whh_ref[...]                          # (H, 4H) bf16, gates = [i | f | g | o]
    lengths = len_ref[...]                      # (N, 1) int32

    h = jnp.zeros((N, H), jnp.float32)
    c = jnp.zeros((N, H), jnp.float32)
    outs = []
    for t in range(T):                          # static unroll; serial recurrence
        gates = proj[t * N:(t + 1) * N, :] + jnp.dot(
            h.astype(jnp.bfloat16), whh, preferred_element_type=jnp.float32)
        i_g = jax.nn.sigmoid(gates[:, 0 * H:1 * H])
        f_g = jax.nn.sigmoid(gates[:, 1 * H:2 * H])
        g_g = jnp.tanh(gates[:, 2 * H:3 * H])
        o_g = jax.nn.sigmoid(gates[:, 3 * H:4 * H])
        c_new = f_g * c + i_g * g_g
        h_new = o_g * jnp.tanh(c_new)
        valid = lengths > t                                             # (N, 1)
        h = jnp.where(valid, h_new, h)
        c = jnp.where(valid, c_new, c)
        if return_outputs:
            # pack_padded semantics: zero for padded steps.
            outs.append(jnp.where(valid, h_new, 0.0))

    if return_outputs:
        # Single lane-dense slab store instead of T narrow column stores.
        out_ref[...] = jnp.concatenate(outs, axis=1)                    # (N, T*H)
    hlast_ref[...] = h


def run_lstm(x_tme, lengths, wih, whh, b, *, return_outputs=True):
    """x_tme: time-major (T, N, E); lengths: (N,).  Returns (N,T,H),(N,H) or (N,H)."""
    T, N, E = x_tme.shape
    H = whh.shape[0]
    GH = 4 * H

    x_bf = x_tme.astype(jnp.bfloat16)
    wih_bf = wih.astype(jnp.bfloat16)
    whh_bf = whh.astype(jnp.bfloat16)
    len2 = lengths.astype(jnp.int32).reshape(N, 1)

    vmem_limit = _vmem_limit_bytes()
    budget = int(vmem_limit * 0.75)
    w_bytes = 2 * ((E + H) * GH * 2 + GH * 4)        # double-buffered weights + bias

    def fits(bn):
        x_blk = 2 * T * bn * E * 2                   # bf16 input block, double-buffered
        proj = T * bn * GH * 4                       # f32 hoisted projection (live)
        outs = 2 * bn * (T * H + H) * 4 if return_outputs else 2 * bn * H * 4
        return x_blk + proj + outs + w_bytes + (1 << 20) <= budget

    bn = _pick_block(N, 256, fits)
    grid = (N // bn,)

    in_specs = [
        pl.BlockSpec((T, bn, E), lambda n: (0, n, 0)),
        pl.BlockSpec((bn, 1), lambda n: (n, 0)),
        pl.BlockSpec((E, GH), lambda n: (0, 0)),
        pl.BlockSpec((H, GH), lambda n: (0, 0)),
        pl.BlockSpec((1, GH), lambda n: (0, 0)),
    ]
    if return_outputs:
        out_shape = (jax.ShapeDtypeStruct((N, T * H), jnp.float32),
                     jax.ShapeDtypeStruct((N, H), jnp.float32))
        out_specs = (pl.BlockSpec((bn, T * H), lambda n: (n, 0)),
                     pl.BlockSpec((bn, H), lambda n: (n, 0)))
    else:
        out_shape = jax.ShapeDtypeStruct((N, H), jnp.float32)
        out_specs = pl.BlockSpec((bn, H), lambda n: (n, 0))

    res = pl.pallas_call(
        functools.partial(_lstm_kernel, return_outputs),
        out_shape=out_shape,
        grid=grid,
        in_specs=in_specs,
        out_specs=out_specs,
        compiler_params=pltpu.CompilerParams(
            dimension_semantics=("parallel",),
            vmem_limit_bytes=vmem_limit),
    )(x_bf, len2, wih_bf, whh_bf, b)

    if return_outputs:
        out_flat, h_last = res
        return out_flat.reshape(N, T, H), h_last     # metadata-only reshape
    return res


# -----------------------------------------------------------------------------
# Co-attention + fusion kernel (all four attention blocks + fusion linear),
# blocked over the batch axis (every op is per-sample independent).
# Packed weights (bf16 for matmul slabs, f32 for the (1,H) scoring vectors):
#   wq21 = [Wq2|Wq1], wi24 = [Wi2|Wi4], wi13 = [Wi1|Wi3],
#   wh34f = [Wh3|Wh4|Wf_h], wq4f = [Wq4|Wf_q]; Wh1, Wq3, Wf_i, Wall*/Wqvh* alone.
# -----------------------------------------------------------------------------
def _coatt_kernel(ques_feat_ref, q_output_ref, ques_len_ref, his_feat_ref, img_ref,
                  wq21_ref, wi24_ref, wall2_ref,
                  wi13_ref, wh1_ref, wqvh1_ref,
                  wq3_ref, wh34f_ref, wqvh3_ref,
                  wq4f_ref, wall4_ref, wf_i_ref,
                  out_ref):
    B, Lq, H = q_output_ref.shape
    _, R, I = img_ref.shape
    rnd = his_feat_ref.shape[1]

    ques_feat = ques_feat_ref[...]          # (B, H) f32
    q_output = q_output_ref[...]            # (B, Lq, H) f32
    his_feat = his_feat_ref[...]            # (B, rnd, H) f32
    img = img_ref[...]                      # (B, R, I) f32
    img_flat = img.reshape(B * R, I)

    def mm(x, w):                           # bf16 MXU, f32 accumulate
        return jnp.dot(x.astype(jnp.bfloat16), w,
                       preferred_element_type=jnp.float32)

    def softmax(s):                         # f32, exact normalization
        m = jnp.max(s, axis=-1, keepdims=True)
        e = jnp.exp(s - m)
        return e / jnp.sum(e, axis=-1, keepdims=True)

    # Shared-LHS projections, done once each (wide N -> better MXU utilization).
    q_emb21 = mm(ques_feat, wq21_ref[...])                               # (B, 2H)
    i_emb24 = mm(img_flat, wi24_ref[...]).reshape(B, R, 2 * H)           # (B, R, 2H)

    # ---- 1. q_att_on_img : question attends over image regions ----
    t1 = jnp.tanh(i_emb24[:, :, :H] + q_emb21[:, None, :H])
    score1 = jnp.sum(t1 * wall2_ref[...].reshape(1, 1, H), axis=-1)      # (B, R)
    img_v1 = jnp.sum(softmax(score1)[:, :, None] * img, axis=1)          # (B, I)

    iv_emb13 = mm(img_v1, wi13_ref[...])                                 # (B, 2H)

    # ---- 2. qv_att_on_his : question + attended image attend over history ----
    h_emb1 = mm(his_feat.reshape(B * rnd, H), wh1_ref[...]).reshape(B, rnd, H)
    t2 = jnp.tanh(h_emb1 + q_emb21[:, None, H:] + iv_emb13[:, None, :H])
    score2 = jnp.sum(t2 * wqvh1_ref[...].reshape(1, 1, H), axis=-1)      # (B, rnd)
    his_att = jnp.sum(softmax(score2)[:, :, None] * his_feat, axis=1)    # (B, H)

    h_emb34f = mm(his_att, wh34f_ref[...])                               # (B, 3H)

    # ---- 3. hv_att_in_ques : history + image attend over question timesteps ----
    q_emb3 = mm(q_output.reshape(B * Lq, H), wq3_ref[...]).reshape(B, Lq, H)
    t3 = jnp.tanh(q_emb3 + h_emb34f[:, None, :H] + iv_emb13[:, None, H:])
    score3 = jnp.sum(t3 * wqvh3_ref[...].reshape(1, 1, H), axis=-1)      # (B, Lq)
    pos = jax.lax.broadcasted_iota(jnp.int32, (B, Lq), 1)
    # Matches torch: mask = score.eq(0); mask[i, ques_len[i]:] = 1
    mask = jnp.logical_or(score3 == 0.0, pos >= ques_len_ref[...])
    score3 = jnp.where(mask, jnp.float32(-100000.0), score3)
    ques_att = jnp.sum(softmax(score3)[:, :, None] * q_output, axis=1)   # (B, H)

    q_emb4f = mm(ques_att, wq4f_ref[...])                                # (B, 2H)

    # ---- 4. qh_att_in_img : attended question + history attend over image ----
    t4 = jnp.tanh(i_emb24[:, :, H:] + q_emb4f[:, None, :H]
                  + h_emb34f[:, None, H:2 * H])
    score4 = jnp.sum(t4 * wall4_ref[...].reshape(1, 1, H), axis=-1)      # (B, R)
    img_att = jnp.sum(softmax(score4)[:, :, None] * img, axis=1)         # (B, I)

    # ---- fusion : tanh(Linear(cat(ques_att, his_att, img_att))) ----
    fused = q_emb4f[:, H:] + h_emb34f[:, 2 * H:] + mm(img_att, wf_i_ref[...])
    out_ref[...] = jnp.tanh(fused)


def run_coatt(ques_feat, q_output, ques_len, his_feat, img, att_w):
    B, Lq, H = q_output.shape
    _, R, I = img.shape
    rnd = his_feat.shape[1]
    len2 = ques_len.astype(jnp.int32).reshape(B, 1)

    # Matmul weight slabs -> bf16 (halves their DMA); (1, H) scoring vectors stay
    # f32 (they are VPU elementwise operands).
    att_w = tuple(w.astype(jnp.bfloat16) if w.shape[0] > 1 else w for w in att_w)

    vmem_limit = _vmem_limit_bytes()
    budget = int(vmem_limit * 0.75)
    w_bytes = 2 * sum(int(w.size) * w.dtype.itemsize for w in att_w)

    def fits(bb):
        acts = 2 * 4 * bb * (H + Lq * H + rnd * H + R * I + 1)   # f32 inputs, 2x buffered
        inter = 4 * bb * (4 * R * H + rnd * H + Lq * H + 4 * (R + rnd + Lq))
        out = 2 * 4 * bb * H
        return acts + inter + w_bytes + out + (1 << 20) <= budget

    bb = _pick_block(B, 256, fits)
    grid = (B // bb,)

    def batched(shape):
        nd = len(shape)
        return pl.BlockSpec((bb,) + tuple(shape[1:]),
                            lambda b, _nd=nd: (b,) + (0,) * (_nd - 1))

    def full(arr):
        nd = arr.ndim
        return pl.BlockSpec(arr.shape, lambda b, _nd=nd: (0,) * _nd)

    in_specs = ([batched(ques_feat.shape), batched(q_output.shape),
                 batched(len2.shape), batched(his_feat.shape), batched(img.shape)]
                + [full(w) for w in att_w])
    out_specs = pl.BlockSpec((bb, H), lambda b: (b, 0))

    flops = 2 * B * (H * 2 * H + R * I * 2 * H + I * 2 * H + rnd * H * H
                     + H * 3 * H + Lq * H * H + H * 2 * H + I * H)
    transcendentals = B * (H * (2 * R + rnd + Lq + 1) + (2 * R + rnd + Lq))
    bytes_accessed = 4 * (ques_feat.size + q_output.size + his_feat.size + img.size
                          + len2.size + B * H) \
        + sum(int(w.size) * w.dtype.itemsize for w in att_w)

    return pl.pallas_call(
        _coatt_kernel,
        out_shape=jax.ShapeDtypeStruct((B, H), jnp.float32),
        grid=grid,
        in_specs=in_specs,
        out_specs=out_specs,
        compiler_params=pltpu.CompilerParams(
            dimension_semantics=("parallel",),
            vmem_limit_bytes=vmem_limit),
        cost_estimate=pl.CostEstimate(flops=int(flops),
                                      transcendentals=int(transcendentals),
                                      bytes_accessed=int(bytes_accessed)),
    )(ques_feat, q_output, len2, his_feat, img, *att_w)


# -----------------------------------------------------------------------------
# Full forward pass (embedding gathers / reshapes are glue in plain JAX).
# -----------------------------------------------------------------------------
@jax.jit
def coatt_encoder_forward(params, img, ques, ques_len, his, hist_len):
    B, RND, LH = his.shape
    H = params["ques_rnn"][1].shape[0]

    # bf16 embedding table: the gather then directly produces the bf16 LSTM input
    # (halves the biggest activation DMA) without an extra cast pass.
    embed_bf = params["embed"].astype(jnp.bfloat16)

    # Question branch: gather embeddings directly time-major (only the int token
    # matrix is transposed, never a float activation tensor).
    ques_embed_tm = embed_bf[ques.T]                                 # (Lq, B, E) bf16
    q_output, ques_feat = run_lstm(ques_embed_tm, ques_len,
                                   *params["ques_rnn"], return_outputs=True)
    # ques_feat == q_output[b, ques_len[b]-1, :] by construction (h at last valid step).

    # History branch: only h_last is consumed -> skip the full output tensor.
    his_tokens_tm = his.reshape(B * RND, LH).T                       # (Lh, B*RND)
    his_embed_tm = embed_bf[his_tokens_tm]                           # (Lh, B*RND, E)
    his_h = run_lstm(his_embed_tm, hist_len.reshape(-1),
                     *params["hist_rnn"], return_outputs=False)
    his_feat = his_h.reshape(B, RND, H)

    return run_coatt(ques_feat, q_output, ques_len, his_feat, img, params["att"])


# -----------------------------------------------------------------------------
# Deterministic synthetic parameters + inputs.
# -----------------------------------------------------------------------------
if __name__ == "__main__":
    B, RND, LQ, LH = 2, 2, 8, 8
    NINP, NHID, IMG_F, R = 32, 32, 64, 16
    VOCAB = 20  # PAD_INDEX = 0

    key = jax.random.PRNGKey(0)
    ks = iter(jax.random.split(key, 64))

    def u(shape, scale):
        return jax.random.uniform(next(ks), shape, jnp.float32, -scale, scale)

    # inputs
    ques_len = jax.random.randint(next(ks), (B,), 2, LQ + 1)
    hist_len = jax.random.randint(next(ks), (B, RND), 1, LH + 1)
    ques = jax.random.randint(next(ks), (B, LQ), 1, VOCAB)
    his = jax.random.randint(next(ks), (B, RND, LH), 1, VOCAB)
    ques = jnp.where(jnp.arange(LQ)[None, :] < ques_len[:, None], ques, 0)
    his = jnp.where(jnp.arange(LH)[None, None, :] < hist_len[:, :, None], his, 0)
    img = jax.random.normal(next(ks), (B, R, IMG_F), jnp.float32)

    # parameters (deterministic; all nn.Linear biases are 0 per module __init__)
    embed = u((VOCAB, NINP), 0.5).at[0].set(0.0)   # padding_idx=0 row zeroed

    def lstm_params(in_dim):
        s = (1.0 / NHID) ** 0.5
        # fused gate weights, columns ordered [i | f | g | o]; bias = b_ih + b_hh
        return (u((in_dim, 4 * NHID), s),
                u((NHID, 4 * NHID), s),
                u((1, 4 * NHID), s))

    def lin(i, o):  # kaiming_uniform-style scale, pre-transposed to (in, out)
        return u((i, o), (6.0 / i) ** 0.5)

    Wq2 = lin(NHID, NHID); Wi2 = lin(IMG_F, NHID); Wall2 = lin(NHID, 1).reshape(1, NHID)
    Wq1 = lin(NHID, NHID); Wi1 = lin(IMG_F, NHID); Wh1 = lin(NHID, NHID)
    Wqvh1 = lin(NHID, 1).reshape(1, NHID)
    Wq3 = lin(NHID, NHID); Wi3 = lin(IMG_F, NHID); Wh3 = lin(NHID, NHID)
    Wqvh3 = lin(NHID, 1).reshape(1, NHID)
    Wq4 = lin(NHID, NHID); Wi4 = lin(IMG_F, NHID); Wh4 = lin(NHID, NHID)
    Wall4 = lin(NHID, 1).reshape(1, NHID)
    Wf_q = lin(NHID, NHID); Wf_h = lin(NHID, NHID); Wf_i = lin(IMG_F, NHID)

    att_weights = (
        jnp.concatenate([Wq2, Wq1], axis=1),        # wq21  (H, 2H)
        jnp.concatenate([Wi2, Wi4], axis=1),        # wi24  (I, 2H)
        Wall2,                                      # (1, H)
        jnp.concatenate([Wi1, Wi3], axis=1),        # wi13  (I, 2H)
        Wh1,                                        # (H, H)
        Wqvh1,                                      # (1, H)
        Wq3,                                        # (H, H)
        jnp.concatenate([Wh3, Wh4, Wf_h], axis=1),  # wh34f (H, 3H)
        Wqvh3,                                      # (1, H)
        jnp.concatenate([Wq4, Wf_q], axis=1),       # wq4f  (H, 2H)
        Wall4,                                      # (1, H)
        Wf_i,                                       # (I, H)
    )

    params = {
        "embed": embed,
        "ques_rnn": lstm_params(NINP),
        "hist_rnn": lstm_params(NINP),
        "att": att_weights,
    }

    out = coatt_encoder_forward(params, img, ques, ques_len, his, hist_len)
    out = jax.block_until_ready(out)
    assert out.shape == (B, NHID) and out.dtype == jnp.float32
    print("KERNEL_OK")
</pallas_src>

<mosaic_0001>
module attributes {stable_mosaic.version = 11 : i64} {
  func.func @_lstm_kernel(%arg0: i32, %arg1: memref<8x4x32xbf16, #tpu.memory_space<vmem>>, %arg2: memref<4x1xi32, #tpu.memory_space<vmem>>, %arg3: memref<32x128xbf16, #tpu.memory_space<vmem>>, %arg4: memref<32x128xbf16, #tpu.memory_space<vmem>>, %arg5: memref<1x128xf32, #tpu.memory_space<vmem>>, %arg6: memref<4x32xf32, #tpu.memory_space<vmem>>) attributes {dimension_semantics = [#tpu.dimension_semantics<parallel>], iteration_bounds = array<i64: 1>, scalar_prefetch = 0 : i64, scratch_operands = 0 : i64, tpu.core_type = #tpu.core_type<tc>, window_params = [{transform_indices = @transform_0, window_bounds = array<i64: 8, 4, 32>}, {transform_indices = @transform_1, window_bounds = array<i64: 4, 1>}, {pipeline_mode = #tpu.pipeline_mode<synchronous>, transform_indices = @transform_2, window_bounds = array<i64: 32, 128>}, {pipeline_mode = #tpu.pipeline_mode<synchronous>, transform_indices = @transform_3, window_bounds = array<i64: 32, 128>}, {pipeline_mode = #tpu.pipeline_mode<synchronous>, transform_indices = @transform_4, window_bounds = array<i64: 1, 128>}, {transform_indices = @transform_5, window_bounds = array<i64: 4, 32>}]} {
    %c0 = arith.constant 0 : index
    %c0_0 = arith.constant 0 : index
    %c0_1 = arith.constant 0 : index
    %0 = vector.load %arg1[%c0, %c0_0, %c0_1] : memref<8x4x32xbf16, #tpu.memory_space<vmem>>, vector<8x4x32xbf16>
    %1 = vector.shape_cast %0 : vector<8x4x32xbf16> to vector<32x32xbf16>
    %c0_2 = arith.constant 0 : index
    %c0_3 = arith.constant 0 : index
    %2 = vector.load %arg3[%c0_2, %c0_3] : memref<32x128xbf16, #tpu.memory_space<vmem>>, vector<32x128xbf16>
    %cst = arith.constant dense<0.000000e+00> : vector<32x128xf32>
    %3 = tpu.matmul %1, %2, %cst {dimension_numbers = #tpu.dot_dimension_numbers<[1], [0], [0], [1], [0, 0, 1, 1], [], []>} : vector<32x32xbf16>, vector<32x128xbf16>, vector<32x128xf32> -> vector<32x128xf32>
    %c0_4 = arith.constant 0 : index
    %c0_5 = arith.constant 0 : index
    %4 = vector.load %arg5[%c0_4, %c0_5] : memref<1x128xf32, #tpu.memory_space<vmem>>, vector<1x128xf32>
    %5 = vector.broadcast %4 : vector<1x128xf32> to vector<32x128xf32>
    %6 = arith.addf %3, %5 : vector<32x128xf32>
    %c0_6 = arith.constant 0 : index
    %c0_7 = arith.constant 0 : index
    %7 = vector.load %arg4[%c0_6, %c0_7] : memref<32x128xbf16, #tpu.memory_space<vmem>>, vector<32x128xbf16>
    %c0_8 = arith.constant 0 : index
    %c0_9 = arith.constant 0 : index
    %8 = vector.load %arg2[%c0_8, %c0_9] : memref<4x1xi32, #tpu.memory_space<vmem>>, vector<4x1xi32>
    %cst_10 = arith.constant 0.000000e+00 : f32
    %9 = vector.broadcast %cst_10 : f32 to vector<4x32xf32>
    %cst_11 = arith.constant 0.000000e+00 : f32
    %10 = vector.broadcast %cst_11 : f32 to vector<4x32xf32>
    %11 = vector.extract_strided_slice %6 {offsets = [0, 0], sizes = [4, 128], strides = [1, 1]} : vector<32x128xf32> to vector<4x128xf32>
    %12 = arith.truncf %9 : vector<4x32xf32> to vector<4x32xbf16>
    %cst_12 = arith.constant dense<0.000000e+00> : vector<4x128xf32>
    %13 = tpu.matmul %12, %7, %cst_12 {dimension_numbers = #tpu.dot_dimension_numbers<[1], [0], [0], [1], [0, 0, 1, 1], [], []>} : vector<4x32xbf16>, vector<32x128xbf16>, vector<4x128xf32> -> vector<4x128xf32>
    %14 = arith.addf %11, %13 : vector<4x128xf32>
    %15 = vector.extract_strided_slice %14 {offsets = [0, 0], sizes = [4, 32], strides = [1, 1]} : vector<4x128xf32> to vector<4x32xf32>
    %16 = arith.negf %15 : vector<4x32xf32>
    %17 = math.exp %16 : vector<4x32xf32>
    %cst_13 = arith.constant 1.000000e+00 : f32
    %18 = vector.broadcast %cst_13 : f32 to vector<4x32xf32>
    %19 = arith.addf %18, %17 : vector<4x32xf32>
    %20 = arith.divf %18, %19 : vector<4x32xf32>
    %21 = vector.extract_strided_slice %14 {offsets = [0, 32], sizes = [4, 32], strides = [1, 1]} : vector<4x128xf32> to vector<4x32xf32>
    %22 = arith.negf %21 : vector<4x32xf32>
    %23 = math.exp %22 : vector<4x32xf32>
    %cst_14 = arith.constant 1.000000e+00 : f32
    %24 = vector.broadcast %cst_14 : f32 to vector<4x32xf32>
    %25 = arith.addf %24, %23 : vector<4x32xf32>
    %26 = arith.divf %24, %25 : vector<4x32xf32>
    %27 = vector.extract_strided_slice %14 {offsets = [0, 64], sizes = [4, 32], strides = [1, 1]} : vector<4x128xf32> to vector<4x32xf32>
    %28 = math.tanh %27 : vector<4x32xf32>
    %29 = vector.extract_strided_slice %14 {offsets = [0, 96], sizes = [4, 32], strides = [1, 1]} : vector<4x128xf32> to vector<4x32xf32>
    %30 = arith.negf %29 : vector<4x32xf32>
    %31 = math.exp %30 : vector<4x32xf32>
    %cst_15 = arith.constant 1.000000e+00 : f32
    %32 = vector.broadcast %cst_15 : f32 to vector<4x32xf32>
    %33 = arith.addf %32, %31 : vector<4x32xf32>
    %34 = arith.divf %32, %33 : vector<4x32xf32>
    %35 = arith.mulf %26, %10 : vector<4x32xf32>
    %36 = arith.mulf %20, %28 : vector<4x32xf32>
    %37 = arith.addf %35, %36 : vector<4x32xf32>
    %38 = math.tanh %37 : vector<4x32xf32>
    %39 = arith.mulf %34, %38 : vector<4x32xf32>
    %c0_i32 = arith.constant 0 : i32
    %40 = vector.broadcast %c0_i32 : i32 to vector<4x1xi32>
    %41 = arith.cmpi sgt, %8, %40 : vector<4x1xi32>
    %42 = vector.shape_cast %41 : vector<4x1xi1> to vector<4x1xi1>
    %43 = vector.broadcast %42 : vector<4x1xi1> to vector<4x32xi1>
    %44 = arith.select %43, %39, %9 : vector<4x32xi1>, vector<4x32xf32>
    %45 = vector.shape_cast %41 : vector<4x1xi1> to vector<4x1xi1>
    %46 = vector.broadcast %45 : vector<4x1xi1> to vector<4x32xi1>
    %47 = arith.select %46, %37, %10 : vector<4x32xi1>, vector<4x32xf32>
    %48 = vector.extract_strided_slice %6 {offsets = [4, 0], sizes = [4, 128], strides = [1, 1]} : vector<32x128xf32> to vector<4x128xf32>
    %49 = arith.truncf %44 : vector<4x32xf32> to vector<4x32xbf16>
    %cst_16 = arith.constant dense<0.000000e+00> : vector<4x128xf32>
    %50 = tpu.matmul %49, %7, %cst_16 {dimension_numbers = #tpu.dot_dimension_numbers<[1], [0], [0], [1], [0, 0, 1, 1], [], []>} : vector<4x32xbf16>, vector<32x128xbf16>, vector<4x128xf32> -> vector<4x128xf32>
    %51 = arith.addf %48, %50 : vector<4x128xf32>
    %52 = vector.extract_strided_slice %51 {offsets = [0, 0], sizes = [4, 32], strides = [1, 1]} : vector<4x128xf32> to vector<4x32xf32>
    %53 = arith.negf %52 : vector<4x32xf32>
    %54 = math.exp %53 : vector<4x32xf32>
    %cst_17 = arith.constant 1.000000e+00 : f32
    %55 = vector.broadcast %cst_17 : f32 to vector<4x32xf32>
    %56 = arith.addf %55, %54 : vector<4x32xf32>
    %57 = arith.divf %55, %56 : vector<4x32xf32>
    %58 = vector.extract_strided_slice %51 {offsets = [0, 32], sizes = [4, 32], strides = [1, 1]} : vector<4x128xf32> to vector<4x32xf32>
    %59 = arith.negf %58 : vector<4x32xf32>
    %60 = math.exp %59 : vector<4x32xf32>
    %cst_18 = arith.constant 1.000000e+00 : f32
    %61 = vector.broadcast %cst_18 : f32 to vector<4x32xf32>
    %62 = arith.addf %61, %60 : vector<4x32xf32>
    %63 = arith.divf %61, %62 : vector<4x32xf32>
    %64 = vector.extract_strided_slice %51 {offsets = [0, 64], sizes = [4, 32], strides = [1, 1]} : vector<4x128xf32> to vector<4x32xf32>
    %65 = math.tanh %64 : vector<4x32xf32>
    %66 = vector.extract_strided_slice %51 {offsets = [0, 96], sizes = [4, 32], strides = [1, 1]} : vector<4x128xf32> to vector<4x32xf32>
    %67 = arith.negf %66 : vector<4x32xf32>
    %68 = math.exp %67 : vector<4x32xf32>
    %cst_19 = arith.constant 1.000000e+00 : f32
    %69 = vector.broadcast %cst_19 : f32 to vector<4x32xf32>
    %70 = arith.addf %69, %68 : vector<4x32xf32>
    %71 = arith.divf %69, %70 : vector<4x32xf32>
    %72 = arith.mulf %63, %47 : vector<4x32xf32>
    %73 = arith.mulf %57, %65 : vector<4x32xf32>
    %74 = arith.addf %72, %73 : vector<4x32xf32>
    %75 = math.tanh %74 : vector<4x32xf32>
    %76 = arith.mulf %71, %75 : vector<4x32xf32>
    %c1_i32 = arith.constant 1 : i32
    %77 = vector.broadcast %c1_i32 : i32 to vector<4x1xi32>
    %78 = arith.cmpi sgt, %8, %77 : vector<4x1xi32>
    %79 = vector.shape_cast %78 : vector<4x1xi1> to vector<4x1xi1>
    %80 = vector.broadcast %79 : vector<4x1xi1> to vector<4x32xi1>
    %81 = arith.select %80, %76, %44 : vector<4x32xi1>, vector<4x32xf32>
    %82 = vector.shape_cast %78 : vector<4x1xi1> to vector<4x1xi1>
    %83 = vector.broadcast %82 : vector<4x1xi1> to vector<4x32xi1>
    %84 = arith.select %83, %74, %47 : vector<4x32xi1>, vector<4x32xf32>
    %85 = vector.extract_strided_slice %6 {offsets = [8, 0], sizes = [4, 128], strides = [1, 1]} : vector<32x128xf32> to vector<4x128xf32>
    %86 = arith.truncf %81 : vector<4x32xf32> to vector<4x32xbf16>
    %cst_20 = arith.constant dense<0.000000e+00> : vector<4x128xf32>
    %87 = tpu.matmul %86, %7, %cst_20 {dimension_numbers = #tpu.dot_dimension_numbers<[1], [0], [0], [1], [0, 0, 1, 1], [], []>} : vector<4x32xbf16>, vector<32x128xbf16>, vector<4x128xf32> -> vector<4x128xf32>
    %88 = arith.addf %85, %87 : vector<4x128xf32>
    %89 = vector.extract_strided_slice %88 {offsets = [0, 0], sizes = [4, 32], strides = [1, 1]} : vector<4x128xf32> to vector<4x32xf32>
    %90 = arith.negf %89 : vector<4x32xf32>
    %91 = math.exp %90 : vector<4x32xf32>
    %cst_21 = arith.constant 1.000000e+00 : f32
    %92 = vector.broadcast %cst_21 : f32 to vector<4x32xf32>
    %93 = arith.addf %92, %91 : vector<4x32xf32>
    %94 = arith.divf %92, %93 : vector<4x32xf32>
    %95 = vector.extract_strided_slice %88 {offsets = [0, 32], sizes = [4, 32], strides = [1, 1]} : vector<4x128xf32> to vector<4x32xf32>
    %96 = arith.negf %95 : vector<4x32xf32>
    %97 = math.exp %96 : vector<4x32xf32>
    %cst_22 = arith.constant 1.000000e+00 : f32
    %98 = vector.broadcast %cst_22 : f32 to vector<4x32xf32>
    %99 = arith.addf %98, %97 : vector<4x32xf32>
    %100 = arith.divf %98, %99 : vector<4x32xf32>
    %101 = vector.extract_strided_slice %88 {offsets = [0, 64], sizes = [4, 32], strides = [1, 1]} : vector<4x128xf32> to vector<4x32xf32>
    %102 = math.tanh %101 : vector<4x32xf32>
    %103 = vector.extract_strided_slice %88 {offsets = [0, 96], sizes = [4, 32], strides = [1, 1]} : vector<4x128xf32> to vector<4x32xf32>
    %104 = arith.negf %103 : vector<4x32xf32>
    %105 = math.exp %104 : vector<4x32xf32>
    %cst_23 = arith.constant 1.000000e+00 : f32
    %106 = vector.broadcast %cst_23 : f32 to vector<4x32xf32>
    %107 = arith.addf %106, %105 : vector<4x32xf32>
    %108 = arith.divf %106, %107 : vector<4x32xf32>
    %109 = arith.mulf %100, %84 : vector<4x32xf32>
    %110 = arith.mulf %94, %102 : vector<4x32xf32>
    %111 = arith.addf %109, %110 : vector<4x32xf32>
    %112 = math.tanh %111 : vector<4x32xf32>
    %113 = arith.mulf %108, %112 : vector<4x32xf32>
    %c2_i32 = arith.constant 2 : i32
    %114 = vector.broadcast %c2_i32 : i32 to vector<4x1xi32>
    %115 = arith.cmpi sgt, %8, %114 : vector<4x1xi32>
    %116 = vector.shape_cast %115 : vector<4x1xi1> to vector<4x1xi1>
    %117 = vector.broadcast %116 : vector<4x1xi1> to vector<4x32xi1>
    %118 = arith.select %117, %113, %81 : vector<4x32xi1>, vector<4x32xf32>
    %119 = vector.shape_cast %115 : vector<4x1xi1> to vector<4x1xi1>
    %120 = vector.broadcast %119 : vector<4x1xi1> to vector<4x32xi1>
    %121 = arith.select %120, %111, %84 : vector<4x32xi1>, vector<4x32xf32>
    %122 = vector.extract_strided_slice %6 {offsets = [12, 0], sizes = [4, 128], strides = [1, 1]} : vector<32x128xf32> to vector<4x128xf32>
    %123 = arith.truncf %118 : vector<4x32xf32> to vector<4x32xbf16>
    %cst_24 = arith.constant dense<0.000000e+00> : vector<4x128xf32>
    %124 = tpu.matmul %123, %7, %cst_24 {dimension_numbers = #tpu.dot_dimension_numbers<[1], [0], [0], [1], [0, 0, 1, 1], [], []>} : vector<4x32xbf16>, vector<32x128xbf16>, vector<4x128xf32> -> vector<4x128xf32>
    %125 = arith.addf %122, %124 : vector<4x128xf32>
    %126 = vector.extract_strided_slice %125 {offsets = [0, 0], sizes = [4, 32], strides = [1, 1]} : vector<4x128xf32> to vector<4x32xf32>
    %127 = arith.negf %126 : vector<4x32xf32>
    %128 = math.exp %127 : vector<4x32xf32>
    %cst_25 = arith.constant 1.000000e+00 : f32
    %129 = vector.broadcast %cst_25 : f32 to vector<4x32xf32>
    %130 = arith.addf %129, %128 : vector<4x32xf32>
    %131 = arith.divf %129, %130 : vector<4x32xf32>
    %132 = vector.extract_strided_slice %125 {offsets = [0, 32], sizes = [4, 32], strides = [1, 1]} : vector<4x128xf32> to vector<4x32xf32>
    %133 = arith.negf %132 : vector<4x32xf32>
    %134 = math.exp %133 : vector<4x32xf32>
    %cst_26 = arith.constant 1.000000e+00 : f32
    %135 = vector.broadcast %cst_26 : f32 to vector<4x32xf32>
    %136 = arith.addf %135, %134 : vector<4x32xf32>
    %137 = arith.divf %135, %136 : vector<4x32xf32>
    %138 = vector.extract_strided_slice %125 {offsets = [0, 64], sizes = [4, 32], strides = [1, 1]} : vector<4x128xf32> to vector<4x32xf32>
    %139 = math.tanh %138 : vector<4x32xf32>
    %140 = vector.extract_strided_slice %125 {offsets = [0, 96], sizes = [4, 32], strides = [1, 1]} : vector<4x128xf32> to vector<4x32xf32>
    %141 = arith.negf %140 : vector<4x32xf32>
    %142 = math.exp %141 : vector<4x32xf32>
    %cst_27 = arith.constant 1.000000e+00 : f32
    %143 = vector.broadcast %cst_27 : f32 to vector<4x32xf32>
    %144 = arith.addf %143, %142 : vector<4x32xf32>
    %145 = arith.divf %143, %144 : vector<4x32xf32>
    %146 = arith.mulf %137, %121 : vector<4x32xf32>
    %147 = arith.mulf %131, %139 : vector<4x32xf32>
    %148 = arith.addf %146, %147 : vector<4x32xf32>
    %149 = math.tanh %148 : vector<4x32xf32>
    %150 = arith.mulf %145, %149 : vector<4x32xf32>
    %c3_i32 = arith.constant 3 : i32
    %151 = vector.broadcast %c3_i32 : i32 to vector<4x1xi32>
    %152 = arith.cmpi sgt, %8, %151 : vector<4x1xi32>
    %153 = vector.shape_cast %152 : vector<4x1xi1> to vector<4x1xi1>
    %154 = vector.broadcast %153 : vector<4x1xi1> to vector<4x32xi1>
    %155 = arith.select %154, %150, %118 : vector<4x32xi1>, vector<4x32xf32>
    %156 = vector.shape_cast %152 : vector<4x1xi1> to vector<4x1xi1>
    %157 = vector.broadcast %156 : vector<4x1xi1> to vector<4x32xi1>
    %158 = arith.select %157, %148, %121 : vector<4x32xi1>, vector<4x32xf32>
    %159 = vector.extract_strided_slice %6 {offsets = [16, 0], sizes = [4, 128], strides = [1, 1]} : vector<32x128xf32> to vector<4x128xf32>
    %160 = arith.truncf %155 : vector<4x32xf32> to vector<4x32xbf16>
    %cst_28 = arith.constant dense<0.000000e+00> : vector<4x128xf32>
    %161 = tpu.matmul %160, %7, %cst_28 {dimension_numbers = #tpu.dot_dimension_numbers<[1], [0], [0], [1], [0, 0, 1, 1], [], []>} : vector<4x32xbf16>, vector<32x128xbf16>, vector<4x128xf32> -> vector<4x128xf32>
    %162 = arith.addf %159, %161 : vector<4x128xf32>
    %163 = vector.extract_strided_slice %162 {offsets = [0, 0], sizes = [4, 32], strides = [1, 1]} : vector<4x128xf32> to vector<4x32xf32>
    %164 = arith.negf %163 : vector<4x32xf32>
    %165 = math.exp %164 : vector<4x32xf32>
    %cst_29 = arith.constant 1.000000e+00 : f32
    %166 = vector.broadcast %cst_29 : f32 to vector<4x32xf32>
    %167 = arith.addf %166, %165 : vector<4x32xf32>
    %168 = arith.divf %166, %167 : vector<4x32xf32>
    %169 = vector.extract_strided_slice %162 {offsets = [0, 32], sizes = [4, 32], strides = [1, 1]} : vector<4x128xf32> to vector<4x32xf32>
    %170 = arith.negf %169 : vector<4x32xf32>
    %171 = math.exp %170 : vector<4x32xf32>
    %cst_30 = arith.constant 1.000000e+00 : f32
    %172 = vector.broadcast %cst_30 : f32 to vector<4x32xf32>
    %173 = arith.addf %172, %171 : vector<4x32xf32>
    %174 = arith.divf %172, %173 : vector<4x32xf32>
    %175 = vector.extract_strided_slice %162 {offsets = [0, 64], sizes = [4, 32], strides = [1, 1]} : vector<4x128xf32> to vector<4x32xf32>
    %176 = math.tanh %175 : vector<4x32xf32>
    %177 = vector.extract_strided_slice %162 {offsets = [0, 96], sizes = [4, 32], strides = [1, 1]} : vector<4x128xf32> to vector<4x32xf32>
    %178 = arith.negf %177 : vector<4x32xf32>
    %179 = math.exp %178 : vector<4x32xf32>
    %cst_31 = arith.constant 1.000000e+00 : f32
    %180 = vector.broadcast %cst_31 : f32 to vector<4x32xf32>
    %181 = arith.addf %180, %179 : vector<4x32xf32>
    %182 = arith.divf %180, %181 : vector<4x32xf32>
    %183 = arith.mulf %174, %158 : vector<4x32xf32>
    %184 = arith.mulf %168, %176 : vector<4x32xf32>
    %185 = arith.addf %183, %184 : vector<4x32xf32>
    %186 = math.tanh %185 : vector<4x32xf32>
    %187 = arith.mulf %182, %186 : vector<4x32xf32>
    %c4_i32 = arith.constant 4 : i32
    %188 = vector.broadcast %c4_i32 : i32 to vector<4x1xi32>
    %189 = arith.cmpi sgt, %8, %188 : vector<4x1xi32>
    %190 = vector.shape_cast %189 : vector<4x1xi1> to vector<4x1xi1>
    %191 = vector.broadcast %190 : vector<4x1xi1> to vector<4x32xi1>
    %192 = arith.select %191, %187, %155 : vector<4x32xi1>, vector<4x32xf32>
    %193 = vector.shape_cast %189 : vector<4x1xi1> to vector<4x1xi1>
    %194 = vector.broadcast %193 : vector<4x1xi1> to vector<4x32xi1>
    %195 = arith.select %194, %185, %158 : vector<4x32xi1>, vector<4x32xf32>
    %196 = vector.extract_strided_slice %6 {offsets = [20, 0], sizes = [4, 128], strides = [1, 1]} : vector<32x128xf32> to vector<4x128xf32>
    %197 = arith.truncf %192 : vector<4x32xf32> to vector<4x32xbf16>
    %cst_32 = arith.constant dense<0.000000e+00> : vector<4x128xf32>
    %198 = tpu.matmul %197, %7, %cst_32 {dimension_numbers = #tpu.dot_dimension_numbers<[1], [0], [0], [1], [0, 0, 1, 1], [], []>} : vector<4x32xbf16>, vector<32x128xbf16>, vector<4x128xf32> -> vector<4x128xf32>
    %199 = arith.addf %196, %198 : vector<4x128xf32>
    %200 = vector.extract_strided_slice %199 {offsets = [0, 0], sizes = [4, 32], strides = [1, 1]} : vector<4x128xf32> to vector<4x32xf32>
    %201 = arith.negf %200 : vector<4x32xf32>
    %202 = math.exp %201 : vector<4x32xf32>
    %cst_33 = arith.constant 1.000000e+00 : f32
    %203 = vector.broadcast %cst_33 : f32 to vector<4x32xf32>
    %204 = arith.addf %203, %202 : vector<4x32xf32>
    %205 = arith.divf %203, %204 : vector<4x32xf32>
    %206 = vector.extract_strided_slice %199 {offsets = [0, 32], sizes = [4, 32], strides = [1, 1]} : vector<4x128xf32> to vector<4x32xf32>
    %207 = arith.negf %206 : vector<4x32xf32>
    %208 = math.exp %207 : vector<4x32xf32>
    %cst_34 = arith.constant 1.000000e+00 : f32
    %209 = vector.broadcast %cst_34 : f32 to vector<4x32xf32>
    %210 = arith.addf %209, %208 : vector<4x32xf32>
    %211 = arith.divf %209, %210 : vector<4x32xf32>
    %212 = vector.extract_strided_slice %199 {offsets = [0, 64], sizes = [4, 32], strides = [1, 1]} : vector<4x128xf32> to vector<4x32xf32>
    %213 = math.tanh %212 : vector<4x32xf32>
    %214 = vector.extract_strided_slice %199 {offsets = [0, 96], sizes = [4, 32], strides = [1, 1]} : vector<4x128xf32> to vector<4x32xf32>
    %215 = arith.negf %214 : vector<4x32xf32>
    %216 = math.exp %215 : vector<4x32xf32>
    %cst_35 = arith.constant 1.000000e+00 : f32
    %217 = vector.broadcast %cst_35 : f32 to vector<4x32xf32>
    %218 = arith.addf %217, %216 : vector<4x32xf32>
    %219 = arith.divf %217, %218 : vector<4x32xf32>
    %220 = arith.mulf %211, %195 : vector<4x32xf32>
    %221 = arith.mulf %205, %213 : vector<4x32xf32>
    %222 = arith.addf %220, %221 : vector<4x32xf32>
    %223 = math.tanh %222 : vector<4x32xf32>
    %224 = arith.mulf %219, %223 : vector<4x32xf32>
    %c5_i32 = arith.constant 5 : i32
    %225 = vector.broadcast %c5_i32 : i32 to vector<4x1xi32>
    %226 = arith.cmpi sgt, %8, %225 : vector<4x1xi32>
    %227 = vector.shape_cast %226 : vector<4x1xi1> to vector<4x1xi1>
    %228 = vector.broadcast %227 : vector<4x1xi1> to vector<4x32xi1>
    %229 = arith.select %228, %224, %192 : vector<4x32xi1>, vector<4x32xf32>
    %230 = vector.shape_cast %226 : vector<4x1xi1> to vector<4x1xi1>
    %231 = vector.broadcast %230 : vector<4x1xi1> to vector<4x32xi1>
    %232 = arith.select %231, %222, %195 : vector<4x32xi1>, vector<4x32xf32>
    %233 = vector.extract_strided_slice %6 {offsets = [24, 0], sizes = [4, 128], strides = [1, 1]} : vector<32x128xf32> to vector<4x128xf32>
    %234 = arith.truncf %229 : vector<4x32xf32> to vector<4x32xbf16>
    %cst_36 = arith.constant dense<0.000000e+00> : vector<4x128xf32>
    %235 = tpu.matmul %234, %7, %cst_36 {dimension_numbers = #tpu.dot_dimension_numbers<[1], [0], [0], [1], [0, 0, 1, 1], [], []>} : vector<4x32xbf16>, vector<32x128xbf16>, vector<4x128xf32> -> vector<4x128xf32>
    %236 = arith.addf %233, %235 : vector<4x128xf32>
    %237 = vector.extract_strided_slice %236 {offsets = [0, 0], sizes = [4, 32], strides = [1, 1]} : vector<4x128xf32> to vector<4x32xf32>
    %238 = arith.negf %237 : vector<4x32xf32>
    %239 = math.exp %238 : vector<4x32xf32>
    %cst_37 = arith.constant 1.000000e+00 : f32
    %240 = vector.broadcast %cst_37 : f32 to vector<4x32xf32>
    %241 = arith.addf %240, %239 : vector<4x32xf32>
    %242 = arith.divf %240, %241 : vector<4x32xf32>
    %243 = vector.extract_strided_slice %236 {offsets = [0, 32], sizes = [4, 32], strides = [1, 1]} : vector<4x128xf32> to vector<4x32xf32>
    %244 = arith.negf %243 : vector<4x32xf32>
    %245 = math.exp %244 : vector<4x32xf32>
    %cst_38 = arith.constant 1.000000e+00 : f32
    %246 = vector.broadcast %cst_38 : f32 to vector<4x32xf32>
    %247 = arith.addf %246, %245 : vector<4x32xf32>
    %248 = arith.divf %246, %247 : vector<4x32xf32>
    %249 = vector.extract_strided_slice %236 {offsets = [0, 64], sizes = [4, 32], strides = [1, 1]} : vector<4x128xf32> to vector<4x32xf32>
    %250 = math.tanh %249 : vector<4x32xf32>
    %251 = vector.extract_strided_slice %236 {offsets = [0, 96], sizes = [4, 32], strides = [1, 1]} : vector<4x128xf32> to vector<4x32xf32>
    %252 = arith.negf %251 : vector<4x32xf32>
    %253 = math.exp %252 : vector<4x32xf32>
    %cst_39 = arith.constant 1.000000e+00 : f32
    %254 = vector.broadcast %cst_39 : f32 to vector<4x32xf32>
    %255 = arith.addf %254, %253 : vector<4x32xf32>
    %256 = arith.divf %254, %255 : vector<4x32xf32>
    %257 = arith.mulf %248, %232 : vector<4x32xf32>
    %258 = arith.mulf %242, %250 : vector<4x32xf32>
    %259 = arith.addf %257, %258 : vector<4x32xf32>
    %260 = math.tanh %259 : vector<4x32xf32>
    %261 = arith.mulf %256, %260 : vector<4x32xf32>
    %c6_i32 = arith.constant 6 : i32
    %262 = vector.broadcast %c6_i32 : i32 to vector<4x1xi32>
    %263 = arith.cmpi sgt, %8, %262 : vector<4x1xi32>
    %264 = vector.shape_cast %263 : vector<4x1xi1> to vector<4x1xi1>
    %265 = vector.broadcast %264 : vector<4x1xi1> to vector<4x32xi1>
    %266 = arith.select %265, %261, %229 : vector<4x32xi1>, vector<4x32xf32>
    %267 = vector.shape_cast %263 : vector<4x1xi1> to vector<4x1xi1>
    %268 = vector.broadcast %267 : vector<4x1xi1> to vector<4x32xi1>
    %269 = arith.select %268, %259, %232 : vector<4x32xi1>, vector<4x32xf32>
    %270 = vector.extract_strided_slice %6 {offsets = [28, 0], sizes = [4, 128], strides = [1, 1]} : vector<32x128xf32> to vector<4x128xf32>
    %271 = arith.truncf %266 : vector<4x32xf32> to vector<4x32xbf16>
    %cst_40 = arith.constant dense<0.000000e+00> : vector<4x128xf32>
    %272 = tpu.matmul %271, %7, %cst_40 {dimension_numbers = #tpu.dot_dimension_numbers<[1], [0], [0], [1], [0, 0, 1, 1], [], []>} : vector<4x32xbf16>, vector<32x128xbf16>, vector<4x128xf32> -> vector<4x128xf32>
    %273 = arith.addf %270, %272 : vector<4x128xf32>
    %274 = vector.extract_strided_slice %273 {offsets = [0, 0], sizes = [4, 32], strides = [1, 1]} : vector<4x128xf32> to vector<4x32xf32>
    %275 = arith.negf %274 : vector<4x32xf32>
    %276 = math.exp %275 : vector<4x32xf32>
    %cst_41 = arith.constant 1.000000e+00 : f32
    %277 = vector.broadcast %cst_41 : f32 to vector<4x32xf32>
    %278 = arith.addf %277, %276 : vector<4x32xf32>
    %279 = arith.divf %277, %278 : vector<4x32xf32>
    %280 = vector.extract_strided_slice %273 {offsets = [0, 32], sizes = [4, 32], strides = [1, 1]} : vector<4x128xf32> to vector<4x32xf32>
    %281 = arith.negf %280 : vector<4x32xf32>
    %282 = math.exp %281 : vector<4x32xf32>
    %cst_42 = arith.constant 1.000000e+00 : f32
    %283 = vector.broadcast %cst_42 : f32 to vector<4x32xf32>
    %284 = arith.addf %283, %282 : vector<4x32xf32>
    %285 = arith.divf %283, %284 : vector<4x32xf32>
    %286 = vector.extract_strided_slice %273 {offsets = [0, 64], sizes = [4, 32], strides = [1, 1]} : vector<4x128xf32> to vector<4x32xf32>
    %287 = math.tanh %286 : vector<4x32xf32>
    %288 = vector.extract_strided_slice %273 {offsets = [0, 96], sizes = [4, 32], strides = [1, 1]} : vector<4x128xf32> to vector<4x32xf32>
    %289 = arith.negf %288 : vector<4x32xf32>
    %290 = math.exp %289 : vector<4x32xf32>
    %cst_43 = arith.constant 1.000000e+00 : f32
    %291 = vector.broadcast %cst_43 : f32 to vector<4x32xf32>
    %292 = arith.addf %291, %290 : vector<4x32xf32>
    %293 = arith.divf %291, %292 : vector<4x32xf32>
    %294 = arith.mulf %285, %269 : vector<4x32xf32>
    %295 = arith.mulf %279, %287 : vector<4x32xf32>
    %296 = arith.addf %294, %295 : vector<4x32xf32>
    %297 = math.tanh %296 : vector<4x32xf32>
    %298 = arith.mulf %293, %297 : vector<4x32xf32>
    %c7_i32 = arith.constant 7 : i32
    %299 = vector.broadcast %c7_i32 : i32 to vector<4x1xi32>
    %300 = arith.cmpi sgt, %8, %299 : vector<4x1xi32>
    %301 = vector.shape_cast %300 : vector<4x1xi1> to vector<4x1xi1>
    %302 = vector.broadcast %301 : vector<4x1xi1> to vector<4x32xi1>
    %303 = arith.select %302, %298, %266 : vector<4x32xi1>, vector<4x32xf32>
    %c0_44 = arith.constant 0 : index
    %c0_45 = arith.constant 0 : index
    %304 = vector.load %arg6[%c0_44, %c0_45] : memref<4x32xf32, #tpu.memory_space<vmem>>, vector<4x32xf32>
    tpu.vector_store %arg6[%c0_44, %c0_45], %303 {strides = array<i32>} : memref<4x32xf32, #tpu.memory_space<vmem>>, vector<4x32xf32>,
    return
  }
  func.func @transform_0(%arg0: i32) -> (i32, i32, i32) {
    %c0_i32 = arith.constant 0 : i32
    %c0_i32_0 = arith.constant 0 : i32
    %c0_i32_1 = arith.constant 0 : i32
    return %c0_i32, %arg0, %c0_i32_0 : i32, i32, i32
  }
  func.func @transform_1(%arg0: i32) -> (i32, i32) {
    %c0_i32 = arith.constant 0 : i32
    %c0_i32_0 = arith.constant 0 : i32
    return %arg0, %c0_i32 : i32, i32
  }
  func.func @transform_2(%arg0: i32) -> (i32, i32) {
    %c0_i32 = arith.constant 0 : i32
    %c0_i32_0 = arith.constant 0 : i32
    %c0_i32_1 = arith.constant 0 : i32
    return %c0_i32, %c0_i32_0 : i32, i32
  }
  func.func @transform_3(%arg0: i32) -> (i32, i32) {
    %c0_i32 = arith.constant 0 : i32
    %c0_i32_0 = arith.constant 0 : i32
    %c0_i32_1 = arith.constant 0 : i32
    return %c0_i32, %c0_i32_0 : i32, i32
  }
  func.func @transform_4(%arg0: i32) -> (i32, i32) {
    %c0_i32 = arith.constant 0 : i32
    %c0_i32_0 = arith.constant 0 : i32
    %c0_i32_1 = arith.constant 0 : i32
    return %c0_i32, %c0_i32_0 : i32, i32
  }
  func.func @transform_5(%arg0: i32) -> (i32, i32) {
    %c0_i32 = arith.constant 0 : i32
    %c0_i32_0 = arith.constant 0 : i32
    return %arg0, %c0_i32 : i32, i32
  }
}

module attributes {stable_mosaic.version = 11 : i64} {
  func.func @_lstm_kernel(%arg0: i32, %arg1: memref<8x2x32xbf16, #tpu.memory_space<vmem>>, %arg2: memref<2x1xi32, #tpu.memory_space<vmem>>, %arg3: memref<32x128xbf16, #tpu.memory_space<vmem>>, %arg4: memref<32x128xbf16, #tpu.memory_space<vmem>>, %arg5: memref<1x128xf32, #tpu.memory_space<vmem>>, %arg6: memref<2x256xf32, #tpu.memory_space<vmem>>, %arg7: memref<2x32xf32, #tpu.memory_space<vmem>>) attributes {dimension_semantics = [#tpu.dimension_semantics<parallel>], iteration_bounds = array<i64: 1>, scalar_prefetch = 0 : i64, scratch_operands = 0 : i64, tpu.core_type = #tpu.core_type<tc>, window_params = [{transform_indices = @transform_0, window_bounds = array<i64: 8, 2, 32>}, {transform_indices = @transform_1, window_bounds = array<i64: 2, 1>}, {pipeline_mode = #tpu.pipeline_mode<synchronous>, transform_indices = @transform_2, window_bounds = array<i64: 32, 128>}, {pipeline_mode = #tpu.pipeline_mode<synchronous>, transform_indices = @transform_3, window_bounds = array<i64: 32, 128>}, {pipeline_mode = #tpu.pipeline_mode<synchronous>, transform_indices = @transform_4, window_bounds = array<i64: 1, 128>}, {transform_indices = @transform_5, window_bounds = array<i64: 2, 256>}, {transform_indices = @transform_6, window_bounds = array<i64: 2, 32>}]} {
    %c0 = arith.constant 0 : index
    %c0_0 = arith.constant 0 : index
    %c0_1 = arith.constant 0 : index
    %0 = vector.load %arg1[%c0, %c0_0, %c0_1] : memref<8x2x32xbf16, #tpu.memory_space<vmem>>, vector<8x2x32xbf16>
    %1 = vector.shape_cast %0 : vector<8x2x32xbf16> to vector<16x32xbf16>
    %c0_2 = arith.constant 0 : index
    %c0_3 = arith.constant 0 : index
    %2 = vector.load %arg3[%c0_2, %c0_3] : memref<32x128xbf16, #tpu.memory_space<vmem>>, vector<32x128xbf16>
    %cst = arith.constant dense<0.000000e+00> : vector<16x128xf32>
    %3 = tpu.matmul %1, %2, %cst {dimension_numbers = #tpu.dot_dimension_numbers<[1], [0], [0], [1], [0, 0, 1, 1], [], []>} : vector<16x32xbf16>, vector<32x128xbf16>, vector<16x128xf32> -> vector<16x128xf32>
    %c0_4 = arith.constant 0 : index
    %c0_5 = arith.constant 0 : index
    %4 = vector.load %arg5[%c0_4, %c0_5] : memref<1x128xf32, #tpu.memory_space<vmem>>, vector<1x128xf32>
    %5 = vector.broadcast %4 : vector<1x128xf32> to vector<16x128xf32>
    %6 = arith.addf %3, %5 : vector<16x128xf32>
    %c0_6 = arith.constant 0 : index
    %c0_7 = arith.constant 0 : index
    %7 = vector.load %arg4[%c0_6, %c0_7] : memref<32x128xbf16, #tpu.memory_space<vmem>>, vector<32x128xbf16>
    %c0_8 = arith.constant 0 : index
    %c0_9 = arith.constant 0 : index
    %8 = vector.load %arg2[%c0_8, %c0_9] : memref<2x1xi32, #tpu.memory_space<vmem>>, vector<2x1xi32>
    %cst_10 = arith.constant 0.000000e+00 : f32
    %9 = vector.broadcast %cst_10 : f32 to vector<2x32xf32>
    %cst_11 = arith.constant 0.000000e+00 : f32
    %10 = vector.broadcast %cst_11 : f32 to vector<2x32xf32>
    %11 = vector.extract_strided_slice %6 {offsets = [0, 0], sizes = [2, 128], strides = [1, 1]} : vector<16x128xf32> to vector<2x128xf32>
    %12 = arith.truncf %9 : vector<2x32xf32> to vector<2x32xbf16>
    %cst_12 = arith.constant dense<0.000000e+00> : vector<2x128xf32>
    %13 = tpu.matmul %12, %7, %cst_12 {dimension_numbers = #tpu.dot_dimension_numbers<[1], [0], [0], [1], [0, 0, 1, 1], [], []>} : vector<2x32xbf16>, vector<32x128xbf16>, vector<2x128xf32> -> vector<2x128xf32>
    %14 = arith.addf %11, %13 : vector<2x128xf32>
    %15 = vector.extract_strided_slice %14 {offsets = [0, 0], sizes = [2, 32], strides = [1, 1]} : vector<2x128xf32> to vector<2x32xf32>
    %16 = arith.negf %15 : vector<2x32xf32>
    %17 = math.exp %16 : vector<2x32xf32>
    %cst_13 = arith.constant 1.000000e+00 : f32
    %18 = vector.broadcast %cst_13 : f32 to vector<2x32xf32>
    %19 = arith.addf %18, %17 : vector<2x32xf32>
    %20 = arith.divf %18, %19 : vector<2x32xf32>
    %21 = vector.extract_strided_slice %14 {offsets = [0, 32], sizes = [2, 32], strides = [1, 1]} : vector<2x128xf32> to vector<2x32xf32>
    %22 = arith.negf %21 : vector<2x32xf32>
    %23 = math.exp %22 : vector<2x32xf32>
    %cst_14 = arith.constant 1.000000e+00 : f32
    %24 = vector.broadcast %cst_14 : f32 to vector<2x32xf32>
    %25 = arith.addf %24, %23 : vector<2x32xf32>
    %26 = arith.divf %24, %25 : vector<2x32xf32>
    %27 = vector.extract_strided_slice %14 {offsets = [0, 64], sizes = [2, 32], strides = [1, 1]} : vector<2x128xf32> to vector<2x32xf32>
    %28 = math.tanh %27 : vector<2x32xf32>
    %29 = vector.extract_strided_slice %14 {offsets = [0, 96], sizes = [2, 32], strides = [1, 1]} : vector<2x128xf32> to vector<2x32xf32>
    %30 = arith.negf %29 : vector<2x32xf32>
    %31 = math.exp %30 : vector<2x32xf32>
    %cst_15 = arith.constant 1.000000e+00 : f32
    %32 = vector.broadcast %cst_15 : f32 to vector<2x32xf32>
    %33 = arith.addf %32, %31 : vector<2x32xf32>
    %34 = arith.divf %32, %33 : vector<2x32xf32>
    %35 = arith.mulf %26, %10 : vector<2x32xf32>
    %36 = arith.mulf %20, %28 : vector<2x32xf32>
    %37 = arith.addf %35, %36 : vector<2x32xf32>
    %38 = math.tanh %37 : vector<2x32xf32>
    %39 = arith.mulf %34, %38 : vector<2x32xf32>
    %c0_i32 = arith.constant 0 : i32
    %40 = vector.broadcast %c0_i32 : i32 to vector<2x1xi32>
    %41 = arith.cmpi sgt, %8, %40 : vector<2x1xi32>
    %42 = vector.shape_cast %41 : vector<2x1xi1> to vector<2x1xi1>
    %43 = vector.broadcast %42 : vector<2x1xi1> to vector<2x32xi1>
    %44 = arith.select %43, %39, %9 : vector<2x32xi1>, vector<2x32xf32>
    %45 = vector.shape_cast %41 : vector<2x1xi1> to vector<2x1xi1>
    %46 = vector.broadcast %45 : vector<2x1xi1> to vector<2x32xi1>
    %47 = arith.select %46, %37, %10 : vector<2x32xi1>, vector<2x32xf32>
    %cst_16 = arith.constant 0.000000e+00 : f32
    %48 = vector.shape_cast %41 : vector<2x1xi1> to vector<2x1xi1>
    %49 = vector.broadcast %48 : vector<2x1xi1> to vector<2x32xi1>
    %50 = vector.broadcast %cst_16 : f32 to vector<2x32xf32>
    %51 = arith.select %49, %39, %50 : vector<2x32xi1>, vector<2x32xf32>
    %52 = vector.extract_strided_slice %6 {offsets = [2, 0], sizes = [2, 128], strides = [1, 1]} : vector<16x128xf32> to vector<2x128xf32>
    %53 = arith.truncf %44 : vector<2x32xf32> to vector<2x32xbf16>
    %cst_17 = arith.constant dense<0.000000e+00> : vector<2x128xf32>
    %54 = tpu.matmul %53, %7, %cst_17 {dimension_numbers = #tpu.dot_dimension_numbers<[1], [0], [0], [1], [0, 0, 1, 1], [], []>} : vector<2x32xbf16>, vector<32x128xbf16>, vector<2x128xf32> -> vector<2x128xf32>
    %55 = arith.addf %52, %54 : vector<2x128xf32>
    %56 = vector.extract_strided_slice %55 {offsets = [0, 0], sizes = [2, 32], strides = [1, 1]} : vector<2x128xf32> to vector<2x32xf32>
    %57 = arith.negf %56 : vector<2x32xf32>
    %58 = math.exp %57 : vector<2x32xf32>
    %cst_18 = arith.constant 1.000000e+00 : f32
    %59 = vector.broadcast %cst_18 : f32 to vector<2x32xf32>
    %60 = arith.addf %59, %58 : vector<2x32xf32>
    %61 = arith.divf %59, %60 : vector<2x32xf32>
    %62 = vector.extract_strided_slice %55 {offsets = [0, 32], sizes = [2, 32], strides = [1, 1]} : vector<2x128xf32> to vector<2x32xf32>
    %63 = arith.negf %62 : vector<2x32xf32>
    %64 = math.exp %63 : vector<2x32xf32>
    %cst_19 = arith.constant 1.000000e+00 : f32
    %65 = vector.broadcast %cst_19 : f32 to vector<2x32xf32>
    %66 = arith.addf %65, %64 : vector<2x32xf32>
    %67 = arith.divf %65, %66 : vector<2x32xf32>
    %68 = vector.extract_strided_slice %55 {offsets = [0, 64], sizes = [2, 32], strides = [1, 1]} : vector<2x128xf32> to vector<2x32xf32>
    %69 = math.tanh %68 : vector<2x32xf32>
    %70 = vector.extract_strided_slice %55 {offsets = [0, 96], sizes = [2, 32], strides = [1, 1]} : vector<2x128xf32> to vector<2x32xf32>
    %71 = arith.negf %70 : vector<2x32xf32>
    %72 = math.exp %71 : vector<2x32xf32>
    %cst_20 = arith.constant 1.000000e+00 : f32
    %73 = vector.broadcast %cst_20 : f32 to vector<2x32xf32>
    %74 = arith.addf %73, %72 : vector<2x32xf32>
    %75 = arith.divf %73, %74 : vector<2x32xf32>
    %76 = arith.mulf %67, %47 : vector<2x32xf32>
    %77 = arith.mulf %61, %69 : vector<2x32xf32>
    %78 = arith.addf %76, %77 : vector<2x32xf32>
    %79 = math.tanh %78 : vector<2x32xf32>
    %80 = arith.mulf %75, %79 : vector<2x32xf32>
    %c1_i32 = arith.constant 1 : i32
    %81 = vector.broadcast %c1_i32 : i32 to vector<2x1xi32>
    %82 = arith.cmpi sgt, %8, %81 : vector<2x1xi32>
    %83 = vector.shape_cast %82 : vector<2x1xi1> to vector<2x1xi1>
    %84 = vector.broadcast %83 : vector<2x1xi1> to vector<2x32xi1>
    %85 = arith.select %84, %80, %44 : vector<2x32xi1>, vector<2x32xf32>
    %86 = vector.shape_cast %82 : vector<2x1xi1> to vector<2x1xi1>
    %87 = vector.broadcast %86 : vector<2x1xi1> to vector<2x32xi1>
    %88 = arith.select %87, %78, %47 : vector<2x32xi1>, vector<2x32xf32>
    %cst_21 = arith.constant 0.000000e+00 : f32
    %89 = vector.shape_cast %82 : vector<2x1xi1> to vector<2x1xi1>
    %90 = vector.broadcast %89 : vector<2x1xi1> to vector<2x32xi1>
    %91 = vector.broadcast %cst_21 : f32 to vector<2x32xf32>
    %92 = arith.select %90, %80, %91 : vector<2x32xi1>, vector<2x32xf32>
    %93 = vector.extract_strided_slice %6 {offsets = [4, 0], sizes = [2, 128], strides = [1, 1]} : vector<16x128xf32> to vector<2x128xf32>
    %94 = arith.truncf %85 : vector<2x32xf32> to vector<2x32xbf16>
    %cst_22 = arith.constant dense<0.000000e+00> : vector<2x128xf32>
    %95 = tpu.matmul %94, %7, %cst_22 {dimension_numbers = #tpu.dot_dimension_numbers<[1], [0], [0], [1], [0, 0, 1, 1], [], []>} : vector<2x32xbf16>, vector<32x128xbf16>, vector<2x128xf32> -> vector<2x128xf32>
    %96 = arith.addf %93, %95 : vector<2x128xf32>
    %97 = vector.extract_strided_slice %96 {offsets = [0, 0], sizes = [2, 32], strides = [1, 1]} : vector<2x128xf32> to vector<2x32xf32>
    %98 = arith.negf %97 : vector<2x32xf32>
    %99 = math.exp %98 : vector<2x32xf32>
    %cst_23 = arith.constant 1.000000e+00 : f32
    %100 = vector.broadcast %cst_23 : f32 to vector<2x32xf32>
    %101 = arith.addf %100, %99 : vector<2x32xf32>
    %102 = arith.divf %100, %101 : vector<2x32xf32>
    %103 = vector.extract_strided_slice %96 {offsets = [0, 32], sizes = [2, 32], strides = [1, 1]} : vector<2x128xf32> to vector<2x32xf32>
    %104 = arith.negf %103 : vector<2x32xf32>
    %105 = math.exp %104 : vector<2x32xf32>
    %cst_24 = arith.constant 1.000000e+00 : f32
    %106 = vector.broadcast %cst_24 : f32 to vector<2x32xf32>
    %107 = arith.addf %106, %105 : vector<2x32xf32>
    %108 = arith.divf %106, %107 : vector<2x32xf32>
    %109 = vector.extract_strided_slice %96 {offsets = [0, 64], sizes = [2, 32], strides = [1, 1]} : vector<2x128xf32> to vector<2x32xf32>
    %110 = math.tanh %109 : vector<2x32xf32>
    %111 = vector.extract_strided_slice %96 {offsets = [0, 96], sizes = [2, 32], strides = [1, 1]} : vector<2x128xf32> to vector<2x32xf32>
    %112 = arith.negf %111 : vector<2x32xf32>
    %113 = math.exp %112 : vector<2x32xf32>
    %cst_25 = arith.constant 1.000000e+00 : f32
    %114 = vector.broadcast %cst_25 : f32 to vector<2x32xf32>
    %115 = arith.addf %114, %113 : vector<2x32xf32>
    %116 = arith.divf %114, %115 : vector<2x32xf32>
    %117 = arith.mulf %108, %88 : vector<2x32xf32>
    %118 = arith.mulf %102, %110 : vector<2x32xf32>
    %119 = arith.addf %117, %118 : vector<2x32xf32>
    %120 = math.tanh %119 : vector<2x32xf32>
    %121 = arith.mulf %116, %120 : vector<2x32xf32>
    %c2_i32 = arith.constant 2 : i32
    %122 = vector.broadcast %c2_i32 : i32 to vector<2x1xi32>
    %123 = arith.cmpi sgt, %8, %122 : vector<2x1xi32>
    %124 = vector.shape_cast %123 : vector<2x1xi1> to vector<2x1xi1>
    %125 = vector.broadcast %124 : vector<2x1xi1> to vector<2x32xi1>
    %126 = arith.select %125, %121, %85 : vector<2x32xi1>, vector<2x32xf32>
    %127 = vector.shape_cast %123 : vector<2x1xi1> to vector<2x1xi1>
    %128 = vector.broadcast %127 : vector<2x1xi1> to vector<2x32xi1>
    %129 = arith.select %128, %119, %88 : vector<2x32xi1>, vector<2x32xf32>
    %cst_26 = arith.constant 0.000000e+00 : f32
    %130 = vector.shape_cast %123 : vector<2x1xi1> to vector<2x1xi1>
    %131 = vector.broadcast %130 : vector<2x1xi1> to vector<2x32xi1>
    %132 = vector.broadcast %cst_26 : f32 to vector<2x32xf32>
    %133 = arith.select %131, %121, %132 : vector<2x32xi1>, vector<2x32xf32>
    %134 = vector.extract_strided_slice %6 {offsets = [6, 0], sizes = [2, 128], strides = [1, 1]} : vector<16x128xf32> to vector<2x128xf32>
    %135 = arith.truncf %126 : vector<2x32xf32> to vector<2x32xbf16>
    %cst_27 = arith.constant dense<0.000000e+00> : vector<2x128xf32>
    %136 = tpu.matmul %135, %7, %cst_27 {dimension_numbers = #tpu.dot_dimension_numbers<[1], [0], [0], [1], [0, 0, 1, 1], [], []>} : vector<2x32xbf16>, vector<32x128xbf16>, vector<2x128xf32> -> vector<2x128xf32>
    %137 = arith.addf %134, %136 : vector<2x128xf32>
    %138 = vector.extract_strided_slice %137 {offsets = [0, 0], sizes = [2, 32], strides = [1, 1]} : vector<2x128xf32> to vector<2x32xf32>
    %139 = arith.negf %138 : vector<2x32xf32>
    %140 = math.exp %139 : vector<2x32xf32>
    %cst_28 = arith.constant 1.000000e+00 : f32
    %141 = vector.broadcast %cst_28 : f32 to vector<2x32xf32>
    %142 = arith.addf %141, %140 : vector<2x32xf32>
    %143 = arith.divf %141, %142 : vector<2x32xf32>
    %144 = vector.extract_strided_slice %137 {offsets = [0, 32], sizes = [2, 32], strides = [1, 1]} : vector<2x128xf32> to vector<2x32xf32>
    %145 = arith.negf %144 : vector<2x32xf32>
    %146 = math.exp %145 : vector<2x32xf32>
    %cst_29 = arith.constant 1.000000e+00 : f32
    %147 = vector.broadcast %cst_29 : f32 to vector<2x32xf32>
    %148 = arith.addf %147, %146 : vector<2x32xf32>
    %149 = arith.divf %147, %148 : vector<2x32xf32>
    %150 = vector.extract_strided_slice %137 {offsets = [0, 64], sizes = [2, 32], strides = [1, 1]} : vector<2x128xf32> to vector<2x32xf32>
    %151 = math.tanh %150 : vector<2x32xf32>
    %152 = vector.extract_strided_slice %137 {offsets = [0, 96], sizes = [2, 32], strides = [1, 1]} : vector<2x128xf32> to vector<2x32xf32>
    %153 = arith.negf %152 : vector<2x32xf32>
    %154 = math.exp %153 : vector<2x32xf32>
    %cst_30 = arith.constant 1.000000e+00 : f32
    %155 = vector.broadcast %cst_30 : f32 to vector<2x32xf32>
    %156 = arith.addf %155, %154 : vector<2x32xf32>
    %157 = arith.divf %155, %156 : vector<2x32xf32>
    %158 = arith.mulf %149, %129 : vector<2x32xf32>
    %159 = arith.mulf %143, %151 : vector<2x32xf32>
    %160 = arith.addf %158, %159 : vector<2x32xf32>
    %161 = math.tanh %160 : vector<2x32xf32>
    %162 = arith.mulf %157, %161 : vector<2x32xf32>
    %c3_i32 = arith.constant 3 : i32
    %163 = vector.broadcast %c3_i32 : i32 to vector<2x1xi32>
    %164 = arith.cmpi sgt, %8, %163 : vector<2x1xi32>
    %165 = vector.shape_cast %164 : vector<2x1xi1> to vector<2x1xi1>
    %166 = vector.broadcast %165 : vector<2x1xi1> to vector<2x32xi1>
    %167 = arith.select %166, %162, %126 : vector<2x32xi1>, vector<2x32xf32>
    %168 = vector.shape_cast %164 : vector<2x1xi1> to vector<2x1xi1>
    %169 = vector.broadcast %168 : vector<2x1xi1> to vector<2x32xi1>
    %170 = arith.select %169, %160, %129 : vector<2x32xi1>, vector<2x32xf32>
    %cst_31 = arith.constant 0.000000e+00 : f32
    %171 = vector.shape_cast %164 : vector<2x1xi1> to vector<2x1xi1>
    %172 = vector.broadcast %171 : vector<2x1xi1> to vector<2x32xi1>
    %173 = vector.broadcast %cst_31 : f32 to vector<2x32xf32>
    %174 = arith.select %172, %162, %173 : vector<2x32xi1>, vector<2x32xf32>
    %175 = vector.extract_strided_slice %6 {offsets = [8, 0], sizes = [2, 128], strides = [1, 1]} : vector<16x128xf32> to vector<2x128xf32>
    %176 = arith.truncf %167 : vector<2x32xf32> to vector<2x32xbf16>
    %cst_32 = arith.constant dense<0.000000e+00> : vector<2x128xf32>
    %177 = tpu.matmul %176, %7, %cst_32 {dimension_numbers = #tpu.dot_dimension_numbers<[1], [0], [0], [1], [0, 0, 1, 1], [], []>} : vector<2x32xbf16>, vector<32x128xbf16>, vector<2x128xf32> -> vector<2x128xf32>
    %178 = arith.addf %175, %177 : vector<2x128xf32>
    %179 = vector.extract_strided_slice %178 {offsets = [0, 0], sizes = [2, 32], strides = [1, 1]} : vector<2x128xf32> to vector<2x32xf32>
    %180 = arith.negf %179 : vector<2x32xf32>
    %181 = math.exp %180 : vector<2x32xf32>
    %cst_33 = arith.constant 1.000000e+00 : f32
    %182 = vector.broadcast %cst_33 : f32 to vector<2x32xf32>
    %183 = arith.addf %182, %181 : vector<2x32xf32>
    %184 = arith.divf %182, %183 : vector<2x32xf32>
    %185 = vector.extract_strided_slice %178 {offsets = [0, 32], sizes = [2, 32], strides = [1, 1]} : vector<2x128xf32> to vector<2x32xf32>
    %186 = arith.negf %185 : vector<2x32xf32>
    %187 = math.exp %186 : vector<2x32xf32>
    %cst_34 = arith.constant 1.000000e+00 : f32
    %188 = vector.broadcast %cst_34 : f32 to vector<2x32xf32>
    %189 = arith.addf %188, %187 : vector<2x32xf32>
    %190 = arith.divf %188, %189 : vector<2x32xf32>
    %191 = vector.extract_strided_slice %178 {offsets = [0, 64], sizes = [2, 32], strides = [1, 1]} : vector<2x128xf32> to vector<2x32xf32>
    %192 = math.tanh %191 : vector<2x32xf32>
    %193 = vector.extract_strided_slice %178 {offsets = [0, 96], sizes = [2, 32], strides = [1, 1]} : vector<2x128xf32> to vector<2x32xf32>
    %194 = arith.negf %193 : vector<2x32xf32>
    %195 = math.exp %194 : vector<2x32xf32>
    %cst_35 = arith.constant 1.000000e+00 : f32
    %196 = vector.broadcast %cst_35 : f32 to vector<2x32xf32>
    %197 = arith.addf %196, %195 : vector<2x32xf32>
    %198 = arith.divf %196, %197 : vector<2x32xf32>
    %199 = arith.mulf %190, %170 : vector<2x32xf32>
    %200 = arith.mulf %184, %192 : vector<2x32xf32>
    %201 = arith.addf %199, %200 : vector<2x32xf32>
    %202 = math.tanh %201 : vector<2x32xf32>
    %203 = arith.mulf %198, %202 : vector<2x32xf32>
    %c4_i32 = arith.constant 4 : i32
    %204 = vector.broadcast %c4_i32 : i32 to vector<2x1xi32>
    %205 = arith.cmpi sgt, %8, %204 : vector<2x1xi32>
    %206 = vector.shape_cast %205 : vector<2x1xi1> to vector<2x1xi1>
    %207 = vector.broadcast %206 : vector<2x1xi1> to vector<2x32xi1>
    %208 = arith.select %207, %203, %167 : vector<2x32xi1>, vector<2x32xf32>
    %209 = vector.shape_cast %205 : vector<2x1xi1> to vector<2x1xi1>
    %210 = vector.broadcast %209 : vector<2x1xi1> to vector<2x32xi1>
    %211 = arith.select %210, %201, %170 : vector<2x32xi1>, vector<2x32xf32>
    %cst_36 = arith.constant 0.000000e+00 : f32
    %212 = vector.shape_cast %205 : vector<2x1xi1> to vector<2x1xi1>
    %213 = vector.broadcast %212 : vector<2x1xi1> to vector<2x32xi1>
    %214 = vector.broadcast %cst_36 : f32 to vector<2x32xf32>
    %215 = arith.select %213, %203, %214 : vector<2x32xi1>, vector<2x32xf32>
    %216 = vector.extract_strided_slice %6 {offsets = [10, 0], sizes = [2, 128], strides = [1, 1]} : vector<16x128xf32> to vector<2x128xf32>
    %217 = arith.truncf %208 : vector<2x32xf32> to vector<2x32xbf16>
    %cst_37 = arith.constant dense<0.000000e+00> : vector<2x128xf32>
    %218 = tpu.matmul %217, %7, %cst_37 {dimension_numbers = #tpu.dot_dimension_numbers<[1], [0], [0], [1], [0, 0, 1, 1], [], []>} : vector<2x32xbf16>, vector<32x128xbf16>, vector<2x128xf32> -> vector<2x128xf32>
    %219 = arith.addf %216, %218 : vector<2x128xf32>
    %220 = vector.extract_strided_slice %219 {offsets = [0, 0], sizes = [2, 32], strides = [1, 1]} : vector<2x128xf32> to vector<2x32xf32>
    %221 = arith.negf %220 : vector<2x32xf32>
    %222 = math.exp %221 : vector<2x32xf32>
    %cst_38 = arith.constant 1.000000e+00 : f32
    %223 = vector.broadcast %cst_38 : f32 to vector<2x32xf32>
    %224 = arith.addf %223, %222 : vector<2x32xf32>
    %225 = arith.divf %223, %224 : vector<2x32xf32>
    %226 = vector.extract_strided_slice %219 {offsets = [0, 32], sizes = [2, 32], strides = [1, 1]} : vector<2x128xf32> to vector<2x32xf32>
    %227 = arith.negf %226 : vector<2x32xf32>
    %228 = math.exp %227 : vector<2x32xf32>
    %cst_39 = arith.constant 1.000000e+00 : f32
    %229 = vector.broadcast %cst_39 : f32 to vector<2x32xf32>
    %230 = arith.addf %229, %228 : vector<2x32xf32>
    %231 = arith.divf %229, %230 : vector<2x32xf32>
    %232 = vector.extract_strided_slice %219 {offsets = [0, 64], sizes = [2, 32], strides = [1, 1]} : vector<2x128xf32> to vector<2x32xf32>
    %233 = math.tanh %232 : vector<2x32xf32>
    %234 = vector.extract_strided_slice %219 {offsets = [0, 96], sizes = [2, 32], strides = [1, 1]} : vector<2x128xf32> to vector<2x32xf32>
    %235 = arith.negf %234 : vector<2x32xf32>
    %236 = math.exp %235 : vector<2x32xf32>
    %cst_40 = arith.constant 1.000000e+00 : f32
    %237 = vector.broadcast %cst_40 : f32 to vector<2x32xf32>
    %238 = arith.addf %237, %236 : vector<2x32xf32>
    %239 = arith.divf %237, %238 : vector<2x32xf32>
    %240 = arith.mulf %231, %211 : vector<2x32xf32>
    %241 = arith.mulf %225, %233 : vector<2x32xf32>
    %242 = arith.addf %240, %241 : vector<2x32xf32>
    %243 = math.tanh %242 : vector<2x32xf32>
    %244 = arith.mulf %239, %243 : vector<2x32xf32>
    %c5_i32 = arith.constant 5 : i32
    %245 = vector.broadcast %c5_i32 : i32 to vector<2x1xi32>
    %246 = arith.cmpi sgt, %8, %245 : vector<2x1xi32>
    %247 = vector.shape_cast %246 : vector<2x1xi1> to vector<2x1xi1>
    %248 = vector.broadcast %247 : vector<2x1xi1> to vector<2x32xi1>
    %249 = arith.select %248, %244, %208 : vector<2x32xi1>, vector<2x32xf32>
    %250 = vector.shape_cast %246 : vector<2x1xi1> to vector<2x1xi1>
    %251 = vector.broadcast %250 : vector<2x1xi1> to vector<2x32xi1>
    %252 = arith.select %251, %242, %211 : vector<2x32xi1>, vector<2x32xf32>
    %cst_41 = arith.constant 0.000000e+00 : f32
    %253 = vector.shape_cast %246 : vector<2x1xi1> to vector<2x1xi1>
    %254 = vector.broadcast %253 : vector<2x1xi1> to vector<2x32xi1>
    %255 = vector.broadcast %cst_41 : f32 to vector<2x32xf32>
    %256 = arith.select %254, %244, %255 : vector<2x32xi1>, vector<2x32xf32>
    %257 = vector.extract_strided_slice %6 {offsets = [12, 0], sizes = [2, 128], strides = [1, 1]} : vector<16x128xf32> to vector<2x128xf32>
    %258 = arith.truncf %249 : vector<2x32xf32> to vector<2x32xbf16>
    %cst_42 = arith.constant dense<0.000000e+00> : vector<2x128xf32>
    %259 = tpu.matmul %258, %7, %cst_42 {dimension_numbers = #tpu.dot_dimension_numbers<[1], [0], [0], [1], [0, 0, 1, 1], [], []>} : vector<2x32xbf16>, vector<32x128xbf16>, vector<2x128xf32> -> vector<2x128xf32>
    %260 = arith.addf %257, %259 : vector<2x128xf32>
    %261 = vector.extract_strided_slice %260 {offsets = [0, 0], sizes = [2, 32], strides = [1, 1]} : vector<2x128xf32> to vector<2x32xf32>
    %262 = arith.negf %261 : vector<2x32xf32>
    %263 = math.exp %262 : vector<2x32xf32>
    %cst_43 = arith.constant 1.000000e+00 : f32
    %264 = vector.broadcast %cst_43 : f32 to vector<2x32xf32>
    %265 = arith.addf %264, %263 : vector<2x32xf32>
    %266 = arith.divf %264, %265 : vector<2x32xf32>
    %267 = vector.extract_strided_slice %260 {offsets = [0, 32], sizes = [2, 32], strides = [1, 1]} : vector<2x128xf32> to vector<2x32xf32>
    %268 = arith.negf %267 : vector<2x32xf32>
    %269 = math.exp %268 : vector<2x32xf32>
    %cst_44 = arith.constant 1.000000e+00 : f32
    %270 = vector.broadcast %cst_44 : f32 to vector<2x32xf32>
    %271 = arith.addf %270, %269 : vector<2x32xf32>
    %272 = arith.divf %270, %271 : vector<2x32xf32>
    %273 = vector.extract_strided_slice %260 {offsets = [0, 64], sizes = [2, 32], strides = [1, 1]} : vector<2x128xf32> to vector<2x32xf32>
    %274 = math.tanh %273 : vector<2x32xf32>
    %275 = vector.extract_strided_slice %260 {offsets = [0, 96], sizes = [2, 32], strides = [1, 1]} : vector<2x128xf32> to vector<2x32xf32>
    %276 = arith.negf %275 : vector<2x32xf32>
    %277 = math.exp %276 : vector<2x32xf32>
    %cst_45 = arith.constant 1.000000e+00 : f32
    %278 = vector.broadcast %cst_45 : f32 to vector<2x32xf32>
    %279 = arith.addf %278, %277 : vector<2x32xf32>
    %280 = arith.divf %278, %279 : vector<2x32xf32>
    %281 = arith.mulf %272, %252 : vector<2x32xf32>
    %282 = arith.mulf %266, %274 : vector<2x32xf32>
    %283 = arith.addf %281, %282 : vector<2x32xf32>
    %284 = math.tanh %283 : vector<2x32xf32>
    %285 = arith.mulf %280, %284 : vector<2x32xf32>
    %c6_i32 = arith.constant 6 : i32
    %286 = vector.broadcast %c6_i32 : i32 to vector<2x1xi32>
    %287 = arith.cmpi sgt, %8, %286 : vector<2x1xi32>
    %288 = vector.shape_cast %287 : vector<2x1xi1> to vector<2x1xi1>
    %289 = vector.broadcast %288 : vector<2x1xi1> to vector<2x32xi1>
    %290 = arith.select %289, %285, %249 : vector<2x32xi1>, vector<2x32xf32>
    %291 = vector.shape_cast %287 : vector<2x1xi1> to vector<2x1xi1>
    %292 = vector.broadcast %291 : vector<2x1xi1> to vector<2x32xi1>
    %293 = arith.select %292, %283, %252 : vector<2x32xi1>, vector<2x32xf32>
    %cst_46 = arith.constant 0.000000e+00 : f32
    %294 = vector.shape_cast %287 : vector<2x1xi1> to vector<2x1xi1>
    %295 = vector.broadcast %294 : vector<2x1xi1> to vector<2x32xi1>
    %296 = vector.broadcast %cst_46 : f32 to vector<2x32xf32>
    %297 = arith.select %295, %285, %296 : vector<2x32xi1>, vector<2x32xf32>
    %298 = vector.extract_strided_slice %6 {offsets = [14, 0], sizes = [2, 128], strides = [1, 1]} : vector<16x128xf32> to vector<2x128xf32>
    %299 = arith.truncf %290 : vector<2x32xf32> to vector<2x32xbf16>
    %cst_47 = arith.constant dense<0.000000e+00> : vector<2x128xf32>
    %300 = tpu.matmul %299, %7, %cst_47 {dimension_numbers = #tpu.dot_dimension_numbers<[1], [0], [0], [1], [0, 0, 1, 1], [], []>} : vector<2x32xbf16>, vector<32x128xbf16>, vector<2x128xf32> -> vector<2x128xf32>
    %301 = arith.addf %298, %300 : vector<2x128xf32>
    %302 = vector.extract_strided_slice %301 {offsets = [0, 0], sizes = [2, 32], strides = [1, 1]} : vector<2x128xf32> to vector<2x32xf32>
    %303 = arith.negf %302 : vector<2x32xf32>
    %304 = math.exp %303 : vector<2x32xf32>
    %cst_48 = arith.constant 1.000000e+00 : f32
    %305 = vector.broadcast %cst_48 : f32 to vector<2x32xf32>
    %306 = arith.addf %305, %304 : vector<2x32xf32>
    %307 = arith.divf %305, %306 : vector<2x32xf32>
    %308 = vector.extract_strided_slice %301 {offsets = [0, 32], sizes = [2, 32], strides = [1, 1]} : vector<2x128xf32> to vector<2x32xf32>
    %309 = arith.negf %308 : vector<2x32xf32>
    %310 = math.exp %309 : vector<2x32xf32>
    %cst_49 = arith.constant 1.000000e+00 : f32
    %311 = vector.broadcast %cst_49 : f32 to vector<2x32xf32>
    %312 = arith.addf %311, %310 : vector<2x32xf32>
    %313 = arith.divf %311, %312 : vector<2x32xf32>
    %314 = vector.extract_strided_slice %301 {offsets = [0, 64], sizes = [2, 32], strides = [1, 1]} : vector<2x128xf32> to vector<2x32xf32>
    %315 = math.tanh %314 : vector<2x32xf32>
    %316 = vector.extract_strided_slice %301 {offsets = [0, 96], sizes = [2, 32], strides = [1, 1]} : vector<2x128xf32> to vector<2x32xf32>
    %317 = arith.negf %316 : vector<2x32xf32>
    %318 = math.exp %317 : vector<2x32xf32>
    %cst_50 = arith.constant 1.000000e+00 : f32
    %319 = vector.broadcast %cst_50 : f32 to vector<2x32xf32>
    %320 = arith.addf %319, %318 : vector<2x32xf32>
    %321 = arith.divf %319, %320 : vector<2x32xf32>
    %322 = arith.mulf %313, %293 : vector<2x32xf32>
    %323 = arith.mulf %307, %315 : vector<2x32xf32>
    %324 = arith.addf %322, %323 : vector<2x32xf32>
    %325 = math.tanh %324 : vector<2x32xf32>
    %326 = arith.mulf %321, %325 : vector<2x32xf32>
    %c7_i32 = arith.constant 7 : i32
    %327 = vector.broadcast %c7_i32 : i32 to vector<2x1xi32>
    %328 = arith.cmpi sgt, %8, %327 : vector<2x1xi32>
    %329 = vector.shape_cast %328 : vector<2x1xi1> to vector<2x1xi1>
    %330 = vector.broadcast %329 : vector<2x1xi1> to vector<2x32xi1>
    %331 = arith.select %330, %326, %290 : vector<2x32xi1>, vector<2x32xf32>
    %cst_51 = arith.constant 0.000000e+00 : f32
    %332 = vector.shape_cast %328 : vector<2x1xi1> to vector<2x1xi1>
    %333 = vector.broadcast %332 : vector<2x1xi1> to vector<2x32xi1>
    %334 = vector.broadcast %cst_51 : f32 to vector<2x32xf32>
    %335 = arith.select %333, %326, %334 : vector<2x32xi1>, vector<2x32xf32>
    %336 = tpu.concatenate %51, %92, %133, %174, %215, %256, %297, %335 in 1 : vector<2x32xf32>, vector<2x32xf32>, vector<2x32xf32>, vector<2x32xf32>, vector<2x32xf32>, vector<2x32xf32>, vector<2x32xf32>, vector<2x32xf32> -> vector<2x256xf32>
    %c0_52 = arith.constant 0 : index
    %c0_53 = arith.constant 0 : index
    %337 = vector.load %arg6[%c0_52, %c0_53] : memref<2x256xf32, #tpu.memory_space<vmem>>, vector<2x256xf32>
    tpu.vector_store %arg6[%c0_52, %c0_53], %336 {strides = array<i32>} : memref<2x256xf32, #tpu.memory_space<vmem>>, vector<2x256xf32>,
    %c0_54 = arith.constant 0 : index
    %c0_55 = arith.constant 0 : index
    %338 = vector.load %arg7[%c0_54, %c0_55] : memref<2x32xf32, #tpu.memory_space<vmem>>, vector<2x32xf32>
    tpu.vector_store %arg7[%c0_54, %c0_55], %331 {strides = array<i32>} : memref<2x32xf32, #tpu.memory_space<vmem>>, vector<2x32xf32>,
    return
  }
  func.func @transform_0(%arg0: i32) -> (i32, i32, i32) {
    %c0_i32 = arith.constant 0 : i32
    %c0_i32_0 = arith.constant 0 : i32
    %c0_i32_1 = arith.constant 0 : i32
    return %c0_i32, %arg0, %c0_i32_0 : i32, i32, i32
  }
  func.func @transform_1(%arg0: i32) -> (i32, i32) {
    %c0_i32 = arith.constant 0 : i32
    %c0_i32_0 = arith.constant 0 : i32
    return %arg0, %c0_i32 : i32, i32
  }
  func.func @transform_2(%arg0: i32) -> (i32, i32) {
    %c0_i32 = arith.constant 0 : i32
    %c0_i32_0 = arith.constant 0 : i32
    %c0_i32_1 = arith.constant 0 : i32
    return %c0_i32, %c0_i32_0 : i32, i32
  }
  func.func @transform_3(%arg0: i32) -> (i32, i32) {
    %c0_i32 = arith.constant 0 : i32
    %c0_i32_0 = arith.constant 0 : i32
    %c0_i32_1 = arith.constant 0 : i32
    return %c0_i32, %c0_i32_0 : i32, i32
  }
  func.func @transform_4(%arg0: i32) -> (i32, i32) {
    %c0_i32 = arith.constant 0 : i32
    %c0_i32_0 = arith.constant 0 : i32
    %c0_i32_1 = arith.constant 0 : i32
    return %c0_i32, %c0_i32_0 : i32, i32
  }
  func.func @transform_5(%arg0: i32) -> (i32, i32) {
    %c0_i32 = arith.constant 0 : i32
    %c0_i32_0 = arith.constant 0 : i32
    return %arg0, %c0_i32 : i32, i32
  }
  func.func @transform_6(%arg0: i32) -> (i32, i32) {
    %c0_i32 = arith.constant 0 : i32
    %c0_i32_0 = arith.constant 0 : i32
    return %arg0, %c0_i32 : i32, i32
  }
}

module attributes {stable_mosaic.version = 11 : i64} {
  func.func @_coatt_kernel(%arg0: i32, %arg1: memref<2x32xf32, #tpu.memory_space<vmem>>, %arg2: memref<2x8x32xf32, #tpu.memory_space<vmem>>, %arg3: memref<2x1xi32, #tpu.memory_space<vmem>>, %arg4: memref<2x2x32xf32, #tpu.memory_space<vmem>>, %arg5: memref<2x16x64xf32, #tpu.memory_space<vmem>>, %arg6: memref<32x64xbf16, #tpu.memory_space<vmem>>, %arg7: memref<64x64xbf16, #tpu.memory_space<vmem>>, %arg8: memref<1x32xf32, #tpu.memory_space<vmem>>, %arg9: memref<64x64xbf16, #tpu.memory_space<vmem>>, %arg10: memref<32x32xbf16, #tpu.memory_space<vmem>>, %arg11: memref<1x32xf32, #tpu.memory_space<vmem>>, %arg12: memref<32x32xbf16, #tpu.memory_space<vmem>>, %arg13: memref<32x96xbf16, #tpu.memory_space<vmem>>, %arg14: memref<1x32xf32, #tpu.memory_space<vmem>>, %arg15: memref<32x64xbf16, #tpu.memory_space<vmem>>, %arg16: memref<1x32xf32, #tpu.memory_space<vmem>>, %arg17: memref<64x32xbf16, #tpu.memory_space<vmem>>, %arg18: memref<2x32xf32, #tpu.memory_space<vmem>>) attributes {dimension_semantics = [#tpu.dimension_semantics<parallel>], iteration_bounds = array<i64: 1>, scalar_prefetch = 0 : i64, scratch_operands = 0 : i64, tpu.core_type = #tpu.core_type<tc>, window_params = [{transform_indices = @transform_0, window_bounds = array<i64: 2, 32>}, {transform_indices = @transform_1, window_bounds = array<i64: 2, 8, 32>}, {transform_indices = @transform_2, window_bounds = array<i64: 2, 1>}, {transform_indices = @transform_3, window_bounds = array<i64: 2, 2, 32>}, {transform_indices = @transform_4, window_bounds = array<i64: 2, 16, 64>}, {pipeline_mode = #tpu.pipeline_mode<synchronous>, transform_indices = @transform_5, window_bounds = array<i64: 32, 64>}, {pipeline_mode = #tpu.pipeline_mode<synchronous>, transform_indices = @transform_6, window_bounds = array<i64: 64, 64>}, {pipeline_mode = #tpu.pipeline_mode<synchronous>, transform_indices = @transform_7, window_bounds = array<i64: 1, 32>}, {pipeline_mode = #tpu.pipeline_mode<synchronous>, transform_indices = @transform_8, window_bounds = array<i64: 64, 64>}, {pipeline_mode = #tpu.pipeline_mode<synchronous>, transform_indices = @transform_9, window_bounds = array<i64: 32, 32>}, {pipeline_mode = #tpu.pipeline_mode<synchronous>, transform_indices = @transform_10, window_bounds = array<i64: 1, 32>}, {pipeline_mode = #tpu.pipeline_mode<synchronous>, transform_indices = @transform_11, window_bounds = array<i64: 32, 32>}, {pipeline_mode = #tpu.pipeline_mode<synchronous>, transform_indices = @transform_12, window_bounds = array<i64: 32, 96>}, {pipeline_mode = #tpu.pipeline_mode<synchronous>, transform_indices = @transform_13, window_bounds = array<i64: 1, 32>}, {pipeline_mode = #tpu.pipeline_mode<synchronous>, transform_indices = @transform_14, window_bounds = array<i64: 32, 64>}, {pipeline_mode = #tpu.pipeline_mode<synchronous>, transform_indices = @transform_15, window_bounds = array<i64: 1, 32>}, {pipeline_mode = #tpu.pipeline_mode<synchronous>, transform_indices = @transform_16, window_bounds = array<i64: 64, 32>}, {transform_indices = @transform_17, window_bounds = array<i64: 2, 32>}]} {
    %c0 = arith.constant 0 : index
    %c0_0 = arith.constant 0 : index
    %0 = vector.load %arg1[%c0, %c0_0] : memref<2x32xf32, #tpu.memory_space<vmem>>, vector<2x32xf32>
    %c0_1 = arith.constant 0 : index
    %c0_2 = arith.constant 0 : index
    %c0_3 = arith.constant 0 : index
    %1 = vector.load %arg2[%c0_1, %c0_2, %c0_3] : memref<2x8x32xf32, #tpu.memory_space<vmem>>, vector<2x8x32xf32>
    %c0_4 = arith.constant 0 : index
    %c0_5 = arith.constant 0 : index
    %c0_6 = arith.constant 0 : index
    %2 = vector.load %arg4[%c0_4, %c0_5, %c0_6] : memref<2x2x32xf32, #tpu.memory_space<vmem>>, vector<2x2x32xf32>
    %c0_7 = arith.constant 0 : index
    %c0_8 = arith.constant 0 : index
    %c0_9 = arith.constant 0 : index
    %3 = vector.load %arg5[%c0_7, %c0_8, %c0_9] : memref<2x16x64xf32, #tpu.memory_space<vmem>>, vector<2x16x64xf32>
    %4 = vector.shape_cast %3 : vector<2x16x64xf32> to vector<32x64xf32>
    %c0_10 = arith.constant 0 : index
    %c0_11 = arith.constant 0 : index
    %5 = vector.load %arg6[%c0_10, %c0_11] : memref<32x64xbf16, #tpu.memory_space<vmem>>, vector<32x64xbf16>
    %6 = arith.truncf %0 : vector<2x32xf32> to vector<2x32xbf16>
    %cst = arith.constant dense<0.000000e+00> : vector<2x64xf32>
    %7 = tpu.matmul %6, %5, %cst {dimension_numbers = #tpu.dot_dimension_numbers<[1], [0], [0], [1], [0, 0, 1, 1], [], []>} : vector<2x32xbf16>, vector<32x64xbf16>, vector<2x64xf32> -> vector<2x64xf32>
    %c0_12 = arith.constant 0 : index
    %c0_13 = arith.constant 0 : index
    %8 = vector.load %arg7[%c0_12, %c0_13] : memref<64x64xbf16, #tpu.memory_space<vmem>>, vector<64x64xbf16>
    %9 = arith.truncf %4 : vector<32x64xf32> to vector<32x64xbf16>
    %cst_14 = arith.constant dense<0.000000e+00> : vector<32x64xf32>
    %10 = tpu.matmul %9, %8, %cst_14 {dimension_numbers = #tpu.dot_dimension_numbers<[1], [0], [0], [1], [0, 0, 1, 1], [], []>} : vector<32x64xbf16>, vector<64x64xbf16>, vector<32x64xf32> -> vector<32x64xf32>
    %11 = vector.shape_cast %10 : vector<32x64xf32> to vector<2x16x64xf32>
    %12 = vector.extract_strided_slice %11 {offsets = [0, 0, 0], sizes = [2, 16, 32], strides = [1, 1, 1]} : vector<2x16x64xf32> to vector<2x16x32xf32>
    %13 = vector.extract_strided_slice %7 {offsets = [0, 0], sizes = [2, 32], strides = [1, 1]} : vector<2x64xf32> to vector<2x32xf32>
    %14 = vector.shape_cast %13 : vector<2x32xf32> to vector<2x1x32xf32>
    %15 = vector.broadcast %14 : vector<2x1x32xf32> to vector<2x16x32xf32>
    %16 = arith.addf %12, %15 : vector<2x16x32xf32>
    %17 = math.tanh %16 : vector<2x16x32xf32>
    %c0_15 = arith.constant 0 : index
    %c0_16 = arith.constant 0 : index
    %18 = vector.load %arg8[%c0_15, %c0_16] : memref<1x32xf32, #tpu.memory_space<vmem>>, vector<1x32xf32>
    %19 = vector.shape_cast %18 : vector<1x32xf32> to vector<1x1x32xf32>
    %20 = vector.broadcast %19 : vector<1x1x32xf32> to vector<2x16x32xf32>
    %21 = arith.mulf %17, %20 : vector<2x16x32xf32>
    %cst_17 = arith.constant dense<0.000000e+00> : vector<2x16xf32>
    %22 = vector.multi_reduction <add>, %21, %cst_17 [2] : vector<2x16x32xf32> to vector<2x16xf32>
    %cst_18 = arith.constant dense<0xFF800000> : vector<2xf32>
    %23 = vector.multi_reduction <maximumf>, %22, %cst_18 [1] : vector<2x16xf32> to vector<2xf32>
    %24 = vector.shape_cast %23 : vector<2xf32> to vector<2x1xf32>
    %25 = vector.broadcast %24 : vector<2x1xf32> to vector<2x16xf32>
    %26 = arith.subf %22, %25 : vector<2x16xf32>
    %27 = math.exp %26 : vector<2x16xf32>
    %cst_19 = arith.constant dense<0.000000e+00> : vector<2xf32>
    %28 = vector.multi_reduction <add>, %27, %cst_19 [1] : vector<2x16xf32> to vector<2xf32>
    %29 = vector.shape_cast %28 : vector<2xf32> to vector<2x1xf32>
    %30 = vector.broadcast %29 : vector<2x1xf32> to vector<2x16xf32>
    %31 = arith.divf %27, %30 : vector<2x16xf32>
    %32 = vector.shape_cast %31 : vector<2x16xf32> to vector<2x16x1xf32>
    %33 = vector.broadcast %32 : vector<2x16x1xf32> to vector<2x16x64xf32>
    %34 = arith.mulf %33, %3 : vector<2x16x64xf32>
    %cst_20 = arith.constant dense<0.000000e+00> : vector<2x64xf32>
    %35 = vector.multi_reduction <add>, %34, %cst_20 [1] : vector<2x16x64xf32> to vector<2x64xf32>
    %c0_21 = arith.constant 0 : index
    %c0_22 = arith.constant 0 : index
    %36 = vector.load %arg9[%c0_21, %c0_22] : memref<64x64xbf16, #tpu.memory_space<vmem>>, vector<64x64xbf16>
    %37 = arith.truncf %35 : vector<2x64xf32> to vector<2x64xbf16>
    %cst_23 = arith.constant dense<0.000000e+00> : vector<2x64xf32>
    %38 = tpu.matmul %37, %36, %cst_23 {dimension_numbers = #tpu.dot_dimension_numbers<[1], [0], [0], [1], [0, 0, 1, 1], [], []>} : vector<2x64xbf16>, vector<64x64xbf16>, vector<2x64xf32> -> vector<2x64xf32>
    %39 = vector.shape_cast %2 : vector<2x2x32xf32> to vector<4x32xf32>
    %c0_24 = arith.constant 0 : index
    %c0_25 = arith.constant 0 : index
    %40 = vector.load %arg10[%c0_24, %c0_25] : memref<32x32xbf16, #tpu.memory_space<vmem>>, vector<32x32xbf16>
    %41 = arith.truncf %39 : vector<4x32xf32> to vector<4x32xbf16>
    %cst_26 = arith.constant dense<0.000000e+00> : vector<4x32xf32>
    %42 = tpu.matmul %41, %40, %cst_26 {dimension_numbers = #tpu.dot_dimension_numbers<[1], [0], [0], [1], [0, 0, 1, 1], [], []>} : vector<4x32xbf16>, vector<32x32xbf16>, vector<4x32xf32> -> vector<4x32xf32>
    %43 = vector.shape_cast %42 : vector<4x32xf32> to vector<2x2x32xf32>
    %44 = vector.extract_strided_slice %7 {offsets = [0, 32], sizes = [2, 32], strides = [1, 1]} : vector<2x64xf32> to vector<2x32xf32>
    %45 = vector.shape_cast %44 : vector<2x32xf32> to vector<2x1x32xf32>
    %46 = vector.broadcast %45 : vector<2x1x32xf32> to vector<2x2x32xf32>
    %47 = arith.addf %43, %46 : vector<2x2x32xf32>
    %48 = vector.extract_strided_slice %38 {offsets = [0, 0], sizes = [2, 32], strides = [1, 1]} : vector<2x64xf32> to vector<2x32xf32>
    %49 = vector.shape_cast %48 : vector<2x32xf32> to vector<2x1x32xf32>
    %50 = vector.broadcast %49 : vector<2x1x32xf32> to vector<2x2x32xf32>
    %51 = arith.addf %47, %50 : vector<2x2x32xf32>
    %52 = math.tanh %51 : vector<2x2x32xf32>
    %c0_27 = arith.constant 0 : index
    %c0_28 = arith.constant 0 : index
    %53 = vector.load %arg11[%c0_27, %c0_28] : memref<1x32xf32, #tpu.memory_space<vmem>>, vector<1x32xf32>
    %54 = vector.shape_cast %53 : vector<1x32xf32> to vector<1x1x32xf32>
    %55 = vector.broadcast %54 : vector<1x1x32xf32> to vector<2x2x32xf32>
    %56 = arith.mulf %52, %55 : vector<2x2x32xf32>
    %cst_29 = arith.constant dense<0.000000e+00> : vector<2x2xf32>
    %57 = vector.multi_reduction <add>, %56, %cst_29 [2] : vector<2x2x32xf32> to vector<2x2xf32>
    %cst_30 = arith.constant dense<0xFF800000> : vector<2xf32>
    %58 = vector.multi_reduction <maximumf>, %57, %cst_30 [1] : vector<2x2xf32> to vector<2xf32>
    %59 = vector.shape_cast %58 : vector<2xf32> to vector<2x1xf32>
    %60 = vector.broadcast %59 : vector<2x1xf32> to vector<2x2xf32>
    %61 = arith.subf %57, %60 : vector<2x2xf32>
    %62 = math.exp %61 : vector<2x2xf32>
    %cst_31 = arith.constant dense<0.000000e+00> : vector<2xf32>
    %63 = vector.multi_reduction <add>, %62, %cst_31 [1] : vector<2x2xf32> to vector<2xf32>
    %64 = vector.shape_cast %63 : vector<2xf32> to vector<2x1xf32>
    %65 = vector.broadcast %64 : vector<2x1xf32> to vector<2x2xf32>
    %66 = arith.divf %62, %65 : vector<2x2xf32>
    %67 = vector.shape_cast %66 : vector<2x2xf32> to vector<2x2x1xf32>
    %68 = vector.broadcast %67 : vector<2x2x1xf32> to vector<2x2x32xf32>
    %69 = arith.mulf %68, %2 : vector<2x2x32xf32>
    %cst_32 = arith.constant dense<0.000000e+00> : vector<2x32xf32>
    %70 = vector.multi_reduction <add>, %69, %cst_32 [1] : vector<2x2x32xf32> to vector<2x32xf32>
    %c0_33 = arith.constant 0 : index
    %c0_34 = arith.constant 0 : index
    %71 = vector.load %arg13[%c0_33, %c0_34] : memref<32x96xbf16, #tpu.memory_space<vmem>>, vector<32x96xbf16>
    %72 = arith.truncf %70 : vector<2x32xf32> to vector<2x32xbf16>
    %cst_35 = arith.constant dense<0.000000e+00> : vector<2x96xf32>
    %73 = tpu.matmul %72, %71, %cst_35 {dimension_numbers = #tpu.dot_dimension_numbers<[1], [0], [0], [1], [0, 0, 1, 1], [], []>} : vector<2x32xbf16>, vector<32x96xbf16>, vector<2x96xf32> -> vector<2x96xf32>
    %74 = vector.shape_cast %1 : vector<2x8x32xf32> to vector<16x32xf32>
    %c0_36 = arith.constant 0 : index
    %c0_37 = arith.constant 0 : index
    %75 = vector.load %arg12[%c0_36, %c0_37] : memref<32x32xbf16, #tpu.memory_space<vmem>>, vector<32x32xbf16>
    %76 = arith.truncf %74 : vector<16x32xf32> to vector<16x32xbf16>
    %cst_38 = arith.constant dense<0.000000e+00> : vector<16x32xf32>
    %77 = tpu.matmul %76, %75, %cst_38 {dimension_numbers = #tpu.dot_dimension_numbers<[1], [0], [0], [1], [0, 0, 1, 1], [], []>} : vector<16x32xbf16>, vector<32x32xbf16>, vector<16x32xf32> -> vector<16x32xf32>
    %78 = vector.shape_cast %77 : vector<16x32xf32> to vector<2x8x32xf32>
    %79 = vector.extract_strided_slice %73 {offsets = [0, 0], sizes = [2, 32], strides = [1, 1]} : vector<2x96xf32> to vector<2x32xf32>
    %80 = vector.shape_cast %79 : vector<2x32xf32> to vector<2x1x32xf32>
    %81 = vector.broadcast %80 : vector<2x1x32xf32> to vector<2x8x32xf32>
    %82 = arith.addf %78, %81 : vector<2x8x32xf32>
    %83 = vector.extract_strided_slice %38 {offsets = [0, 32], sizes = [2, 32], strides = [1, 1]} : vector<2x64xf32> to vector<2x32xf32>
    %84 = vector.shape_cast %83 : vector<2x32xf32> to vector<2x1x32xf32>
    %85 = vector.broadcast %84 : vector<2x1x32xf32> to vector<2x8x32xf32>
    %86 = arith.addf %82, %85 : vector<2x8x32xf32>
    %87 = math.tanh %86 : vector<2x8x32xf32>
    %c0_39 = arith.constant 0 : index
    %c0_40 = arith.constant 0 : index
    %88 = vector.load %arg14[%c0_39, %c0_40] : memref<1x32xf32, #tpu.memory_space<vmem>>, vector<1x32xf32>
    %89 = vector.shape_cast %88 : vector<1x32xf32> to vector<1x1x32xf32>
    %90 = vector.broadcast %89 : vector<1x1x32xf32> to vector<2x8x32xf32>
    %91 = arith.mulf %87, %90 : vector<2x8x32xf32>
    %cst_41 = arith.constant dense<0.000000e+00> : vector<2x8xf32>
    %92 = vector.multi_reduction <add>, %91, %cst_41 [2] : vector<2x8x32xf32> to vector<2x8xf32>
    %93 = tpu.iota {dimensions = array<i32: 1>} : vector<2x8xi32>
    %cst_42 = arith.constant 0.000000e+00 : f32
    %94 = vector.broadcast %cst_42 : f32 to vector<2x8xf32>
    %95 = arith.cmpf oeq, %92, %94 : vector<2x8xf32>
    %c0_43 = arith.constant 0 : index
    %c0_44 = arith.constant 0 : index
    %96 = vector.load %arg3[%c0_43, %c0_44] : memref<2x1xi32, #tpu.memory_space<vmem>>, vector<2x1xi32>
    %97 = vector.broadcast %96 : vector<2x1xi32> to vector<2x8xi32>
    %98 = arith.cmpi sge, %93, %97 : vector<2x8xi32>
    %99 = arith.ori %95, %98 : vector<2x8xi1>
    %cst_45 = arith.constant -1.000000e+05 : f32
    %100 = vector.broadcast %cst_45 : f32 to vector<2x8xf32>
    %101 = arith.select %99, %100, %92 : vector<2x8xi1>, vector<2x8xf32>
    %cst_46 = arith.constant dense<0xFF800000> : vector<2xf32>
    %102 = vector.multi_reduction <maximumf>, %101, %cst_46 [1] : vector<2x8xf32> to vector<2xf32>
    %103 = vector.shape_cast %102 : vector<2xf32> to vector<2x1xf32>
    %104 = vector.broadcast %103 : vector<2x1xf32> to vector<2x8xf32>
    %105 = arith.subf %101, %104 : vector<2x8xf32>
    %106 = math.exp %105 : vector<2x8xf32>
    %cst_47 = arith.constant dense<0.000000e+00> : vector<2xf32>
    %107 = vector.multi_reduction <add>, %106, %cst_47 [1] : vector<2x8xf32> to vector<2xf32>
    %108 = vector.shape_cast %107 : vector<2xf32> to vector<2x1xf32>
    %109 = vector.broadcast %108 : vector<2x1xf32> to vector<2x8xf32>
    %110 = arith.divf %106, %109 : vector<2x8xf32>
    %111 = vector.shape_cast %110 : vector<2x8xf32> to vector<2x8x1xf32>
    %112 = vector.broadcast %111 : vector<2x8x1xf32> to vector<2x8x32xf32>
    %113 = arith.mulf %112, %1 : vector<2x8x32xf32>
    %cst_48 = arith.constant dense<0.000000e+00> : vector<2x32xf32>
    %114 = vector.multi_reduction <add>, %113, %cst_48 [1] : vector<2x8x32xf32> to vector<2x32xf32>
    %c0_49 = arith.constant 0 : index
    %c0_50 = arith.constant 0 : index
    %115 = vector.load %arg15[%c0_49, %c0_50] : memref<32x64xbf16, #tpu.memory_space<vmem>>, vector<32x64xbf16>
    %116 = arith.truncf %114 : vector<2x32xf32> to vector<2x32xbf16>
    %cst_51 = arith.constant dense<0.000000e+00> : vector<2x64xf32>
    %117 = tpu.matmul %116, %115, %cst_51 {dimension_numbers = #tpu.dot_dimension_numbers<[1], [0], [0], [1], [0, 0, 1, 1], [], []>} : vector<2x32xbf16>, vector<32x64xbf16>, vector<2x64xf32> -> vector<2x64xf32>
    %118 = vector.extract_strided_slice %11 {offsets = [0, 0, 32], sizes = [2, 16, 32], strides = [1, 1, 1]} : vector<2x16x64xf32> to vector<2x16x32xf32>
    %119 = vector.extract_strided_slice %117 {offsets = [0, 0], sizes = [2, 32], strides = [1, 1]} : vector<2x64xf32> to vector<2x32xf32>
    %120 = vector.shape_cast %119 : vector<2x32xf32> to vector<2x1x32xf32>
    %121 = vector.broadcast %120 : vector<2x1x32xf32> to vector<2x16x32xf32>
    %122 = arith.addf %118, %121 : vector<2x16x32xf32>
    %123 = vector.extract_strided_slice %73 {offsets = [0, 32], sizes = [2, 32], strides = [1, 1]} : vector<2x96xf32> to vector<2x32xf32>
    %124 = vector.shape_cast %123 : vector<2x32xf32> to vector<2x1x32xf32>
    %125 = vector.broadcast %124 : vector<2x1x32xf32> to vector<2x16x32xf32>
    %126 = arith.addf %122, %125 : vector<2x16x32xf32>
    %127 = math.tanh %126 : vector<2x16x32xf32>
    %c0_52 = arith.constant 0 : index
    %c0_53 = arith.constant 0 : index
    %128 = vector.load %arg16[%c0_52, %c0_53] : memref<1x32xf32, #tpu.memory_space<vmem>>, vector<1x32xf32>
    %129 = vector.shape_cast %128 : vector<1x32xf32> to vector<1x1x32xf32>
    %130 = vector.broadcast %129 : vector<1x1x32xf32> to vector<2x16x32xf32>
    %131 = arith.mulf %127, %130 : vector<2x16x32xf32>
    %cst_54 = arith.constant dense<0.000000e+00> : vector<2x16xf32>
    %132 = vector.multi_reduction <add>, %131, %cst_54 [2] : vector<2x16x32xf32> to vector<2x16xf32>
    %cst_55 = arith.constant dense<0xFF800000> : vector<2xf32>
    %133 = vector.multi_reduction <maximumf>, %132, %cst_55 [1] : vector<2x16xf32> to vector<2xf32>
    %134 = vector.shape_cast %133 : vector<2xf32> to vector<2x1xf32>
    %135 = vector.broadcast %134 : vector<2x1xf32> to vector<2x16xf32>
    %136 = arith.subf %132, %135 : vector<2x16xf32>
    %137 = math.exp %136 : vector<2x16xf32>
    %cst_56 = arith.constant dense<0.000000e+00> : vector<2xf32>
    %138 = vector.multi_reduction <add>, %137, %cst_56 [1] : vector<2x16xf32> to vector<2xf32>
    %139 = vector.shape_cast %138 : vector<2xf32> to vector<2x1xf32>
    %140 = vector.broadcast %139 : vector<2x1xf32> to vector<2x16xf32>
    %141 = arith.divf %137, %140 : vector<2x16xf32>
    %142 = vector.shape_cast %141 : vector<2x16xf32> to vector<2x16x1xf32>
    %143 = vector.broadcast %142 : vector<2x16x1xf32> to vector<2x16x64xf32>
    %144 = arith.mulf %143, %3 : vector<2x16x64xf32>
    %cst_57 = arith.constant dense<0.000000e+00> : vector<2x64xf32>
    %145 = vector.multi_reduction <add>, %144, %cst_57 [1] : vector<2x16x64xf32> to vector<2x64xf32>
    %146 = vector.extract_strided_slice %117 {offsets = [0, 32], sizes = [2, 32], strides = [1, 1]} : vector<2x64xf32> to vector<2x32xf32>
    %147 = vector.extract_strided_slice %73 {offsets = [0, 64], sizes = [2, 32], strides = [1, 1]} : vector<2x96xf32> to vector<2x32xf32>
    %148 = arith.addf %146, %147 : vector<2x32xf32>
    %c0_58 = arith.constant 0 : index
    %c0_59 = arith.constant 0 : index
    %149 = vector.load %arg17[%c0_58, %c0_59] : memref<64x32xbf16, #tpu.memory_space<vmem>>, vector<64x32xbf16>
    %150 = arith.truncf %145 : vector<2x64xf32> to vector<2x64xbf16>
    %cst_60 = arith.constant dense<0.000000e+00> : vector<2x32xf32>
    %151 = tpu.matmul %150, %149, %cst_60 {dimension_numbers = #tpu.dot_dimension_numbers<[1], [0], [0], [1], [0, 0, 1, 1], [], []>} : vector<2x64xbf16>, vector<64x32xbf16>, vector<2x32xf32> -> vector<2x32xf32>
    %152 = arith.addf %148, %151 : vector<2x32xf32>
    %153 = math.tanh %152 : vector<2x32xf32>
    %c0_61 = arith.constant 0 : index
    %c0_62 = arith.constant 0 : index
    %154 = vector.load %arg18[%c0_61, %c0_62] : memref<2x32xf32, #tpu.memory_space<vmem>>, vector<2x32xf32>
    tpu.vector_store %arg18[%c0_61, %c0_62], %153 {strides = array<i32>} : memref<2x32xf32, #tpu.memory_space<vmem>>, vector<2x32xf32>,
    return
  }
  func.func @transform_0(%arg0: i32) -> (i32, i32) {
    %c0_i32 = arith.constant 0 : i32
    %c0_i32_0 = arith.constant 0 : i32
    return %arg0, %c0_i32 : i32, i32
  }
  func.func @transform_1(%arg0: i32) -> (i32, i32, i32) {
    %c0_i32 = arith.constant 0 : i32
    %c0_i32_0 = arith.constant 0 : i32
    %c0_i32_1 = arith.constant 0 : i32
    return %arg0, %c0_i32, %c0_i32_0 : i32, i32, i32
  }
  func.func @transform_2(%arg0: i32) -> (i32, i32) {
    %c0_i32 = arith.constant 0 : i32
    %c0_i32_0 = arith.constant 0 : i32
    return %arg0, %c0_i32 : i32, i32
  }
  func.func @transform_3(%arg0: i32) -> (i32, i32, i32) {
    %c0_i32 = arith.constant 0 : i32
    %c0_i32_0 = arith.constant 0 : i32
    %c0_i32_1 = arith.constant 0 : i32
    return %arg0, %c0_i32, %c0_i32_0 : i32, i32, i32
  }
  func.func @transform_4(%arg0: i32) -> (i32, i32, i32) {
    %c0_i32 = arith.constant 0 : i32
    %c0_i32_0 = arith.constant 0 : i32
    %c0_i32_1 = arith.constant 0 : i32
    return %arg0, %c0_i32, %c0_i32_0 : i32, i32, i32
  }
  func.func @transform_5(%arg0: i32) -> (i32, i32) {
    %c0_i32 = arith.constant 0 : i32
    %c0_i32_0 = arith.constant 0 : i32
    %c0_i32_1 = arith.constant 0 : i32
    return %c0_i32, %c0_i32_0 : i32, i32
  }
  func.func @transform_6(%arg0: i32) -> (i32, i32) {
    %c0_i32 = arith.constant 0 : i32
    %c0_i32_0 = arith.constant 0 : i32
    %c0_i32_1 = arith.constant 0 : i32
    return %c0_i32, %c0_i32_0 : i32, i32
  }
  func.func @transform_7(%arg0: i32) -> (i32, i32) {
    %c0_i32 = arith.constant 0 : i32
    %c0_i32_0 = arith.constant 0 : i32
    %c0_i32_1 = arith.constant 0 : i32
    return %c0_i32, %c0_i32_0 : i32, i32
  }
  func.func @transform_8(%arg0: i32) -> (i32, i32) {
    %c0_i32 = arith.constant 0 : i32
    %c0_i32_0 = arith.constant 0 : i32
    %c0_i32_1 = arith.constant 0 : i32
    return %c0_i32, %c0_i32_0 : i32, i32
  }
  func.func @transform_9(%arg0: i32) -> (i32, i32) {
    %c0_i32 = arith.constant 0 : i32
    %c0_i32_0 = arith.constant 0 : i32
    %c0_i32_1 = arith.constant 0 : i32
    return %c0_i32, %c0_i32_0 : i32, i32
  }
  func.func @transform_10(%arg0: i32) -> (i32, i32) {
    %c0_i32 = arith.constant 0 : i32
    %c0_i32_0 = arith.constant 0 : i32
    %c0_i32_1 = arith.constant 0 : i32
    return %c0_i32, %c0_i32_0 : i32, i32
  }
  func.func @transform_11(%arg0: i32) -> (i32, i32) {
    %c0_i32 = arith.constant 0 : i32
    %c0_i32_0 = arith.constant 0 : i32
    %c0_i32_1 = arith.constant 0 : i32
    return %c0_i32, %c0_i32_0 : i32, i32
  }
  func.func @transform_12(%arg0: i32) -> (i32, i32) {
    %c0_i32 = arith.constant 0 : i32
    %c0_i32_0 = arith.constant 0 : i32
    %c0_i32_1 = arith.constant 0 : i32
    return %c0_i32, %c0_i32_0 : i32, i32
  }
  func.func @transform_13(%arg0: i32) -> (i32, i32) {
    %c0_i32 = arith.constant 0 : i32
    %c0_i32_0 = arith.constant 0 : i32
    %c0_i32_1 = arith.constant 0 : i32
    return %c0_i32, %c0_i32_0 : i32, i32
  }
  func.func @transform_14(%arg0: i32) -> (i32, i32) {
    %c0_i32 = arith.constant 0 : i32
    %c0_i32_0 = arith.constant 0 : i32
    %c0_i32_1 = arith.constant 0 : i32
    return %c0_i32, %c0_i32_0 : i32, i32
  }
  func.func @transform_15(%arg0: i32) -> (i32, i32) {
    %c0_i32 = arith.constant 0 : i32
    %c0_i32_0 = arith.constant 0 : i32
    %c0_i32_1 = arith.constant 0 : i32
    return %c0_i32, %c0_i32_0 : i32, i32
  }
  func.func @transform_16(%arg0: i32) -> (i32, i32) {
    %c0_i32 = arith.constant 0 : i32
    %c0_i32_0 = arith.constant 0 : i32
    %c0_i32_1 = arith.constant 0 : i32
    return %c0_i32, %c0_i32_0 : i32, i32
  }
  func.func @transform_17(%arg0: i32) -> (i32, i32) {
    %c0_i32 = arith.constant 0 : i32
    %c0_i32_0 = arith.constant 0 : i32
    return %arg0, %c0_i32 : i32, i32
  }
}

</mosaic_0001>

<llo_original>
// kernel: coatt_encoder_forward.4
$region0: #{coatt_encoder_forward.4}
  #allocation0 [shape = 'u32[]', space=smem, size = 0x4, offset = 0x4, fixed_abs, tag = 'smem constant byte address 0x4 - core index']
  #allocation1 [shape = 'u32[72,128]{1,0:T(1,128)}', space=vmem, size = 0x9000, scoped, tag = 'internal scratch']
  %s0 = inlined_call_operand.vmem [shape: bf16[8,4,32], index: 0, kind: input, shape index: {}]
  %s1 = inlined_call_operand.vmem [shape: s32[4,1], index: 1, kind: input, shape index: {}]
  %s2 = inlined_call_operand.vmem [shape: bf16[32,128], index: 2, kind: input, shape index: {}]
  %s3 = inlined_call_operand.vmem [shape: bf16[32,128], index: 3, kind: input, shape index: {}]
  %s4 = inlined_call_operand.vmem [shape: f32[1,128], index: 4, kind: input, shape index: {}]
  %s5 = inlined_call_operand.vmem [shape: f32[4,32], index: 5, kind: output, shape index: {}]
  %s6 = sld [smem:[#allocation0]]
  $region30: #{coatt_encoder_forward.4} parent=0
    _
  %s8 = ssub.s32 1, %s6
  %s9 = scalar_select 0, %s8, %s6
  // Predicated region
  $region2: #{coatt_encoder_forward.4} parent=0 // pred_check
    _
  $region3: #{coatt_encoder_forward.4} parent=0 // pred_check_branch
    %11 = sbr.rel (0) target = $region5
  $region4: #{coatt_encoder_forward.4} parent=0 // pred_region
    _
  $region5: #{coatt_encoder_forward.4} parent=0 // pred_fallthru
    _
  // Predicated region
  $region6: #{coatt_encoder_forward.4} parent=0 // pred_check
    _
  $region7: #{coatt_encoder_forward.4} parent=0 // pred_check_branch
    %13 = sbr.rel (0) target = $region9
  $region8: #{coatt_encoder_forward.4} parent=0 // pred_region
    _
  $region9: #{coatt_encoder_forward.4} parent=0 // pred_fallthru
    _
  // Predicated region
  $region10: #{coatt_encoder_forward.4} parent=0 // pred_check
    _
  $region11: #{coatt_encoder_forward.4} parent=0 // pred_check_branch
    %15 = sbr.rel (0) target = $region13
  $region12: #{coatt_encoder_forward.4} parent=0 // pred_region
    _
  $region13: #{coatt_encoder_forward.4} parent=0 // pred_fallthru
    _
  // Predicated region
  $region14: #{coatt_encoder_forward.4} parent=0 // pred_check
    _
  $region15: #{coatt_encoder_forward.4} parent=0 // pred_check_branch
    %17 = sbr.rel (0) target = $region17
  $region16: #{coatt_encoder_forward.4} parent=0 // pred_region
    _
  $region17: #{coatt_encoder_forward.4} parent=0 // pred_fallthru
    _
  // Predicated region
  $region18: #{coatt_encoder_forward.4} parent=0 // pred_check
    _
  $region19: #{coatt_encoder_forward.4} parent=0 // pred_check_branch
    %19 = sbr.rel (0) target = $region21
  $region20: #{coatt_encoder_forward.4} parent=0 // pred_region
    _
  $region21: #{coatt_encoder_forward.4} parent=0 // pred_fallthru
    _
  %v21 = vld [vmem:[%s0] sm:$0x3]
  %v22 = vld [vmem:[%s0 + $0x2] sm:$0x3]
  %v23 = vld [vmem:[%s0 + $0x4] sm:$0x3]
  %v24 = vld [vmem:[%s0 + $0x6] sm:$0x3]
  %v25 = vld [vmem:[%s0 + $0x8] sm:$0x3]
  %v26 = vld [vmem:[%s0 + $0xa] sm:$0x3]
  %v27 = vld [vmem:[%s0 + $0xc] sm:$0x3]
  %v28 = vld [vmem:[%s0 + $0xe] sm:$0x3]
  %v29 = vld [vmem:[%s2] sm:$0xf]
  %v30 = vld [vmem:[%s2 + $0x4] sm:$0xf]
  %v31 = vld [vmem:[%s2 + $0x8] sm:$0xf]
  %v32 = vld [vmem:[%s2 + $0xc] sm:$0xf]
  %v33 = vld [vmem:[%s4] sm:$0x1]
  %v35 = vperm.slane %v33, 0
  %38 = vst [vmem:[#allocation1] ss:$4 sm:$0xff] %v21
  %s40 = scalar_lea.vmem [#allocation1], 1
  %41 = vst [vmem:[%s40] ss:$4 sm:$0xff] %v22
  %s43 = scalar_lea.vmem [#allocation1], 2
  %44 = vst [vmem:[%s43] ss:$4 sm:$0xff] %v23
  %s46 = scalar_lea.vmem [#allocation1], 3
  %47 = vst [vmem:[%s46] ss:$4 sm:$0xff] %v24
  %s49 = scalar_lea.vmem [#allocation1], 32
  %50 = vst [vmem:[%s49] ss:$4 sm:$0xff] %v25
  %s52 = scalar_lea.vmem [#allocation1], 33
  %53 = vst [vmem:[%s52] ss:$4 sm:$0xff] %v26
  %s55 = scalar_lea.vmem [#allocation1], 34
  %56 = vst [vmem:[%s55] ss:$4 sm:$0xff] %v27
  %s58 = scalar_lea.vmem [#allocation1], 35
  %59 = vst [vmem:[%s58] ss:$4 sm:$0xff] %v28
  %v60 = vld.sshfl [vmem:[#allocation1] sm:$0xff pattern:$0x73625140]
  %v61 = vld.sshfl [vmem:[#allocation1 + $0x20] sm:$0xff pattern:$0x73625140]
  %v66 = vunpack.c.l.b16 %v29
  %v67 = vunpack.c.l.b16 %v30
  %v68 = vunpack.c.l.b16 %v31
  %v69 = vunpack.c.l.b16 %v32
  %v70 = vpack.c.b16 %v67, %v66
  %v71 = vpack.c.b16 %v69, %v68
  %vm74 = vcmask 261120
  %v75 = vsel %vm74, %v60, 0
  %v77 = vsel %vm74, %v61, 0
  %79 = vmatpush.bf16.msra.mxu0 0
  %80 = vmatpush.bf16.msra.mxu0 0
  %81 = vmatpush.bf16.msra.mxu0 0
  %82 = vmatpush.bf16.msra.mxu0 0
  %83 = vmatpush.bf16.msra.mxu0 0
  %84 = vmatpush.bf16.msra.mxu0 0
  %85 = vmatpush.bf16.msra.mxu0 %v71
  %86 = vmatpush.bf16.msra.mxu0 %v70
  %87 = vmatmul.bf16.gmra.mxu0 %v75
  %v88 = vpop.f32.mrf.mxu0
  %v89 = vadd.f32 %v35, %v88
  %v90 = vpop.f32.mrf.mxu0
  %v91 = vadd.f32 %v35, %v90
  %92 = vmatmul.bf16.gmra.mxu0 %v77
  %v93 = vpop.f32.mrf.mxu0
  %v94 = vadd.f32 %v35, %v93
  %v95 = vpop.f32.mrf.mxu0
  %v96 = vadd.f32 %v35, %v95
  %97 = vdwg.mxu0
  %v98 = vld [vmem:[%s3] sm:$0xf]
  %v99 = vld [vmem:[%s3 + $0x4] sm:$0xf]
  %v100 = vld [vmem:[%s3 + $0x8] sm:$0xf]
  %v101 = vld [vmem:[%s3 + $0xc] sm:$0xf]
  %v102 = vld [vmem:[%s1] sm:$0xf]
  %v107 = vunpack.c.l.b16 %v98
  %v108 = vunpack.c.l.b16 %v99
  %v109 = vunpack.c.l.b16 %v100
  %v110 = vunpack.c.l.b16 %v101
  %v111 = vpack.c.b16 %v108, %v107
  %v112 = vpack.c.b16 %v110, %v109
  %v116 = vsel %vm74, 0, 0
  %118 = vmatpush.bf16.msra.mxu0 0
  %119 = vmatpush.bf16.msra.mxu0 0
  %120 = vmatpush.bf16.msra.mxu0 0
  %121 = vmatpush.bf16.msra.mxu0 0
  %122 = vmatpush.bf16.msra.mxu0 0
  %123 = vmatpush.bf16.msra.mxu0 0
  %124 = vmatpush.bf16.msra.mxu0 %v112
  %125 = vmatpush.bf16.msra.mxu0 %v111
  %126 = vmatmul.bf16.gmra.mxu0 %v116
  %v127 = vpop.f32.mrf.mxu0
  %v128 = vadd.f32 0.0, %v127
  %v129 = vpop.f32.mrf.mxu0
  %130 = vdwg.mxu0
  %v131 = vadd.f32 %v89, %v128
  %v132 = vxor.u32 %v131, 2147483648
  %v133 = vmul.f32 %v132, 1.442695
  %v134 = vpow.pop %v133
  %v135 = vadd.f32 %v134, 1.0
  %v136 = vrcp.pop %v135
  %v137 = vmul.f32 %v135, %v136
  %v138 = vsub.f32 1.0, %v137
  %v139 = vmul.f32 %v136, %v138
  %v140 = vadd.f32 %v136, %v139
  %vm141 = vweird.f32 %v135
  %vm142 = vweird.f32 %v136
  %vm143 = vmor %vm141, %vm142
  %v144 = vsel %vm143, %v136, %v140
  %v145 = vand.u32 2147483647, %v135
  %vm146 = vcmp.eq.f32.partialorder %v145, 8.507059e+37
  %v147 = vand.u32 %v135, 2147483648
  %v148 = vor.u32 1.1754944e-38, %v147
  %v149 = vsel %vm146, %v148, %v144
  %v150 = vmul.f32 1.0, %v149
  %v151 = vtanh.pop %v131
  %v152 = vmul.f32 %v150, 0.0
  %154 = vrot.lane.b32.xlu0 %v151, 64
  %v155 = vpop.permute.xlu0 %154
  %v157 = vmul.f32 %v150, %v155
  %159 = vrot.lane.b32.xlu0 %v157, 32
  %v160 = vpop.permute.xlu0 %159
  %v162 = vadd.f32 %v152, %v160
  %v163 = vtanh.pop %v162
  %165 = vrot.lane.b32.xlu0 %v163, 64
  %v166 = vpop.permute.xlu0 %165
  %v168 = vmul.f32 %v150, %v166
  %vm169 = vcmp.gt.s32.totalorder %v102, 0
  %v170 = vsel %vm169, 1, 0
  %171 = vset.pattern.permute.xlu0 0
  %172 = vperm.xlu0 %171, %v170
  %v173 = vpop.permute.xlu0 %172
  %vm174 = vcmp.eq.s32.totalorder %v173, 1
  %v175 = vsel %vm174, %v168, 0.0
  %v176 = vsel %vm174, %v162, 0.0
  %v177 = vpack.c.bf16 %v175, %v175
  %179 = vrot.lane.b32.xlu0 %v177, 32
  %v180 = vpop.permute.xlu0 %179
  %v182 = vsel %vm74, %v180, 0
  %184 = vmatpush.bf16.msra.mxu0 0
  %185 = vmatpush.bf16.msra.mxu0 0
  %186 = vmatpush.bf16.msra.mxu0 0
  %187 = vmatpush.bf16.msra.mxu0 0
  %188 = vmatpush.bf16.msra.mxu0 0
  %189 = vmatpush.bf16.msra.mxu0 0
  %190 = vmatpush.bf16.msra.mxu0 %v112
  %191 = vmatpush.bf16.msra.mxu0 %v111
  %192 = vmatmul.bf16.gmra.mxu0 %v182
  %v193 = vpop.f32.mrf.mxu0
  %v194 = vadd.f32 0.0, %v193
  %v195 = vpop.f32.mrf.mxu0
  %196 = vdwg.mxu0
  %v198 = vrot.slane %v194, 4
  %v200 = vadd.f32 %v89, %v198
  %v201 = vxor.u32 %v200, 2147483648
  %v202 = vmul.f32 %v201, 1.442695
  %v203 = vpow.pop %v202
  %v204 = vadd.f32 %v203, 1.0
  %v205 = vrcp.pop %v204
  %v206 = vmul.f32 %v204, %v205
  %v207 = vsub.f32 1.0, %v206
  %v208 = vmul.f32 %v205, %v207
  %v209 = vadd.f32 %v205, %v208
  %vm210 = vweird.f32 %v204
  %vm211 = vweird.f32 %v205
  %vm212 = vmor %vm210, %vm211
  %v213 = vsel %vm212, %v205, %v209
  %v214 = vand.u32 2147483647, %v204
  %vm215 = vcmp.eq.f32.partialorder %v214, 8.507059e+37
  %v216 = vand.u32 %v204, 2147483648
  %v217 = vor.u32 1.1754944e-38, %v216
  %v218 = vsel %vm215, %v217, %v213
  %v219 = vmul.f32 1.0, %v218
  %v220 = vtanh.pop %v200
  %v222 = vrot.slane %v176, 4
  %v224 = vmul.f32 %v219, %v222
  %226 = vrot.lane.b32.xlu0 %v220, 64
  %v227 = vpop.permute.xlu0 %226
  %v229 = vmul.f32 %v219, %v227
  %231 = vrot.lane.b32.xlu0 %v229, 32
  %v232 = vpop.permute.xlu0 %231
  %v234 = vadd.f32 %v224, %v232
  %v235 = vtanh.pop %v234
  %237 = vrot.lane.b32.xlu0 %v235, 64
  %v238 = vpop.permute.xlu0 %237
  %v240 = vmul.f32 %v219, %v238
  %vm241 = vcmp.gt.s32.totalorder %v102, 1
  %v242 = vsel %vm241, 1, 0
  %243 = vset.pattern.permute.xlu0 0
  %244 = vperm.xlu0 %243, %v242
  %v245 = vpop.permute.xlu0 %244
  %vm246 = vcmp.eq.s32.totalorder %v245, 1
  %v248 = vrot.slane %v240, 4
  %249 = vrot.lane.b32.xlu0 %v248, 32
  %v250 = vpop.permute.xlu0 %249
  %253 = vrot.lane.b32.xlu0 %v175, 32
  %v254 = vpop.permute.xlu0 %253
  %v256 = vsel %vm246, %v250, %v254
  %v258 = vrot.slane %v234, 4
  %259 = vrot.lane.b32.xlu0 %v258, 96
  %v260 = vpop.permute.xlu0 %259
  %262 = vrot.lane.b32.xlu0 %v176, 96
  %v263 = vpop.permute.xlu0 %262
  %v265 = vsel %vm246, %v260, %v263
  %v266 = vpack.c.bf16 %v256, %v256
  %v268 = vsel %vm74, %v266, 0
  %270 = vmatpush.bf16.msra.mxu0 0
  %271 = vmatpush.bf16.msra.mxu0 0
  %272 = vmatpush.bf16.msra.mxu0 0
  %273 = vmatpush.bf16.msra.mxu0 0
  %274 = vmatpush.bf16.msra.mxu0 0
  %275 = vmatpush.bf16.msra.mxu0 0
  %276 = vmatpush.bf16.msra.mxu0 %v112
  %277 = vmatpush.bf16.msra.mxu0 %v111
  %278 = vmatmul.bf16.gmra.mxu0 %v268
  %v279 = vpop.f32.mrf.mxu0
  %v280 = vadd.f32 0.0, %v279
  %v281 = vpop.f32.mrf.mxu0
  %282 = vdwg.mxu0
  %v283 = vadd.f32 %v91, %v280
  %v284 = vxor.u32 %v283, 2147483648
  %v285 = vmul.f32 %v284, 1.442695
  %v286 = vpow.pop %v285
  %v287 = vadd.f32 %v286, 1.0
  %v288 = vrcp.pop %v287
  %v289 = vmul.f32 %v287, %v288
  %v290 = vsub.f32 1.0, %v289
  %v291 = vmul.f32 %v288, %v290
  %v292 = vadd.f32 %v288, %v291
  %vm293 = vweird.f32 %v287
  %vm294 = vweird.f32 %v288
  %vm295 = vmor %vm293, %vm294
  %v296 = vsel %vm295, %v288, %v292
  %v297 = vand.u32 2147483647, %v287
  %vm298 = vcmp.eq.f32.partialorder %v297, 8.507059e+37
  %v299 = vand.u32 %v287, 2147483648
  %v300 = vor.u32 1.1754944e-38, %v299
  %v301 = vsel %vm298, %v300, %v296
  %v302 = vmul.f32 1.0, %v301
  %v303 = vtanh.pop %v283
  %305 = vrot.lane.b32.xlu0 %v265, 32
  %v306 = vpop.permute.xlu0 %305
  %v308 = vmul.f32 %v302, %v306
  %310 = vrot.lane.b32.xlu0 %v303, 64
  %v311 = vpop.permute.xlu0 %310
  %v313 = vmul.f32 %v302, %v311
  %315 = vrot.lane.b32.xlu0 %v313, 32
  %v316 = vpop.permute.xlu0 %315
  %v318 = vadd.f32 %v308, %v316
  %v319 = vtanh.pop %v318
  %321 = vrot.lane.b32.xlu0 %v319, 64
  %v322 = vpop.permute.xlu0 %321
  %v324 = vmul.f32 %v302, %v322
  %vm325 = vcmp.gt.s32.totalorder %v102, 2
  %v326 = vsel %vm325, 1, 0
  %327 = vset.pattern.permute.xlu0 0
  %328 = vperm.xlu0 %327, %v326
  %v329 = vpop.permute.xlu0 %328
  %vm330 = vcmp.eq.s32.totalorder %v329, 1
  %332 = vrot.lane.b32.xlu0 %v256, 96
  %v333 = vpop.permute.xlu0 %332
  %v335 = vsel %vm330, %v324, %v333
  %v336 = vsel %vm330, %v318, %v306
  %v337 = vpack.c.bf16 %v335, %v335
  %339 = vrot.lane.b32.xlu0 %v337, 32
  %v340 = vpop.permute.xlu0 %339
  %v342 = vsel %vm74, %v340, 0
  %344 = vmatpush.bf16.msra.mxu0 0
  %345 = vmatpush.bf16.msra.mxu0 0
  %346 = vmatpush.bf16.msra.mxu0 0
  %347 = vmatpush.bf16.msra.mxu0 0
  %348 = vmatpush.bf16.msra.mxu0 0
  %349 = vmatpush.bf16.msra.mxu0 0
  %350 = vmatpush.bf16.msra.mxu0 %v112
  %351 = vmatpush.bf16.msra.mxu0 %v111
  %352 = vmatmul.bf16.gmra.mxu0 %v342
  %v353 = vpop.f32.mrf.mxu0
  %v354 = vadd.f32 0.0, %v353
  %v355 = vpop.f32.mrf.mxu0
  %356 = vdwg.mxu0
  %v358 = vrot.slane %v354, 4
  %v360 = vadd.f32 %v91, %v358
  %v361 = vxor.u32 %v360, 2147483648
  %v362 = vmul.f32 %v361, 1.442695
  %v363 = vpow.pop %v362
  %v364 = vadd.f32 %v363, 1.0
  %v365 = vrcp.pop %v364
  %v366 = vmul.f32 %v364, %v365
  %v367 = vsub.f32 1.0, %v366
  %v368 = vmul.f32 %v365, %v367
  %v369 = vadd.f32 %v365, %v368
  %vm370 = vweird.f32 %v364
  %vm371 = vweird.f32 %v365
  %vm372 = vmor %vm370, %vm371
  %v373 = vsel %vm372, %v365, %v369
  %v374 = vand.u32 2147483647, %v364
  %vm375 = vcmp.eq.f32.partialorder %v374, 8.507059e+37
  %v376 = vand.u32 %v364, 2147483648
  %v377 = vor.u32 1.1754944e-38, %v376
  %v378 = vsel %vm375, %v377, %v373
  %v379 = vmul.f32 1.0, %v378
  %v380 = vtanh.pop %v360
  %v382 = vrot.slane %v336, 4
  %v384 = vmul.f32 %v379, %v382
  %386 = vrot.lane.b32.xlu0 %v380, 64
  %v387 = vpop.permute.xlu0 %386
  %v389 = vmul.f32 %v379, %v387
  %391 = vrot.lane.b32.xlu0 %v389, 32
  %v392 = vpop.permute.xlu0 %391
  %v394 = vadd.f32 %v384, %v392
  %v395 = vtanh.pop %v394
  %397 = vrot.lane.b32.xlu0 %v395, 64
  %v398 = vpop.permute.xlu0 %397
  %v400 = vmul.f32 %v379, %v398
  %vm401 = vcmp.gt.s32.totalorder %v102, 3
  %v402 = vsel %vm401, 1, 0
  %403 = vset.pattern.permute.xlu0 0
  %404 = vperm.xlu0 %403, %v402
  %v405 = vpop.permute.xlu0 %404
  %vm406 = vcmp.eq.s32.totalorder %v405, 1
  %v408 = vrot.slane %v400, 4
  %409 = vrot.lane.b32.xlu0 %v408, 32
  %v410 = vpop.permute.xlu0 %409
  %413 = vrot.lane.b32.xlu0 %v335, 32
  %v414 = vpop.permute.xlu0 %413
  %v416 = vsel %vm406, %v410, %v414
  %v418 = vrot.slane %v394, 4
  %419 = vrot.lane.b32.xlu0 %v418, 96
  %v420 = vpop.permute.xlu0 %419
  %422 = vrot.lane.b32.xlu0 %v336, 96
  %v423 = vpop.permute.xlu0 %422
  %v425 = vsel %vm406, %v420, %v423
  %v426 = vpack.c.bf16 %v416, %v416
  %v428 = vsel %vm74, %v426, 0
  %430 = vmatpush.bf16.msra.mxu0 0
  %431 = vmatpush.bf16.msra.mxu0 0
  %432 = vmatpush.bf16.msra.mxu0 0
  %433 = vmatpush.bf16.msra.mxu0 0
  %434 = vmatpush.bf16.msra.mxu0 0
  %435 = vmatpush.bf16.msra.mxu0 0
  %436 = vmatpush.bf16.msra.mxu0 %v112
  %437 = vmatpush.bf16.msra.mxu0 %v111
  %438 = vmatmul.bf16.gmra.mxu0 %v428
  %v439 = vpop.f32.mrf.mxu0
  %v440 = vadd.f32 0.0, %v439
  %v441 = vpop.f32.mrf.mxu0
  %442 = vdwg.mxu0
  %v443 = vadd.f32 %v94, %v440
  %v444 = vxor.u32 %v443, 2147483648
  %v445 = vmul.f32 %v444, 1.442695
  %v446 = vpow.pop %v445
  %v447 = vadd.f32 %v446, 1.0
  %v448 = vrcp.pop %v447
  %v449 = vmul.f32 %v447, %v448
  %v450 = vsub.f32 1.0, %v449
  %v451 = vmul.f32 %v448, %v450
  %v452 = vadd.f32 %v448, %v451
  %vm453 = vweird.f32 %v447
  %vm454 = vweird.f32 %v448
  %vm455 = vmor %vm453, %vm454
  %v456 = vsel %vm455, %v448, %v452
  %v457 = vand.u32 2147483647, %v447
  %vm458 = vcmp.eq.f32.partialorder %v457, 8.507059e+37
  %v459 = vand.u32 %v447, 2147483648
  %v460 = vor.u32 1.1754944e-38, %v459
  %v461 = vsel %vm458, %v460, %v456
  %v462 = vmul.f32 1.0, %v461
  %v463 = vtanh.pop %v443
  %465 = vrot.lane.b32.xlu0 %v425, 32
  %v466 = vpop.permute.xlu0 %465
  %v468 = vmul.f32 %v462, %v466
  %470 = vrot.lane.b32.xlu0 %v463, 64
  %v471 = vpop.permute.xlu0 %470
  %v473 = vmul.f32 %v462, %v471
  %475 = vrot.lane.b32.xlu0 %v473, 32
  %v476 = vpop.permute.xlu0 %475
  %v478 = vadd.f32 %v468, %v476
  %v479 = vtanh.pop %v478
  %481 = vrot.lane.b32.xlu0 %v479, 64
  %v482 = vpop.permute.xlu0 %481
  %v484 = vmul.f32 %v462, %v482
  %vm485 = vcmp.gt.s32.totalorder %v102, 4
  %v486 = vsel %vm485, 1, 0
  %487 = vset.pattern.permute.xlu0 0
  %488 = vperm.xlu0 %487, %v486
  %v489 = vpop.permute.xlu0 %488
  %vm490 = vcmp.eq.s32.totalorder %v489, 1
  %492 = vrot.lane.b32.xlu0 %v416, 96
  %v493 = vpop.permute.xlu0 %492
  %v495 = vsel %vm490, %v484, %v493
  %v496 = vsel %vm490, %v478, %v466
  %v497 = vpack.c.bf16 %v495, %v495
  %499 = vrot.lane.b32.xlu0 %v497, 32
  %v500 = vpop.permute.xlu0 %499
  %v502 = vsel %vm74, %v500, 0
  %504 = vmatpush.bf16.msra.mxu0 0
  %505 = vmatpush.bf16.msra.mxu0 0
  %506 = vmatpush.bf16.msra.mxu0 0
  %507 = vmatpush.bf16.msra.mxu0 0
  %508 = vmatpush.bf16.msra.mxu0 0
  %509 = vmatpush.bf16.msra.mxu0 0
  %510 = vmatpush.bf16.msra.mxu0 %v112
  %511 = vmatpush.bf16.msra.mxu0 %v111
  %512 = vmatmul.bf16.gmra.mxu0 %v502
  %v513 = vpop.f32.mrf.mxu0
  %v514 = vadd.f32 0.0, %v513
  %v515 = vpop.f32.mrf.mxu0
  %516 = vdwg.mxu0
  %v518 = vrot.slane %v514, 4
  %v520 = vadd.f32 %v94, %v518
  %v521 = vxor.u32 %v520, 2147483648
  %v522 = vmul.f32 %v521, 1.442695
  %v523 = vpow.pop %v522
  %v524 = vadd.f32 %v523, 1.0
  %v525 = vrcp.pop %v524
  %v526 = vmul.f32 %v524, %v525
  %v527 = vsub.f32 1.0, %v526
  %v528 = vmul.f32 %v525, %v527
  %v529 = vadd.f32 %v525, %v528
  %vm530 = vweird.f32 %v524
  %vm531 = vweird.f32 %v525
  %vm532 = vmor %vm530, %vm531
  %v533 = vsel %vm532, %v525, %v529
  %v534 = vand.u32 2147483647, %v524
  %vm535 = vcmp.eq.f32.partialorder %v534, 8.507059e+37
  %v536 = vand.u32 %v524, 2147483648
  %v537 = vor.u32 1.1754944e-38, %v536
  %v538 = vsel %vm535, %v537, %v533
  %v539 = vmul.f32 1.0, %v538
  %v540 = vtanh.pop %v520
  %v542 = vrot.slane %v496, 4
  %v544 = vmul.f32 %v539, %v542
  %546 = vrot.lane.b32.xlu0 %v540, 64
  %v547 = vpop.permute.xlu0 %546
  %v549 = vmul.f32 %v539, %v547
  %551 = vrot.lane.b32.xlu0 %v549, 32
  %v552 = vpop.permute.xlu0 %551
  %v554 = vadd.f32 %v544, %v552
  %v555 = vtanh.pop %v554
  %557 = vrot.lane.b32.xlu0 %v555, 64
  %v558 = vpop.permute.xlu0 %557
  %v560 = vmul.f32 %v539, %v558
  %vm561 = vcmp.gt.s32.totalorder %v102, 5
  %v562 = vsel %vm561, 1, 0
  %563 = vset.pattern.permute.xlu0 0
  %564 = vperm.xlu0 %563, %v562
  %v565 = vpop.permute.xlu0 %564
  %vm566 = vcmp.eq.s32.totalorder %v565, 1
  %v568 = vrot.slane %v560, 4
  %569 = vrot.lane.b32.xlu0 %v568, 32
  %v570 = vpop.permute.xlu0 %569
  %573 = vrot.lane.b32.xlu0 %v495, 32
  %v574 = vpop.permute.xlu0 %573
  %v576 = vsel %vm566, %v570, %v574
  %v578 = vrot.slane %v554, 4
  %579 = vrot.lane.b32.xlu0 %v578, 96
  %v580 = vpop.permute.xlu0 %579
  %582 = vrot.lane.b32.xlu0 %v496, 96
  %v583 = vpop.permute.xlu0 %582
  %v585 = vsel %vm566, %v580, %v583
  %v586 = vpack.c.bf16 %v576, %v576
  %v588 = vsel %vm74, %v586, 0
  %590 = vmatpush.bf16.msra.mxu0 0
  %591 = vmatpush.bf16.msra.mxu0 0
  %592 = vmatpush.bf16.msra.mxu0 0
  %593 = vmatpush.bf16.msra.mxu0 0
  %594 = vmatpush.bf16.msra.mxu0 0
  %595 = vmatpush.bf16.msra.mxu0 0
  %596 = vmatpush.bf16.msra.mxu0 %v112
  %597 = vmatpush.bf16.msra.mxu0 %v111
  %598 = vmatmul.bf16.gmra.mxu0 %v588
  %v599 = vpop.f32.mrf.mxu0
  %v600 = vadd.f32 0.0, %v599
  %v601 = vpop.f32.mrf.mxu0
  %602 = vdwg.mxu0
  %v603 = vadd.f32 %v96, %v600
  %v604 = vxor.u32 %v603, 2147483648
  %v605 = vmul.f32 %v604, 1.442695
  %v606 = vpow.pop %v605
  %v607 = vadd.f32 %v606, 1.0
  %v608 = vrcp.pop %v607
  %v609 = vmul.f32 %v607, %v608
  %v610 = vsub.f32 1.0, %v609
  %v611 = vmul.f32 %v608, %v610
  %v612 = vadd.f32 %v608, %v611
  %vm613 = vweird.f32 %v607
  %vm614 = vweird.f32 %v608
  %vm615 = vmor %vm613, %vm614
  %v616 = vsel %vm615, %v608, %v612
  %v617 = vand.u32 2147483647, %v607
  %vm618 = vcmp.eq.f32.partialorder %v617, 8.507059e+37
  %v619 = vand.u32 %v607, 2147483648
  %v620 = vor.u32 1.1754944e-38, %v619
  %v621 = vsel %vm618, %v620, %v616
  %v622 = vmul.f32 1.0, %v621
  %v623 = vtanh.pop %v603
  %625 = vrot.lane.b32.xlu0 %v585, 32
  %v626 = vpop.permute.xlu0 %625
  %v628 = vmul.f32 %v622, %v626
  %630 = vrot.lane.b32.xlu0 %v623, 64
  %v631 = vpop.permute.xlu0 %630
  %v633 = vmul.f32 %v622, %v631
  %635 = vrot.lane.b32.xlu0 %v633, 32
  %v636 = vpop.permute.xlu0 %635
  %v638 = vadd.f32 %v628, %v636
  %v639 = vtanh.pop %v638
  %641 = vrot.lane.b32.xlu0 %v639, 64
  %v642 = vpop.permute.xlu0 %641
  %v644 = vmul.f32 %v622, %v642
  %vm645 = vcmp.gt.s32.totalorder %v102, 6
  %v646 = vsel %vm645, 1, 0
  %647 = vset.pattern.permute.xlu0 0
  %648 = vperm.xlu0 %647, %v646
  %v649 = vpop.permute.xlu0 %648
  %vm650 = vcmp.eq.s32.totalorder %v649, 1
  %652 = vrot.lane.b32.xlu0 %v576, 96
  %v653 = vpop.permute.xlu0 %652
  %v655 = vsel %vm650, %v644, %v653
  %v656 = vsel %vm650, %v638, %v626
  %v657 = vpack.c.bf16 %v655, %v655
  %659 = vrot.lane.b32.xlu0 %v657, 32
  %v660 = vpop.permute.xlu0 %659
  %v662 = vsel %vm74, %v660, 0
  %664 = vmatpush.bf16.msra.mxu0 0
  %665 = vmatpush.bf16.msra.mxu0 0
  %666 = vmatpush.bf16.msra.mxu0 0
  %667 = vmatpush.bf16.msra.mxu0 0
  %668 = vmatpush.bf16.msra.mxu0 0
  %669 = vmatpush.bf16.msra.mxu0 0
  %670 = vmatpush.bf16.msra.mxu0 %v112
  %671 = vmatpush.bf16.msra.mxu0 %v111
  %672 = vmatmul.bf16.gmra.mxu0 %v662
  %v673 = vpop.f32.mrf.mxu0
  %v674 = vadd.f32 0.0, %v673
  %v675 = vpop.f32.mrf.mxu0
  %676 = vdwg.mxu0
  %v678 = vrot.slane %v674, 4
  %v680 = vadd.f32 %v96, %v678
  %v681 = vxor.u32 %v680, 2147483648
  %v682 = vmul.f32 %v681, 1.442695
  %v683 = vpow.pop %v682
  %v684 = vadd.f32 %v683, 1.0
  %v685 = vrcp.pop %v684
  %v686 = vmul.f32 %v684, %v685
  %v687 = vsub.f32 1.0, %v686
  %v688 = vmul.f32 %v685, %v687
  %v689 = vadd.f32 %v685, %v688
  %vm690 = vweird.f32 %v684
  %vm691 = vweird.f32 %v685
  %vm692 = vmor %vm690, %vm691
  %v693 = vsel %vm692, %v685, %v689
  %v694 = vand.u32 2147483647, %v684
  %vm695 = vcmp.eq.f32.partialorder %v694, 8.507059e+37
  %v696 = vand.u32 %v684, 2147483648
  %v697 = vor.u32 1.1754944e-38, %v696
  %v698 = vsel %vm695, %v697, %v693
  %v699 = vmul.f32 1.0, %v698
  %v700 = vtanh.pop %v680
  %v702 = vrot.slane %v656, 4
  %v704 = vmul.f32 %v699, %v702
  %706 = vrot.lane.b32.xlu0 %v700, 64
  %v707 = vpop.permute.xlu0 %706
  %v709 = vmul.f32 %v699, %v707
  %711 = vrot.lane.b32.xlu0 %v709, 32
  %v712 = vpop.permute.xlu0 %711
  %v714 = vadd.f32 %v704, %v712
  %v715 = vtanh.pop %v714
  %717 = vrot.lane.b32.xlu0 %v715, 64
  %v718 = vpop.permute.xlu0 %717
  %v720 = vmul.f32 %v699, %v718
  %vm721 = vcmp.gt.s32.totalorder %v102, 7
  %v722 = vsel %vm721, 1, 0
  %723 = vset.pattern.permute.xlu0 0
  %724 = vperm.xlu0 %723, %v722
  %v725 = vpop.permute.xlu0 %724
  %vm726 = vcmp.eq.s32.totalorder %v725, 1
  %v728 = vrot.slane %v720, 4
  %729 = vrot.lane.b32.xlu0 %v728, 32
  %v730 = vpop.permute.xlu0 %729
  %733 = vrot.lane.b32.xlu0 %v655, 32
  %v734 = vpop.permute.xlu0 %733
  %v736 = vsel %vm726, %v730, %v734
  %vm737 = vcmask 257024
  %738 = vst.msk [vmem:[%s5] sm:$0xf] %vm737, %v736
  // Predicated region
  $region22: #{coatt_encoder_forward.4} parent=0 // pred_check
    _
  $region23: #{coatt_encoder_forward.4} parent=0 // pred_check_branch
    %740 = sbr.rel (0) target = $region25
  $region24: #{coatt_encoder_forward.4} parent=0 // pred_region
    _
  $region25: #{coatt_encoder_forward.4} parent=0 // pred_fallthru
    _
  // Predicated region
  $region26: #{coatt_encoder_forward.4} parent=0 // pred_check
    _
  $region27: #{coatt_encoder_forward.4} parent=0 // pred_check_branch
    %742 = sbr.rel (0) target = $region29
  $region28: #{coatt_encoder_forward.4} parent=0 // pred_region
    _
  $region29: #{coatt_encoder_forward.4} parent=0 // pred_fallthru
    _

// kernel: coatt_encoder_forward.3
$region0: #{coatt_encoder_forward.3}
  #allocation0 [shape = 'u32[]', space=smem, size = 0x4, offset = 0x4, fixed_abs, tag = 'smem constant byte address 0x4 - core index']
  #allocation1 [shape = 'u32[72,128]{1,0:T(1,128)}', space=vmem, size = 0x9000, scoped, tag = 'internal scratch']
  %s0 = inlined_call_operand.vmem [shape: bf16[8,2,32], index: 0, kind: input, shape index: {}]
  %s1 = inlined_call_operand.vmem [shape: s32[2,1], index: 1, kind: input, shape index: {}]
  %s2 = inlined_call_operand.vmem [shape: bf16[32,128], index: 2, kind: input, shape index: {}]
  %s3 = inlined_call_operand.vmem [shape: bf16[32,128], index: 3, kind: input, shape index: {}]
  %s4 = inlined_call_operand.vmem [shape: f32[1,128], index: 4, kind: input, shape index: {}]
  %s5 = inlined_call_operand.vmem [shape: f32[2,256], index: 5, kind: output, shape index: {0}]
  %s6 = inlined_call_operand.vmem [shape: f32[2,32], index: 6, kind: output, shape index: {1}]
  %7 = xla_tuple %s5, %s6
  %s8 = sld [smem:[#allocation0]]
  $region38: #{coatt_encoder_forward.3} parent=0
    _
  %s10 = ssub.s32 1, %s8
  %s11 = scalar_select 0, %s10, %s8
  // Predicated region
  $region2: #{coatt_encoder_forward.3} parent=0 // pred_check
    _
  $region3: #{coatt_encoder_forward.3} parent=0 // pred_check_branch
    %13 = sbr.rel (0) target = $region5
  $region4: #{coatt_encoder_forward.3} parent=0 // pred_region
    _
  $region5: #{coatt_encoder_forward.3} parent=0 // pred_fallthru
    _
  // Predicated region
  $region6: #{coatt_encoder_forward.3} parent=0 // pred_check
    _
  $region7: #{coatt_encoder_forward.3} parent=0 // pred_check_branch
    %15 = sbr.rel (0) target = $region9
  $region8: #{coatt_encoder_forward.3} parent=0 // pred_region
    _
  $region9: #{coatt_encoder_forward.3} parent=0 // pred_fallthru
    _
  // Predicated region
  $region10: #{coatt_encoder_forward.3} parent=0 // pred_check
    _
  $region11: #{coatt_encoder_forward.3} parent=0 // pred_check_branch
    %17 = sbr.rel (0) target = $region13
  $region12: #{coatt_encoder_forward.3} parent=0 // pred_region
    _
  $region13: #{coatt_encoder_forward.3} parent=0 // pred_fallthru
    _
  // Predicated region
  $region14: #{coatt_encoder_forward.3} parent=0 // pred_check
    _
  $region15: #{coatt_encoder_forward.3} parent=0 // pred_check_branch
    %19 = sbr.rel (0) target = $region17
  $region16: #{coatt_encoder_forward.3} parent=0 // pred_region
    _
  $region17: #{coatt_encoder_forward.3} parent=0 // pred_fallthru
    _
  // Predicated region
  $region18: #{coatt_encoder_forward.3} parent=0 // pred_check
    _
  $region19: #{coatt_encoder_forward.3} parent=0 // pred_check_branch
    %21 = sbr.rel (0) target = $region21
  $region20: #{coatt_encoder_forward.3} parent=0 // pred_region
    _
  $region21: #{coatt_encoder_forward.3} parent=0 // pred_fallthru
    _
  %v23 = vld [vmem:[%s0] sm:$0x1]
  %v24 = vld [vmem:[%s0 + $0x1] sm:$0x1]
  %v25 = vld [vmem:[%s0 + $0x2] sm:$0x1]
  %v26 = vld [vmem:[%s0 + $0x3] sm:$0x1]
  %v27 = vld [vmem:[%s0 + $0x4] sm:$0x1]
  %v28 = vld [vmem:[%s0 + $0x5] sm:$0x1]
  %v29 = vld [vmem:[%s0 + $0x6] sm:$0x1]
  %v30 = vld [vmem:[%s0 + $0x7] sm:$0x1]
  %v31 = vld [vmem:[%s2] sm:$0xf]
  %v32 = vld [vmem:[%s2 + $0x4] sm:$0xf]
  %v33 = vld [vmem:[%s2 + $0x8] sm:$0xf]
  %v34 = vld [vmem:[%s2 + $0xc] sm:$0xf]
  %v35 = vld [vmem:[%s4] sm:$0x1]
  %v37 = vperm.slane %v35, 0
  %40 = vst [vmem:[#allocation1] ss:$9 sm:$0xff] %v23
  %s42 = scalar_lea.vmem [#allocation1], 1
  %43 = vst [vmem:[%s42] ss:$9 sm:$0xff] %v24
  %s45 = scalar_lea.vmem [#allocation1], 2
  %46 = vst [vmem:[%s45] ss:$9 sm:$0xff] %v25
  %s48 = scalar_lea.vmem [#allocation1], 3
  %49 = vst [vmem:[%s48] ss:$9 sm:$0xff] %v26
  %s51 = scalar_lea.vmem [#allocation1], 4
  %52 = vst [vmem:[%s51] ss:$9 sm:$0xff] %v27
  %s54 = scalar_lea.vmem [#allocation1], 5
  %55 = vst [vmem:[%s54] ss:$9 sm:$0xff] %v28
  %s57 = scalar_lea.vmem [#allocation1], 6
  %58 = vst [vmem:[%s57] ss:$9 sm:$0xff] %v29
  %s60 = scalar_lea.vmem [#allocation1], 7
  %61 = vst [vmem:[%s60] ss:$9 sm:$0xff] %v30
  %v62 = vld [vmem:[#allocation1] sm:$0xff]
  %v67 = vunpack.c.l.b16 %v31
  %v68 = vunpack.c.l.b16 %v32
  %v69 = vunpack.c.l.b16 %v33
  %v70 = vunpack.c.l.b16 %v34
  %v71 = vpack.c.b16 %v68, %v67
  %v72 = vpack.c.b16 %v70, %v69
  %vm75 = vcmask 261120
  %v76 = vsel %vm75, %v62, 0
  %78 = vmatpush.bf16.msra.mxu0 0
  %79 = vmatpush.bf16.msra.mxu0 0
  %80 = vmatpush.bf16.msra.mxu0 0
  %81 = vmatpush.bf16.msra.mxu0 0
  %82 = vmatpush.bf16.msra.mxu0 0
  %83 = vmatpush.bf16.msra.mxu0 0
  %84 = vmatpush.bf16.msra.mxu0 %v72
  %85 = vmatpush.bf16.msra.mxu0 %v71
  %86 = vmatmul.bf16.gmra.mxu0 %v76
  %v87 = vpop.f32.mrf.mxu0
  %v88 = vadd.f32 %v37, %v87
  %v89 = vpop.f32.mrf.mxu0
  %v90 = vadd.f32 %v37, %v89
  %91 = vdwg.mxu0
  %v92 = vld [vmem:[%s3] sm:$0xf]
  %v93 = vld [vmem:[%s3 + $0x4] sm:$0xf]
  %v94 = vld [vmem:[%s3 + $0x8] sm:$0xf]
  %v95 = vld [vmem:[%s3 + $0xc] sm:$0xf]
  %v96 = vld [vmem:[%s1] sm:$0x3]
  %v101 = vunpack.c.l.b16 %v92
  %v102 = vunpack.c.l.b16 %v93
  %v103 = vunpack.c.l.b16 %v94
  %v104 = vunpack.c.l.b16 %v95
  %v105 = vpack.c.b16 %v102, %v101
  %v106 = vpack.c.b16 %v104, %v103
  %v110 = vsel %vm75, 0, 0
  %112 = vmatpush.bf16.msra.mxu0 0
  %113 = vmatpush.bf16.msra.mxu0 0
  %114 = vmatpush.bf16.msra.mxu0 0
  %115 = vmatpush.bf16.msra.mxu0 0
  %116 = vmatpush.bf16.msra.mxu0 0
  %117 = vmatpush.bf16.msra.mxu0 0
  %118 = vmatpush.bf16.msra.mxu0 %v106
  %119 = vmatpush.bf16.msra.mxu0 %v105
  %120 = vmatmul.bf16.gmra.mxu0 %v110
  %v121 = vpop.f32.mrf.mxu0
  %v122 = vadd.f32 0.0, %v121
  %v123 = vpop.f32.mrf.mxu0
  %124 = vdwg.mxu0
  %v125 = vadd.f32 %v88, %v122
  %v126 = vxor.u32 %v125, 2147483648
  %v127 = vmul.f32 %v126, 1.442695
  %v128 = vpow.pop %v127
  %v129 = vadd.f32 %v128, 1.0
  %v130 = vrcp.pop %v129
  %v131 = vmul.f32 %v129, %v130
  %v132 = vsub.f32 1.0, %v131
  %v133 = vmul.f32 %v130, %v132
  %v134 = vadd.f32 %v130, %v133
  %vm135 = vweird.f32 %v129
  %vm136 = vweird.f32 %v130
  %vm137 = vmor %vm135, %vm136
  %v138 = vsel %vm137, %v130, %v134
  %v139 = vand.u32 2147483647, %v129
  %vm140 = vcmp.eq.f32.partialorder %v139, 8.507059e+37
  %v141 = vand.u32 %v129, 2147483648
  %v142 = vor.u32 1.1754944e-38, %v141
  %v143 = vsel %vm140, %v142, %v138
  %v144 = vmul.f32 1.0, %v143
  %v145 = vtanh.pop %v125
  %v146 = vmul.f32 %v144, 0.0
  %148 = vrot.lane.b32.xlu0 %v145, 64
  %v149 = vpop.permute.xlu0 %148
  %v151 = vmul.f32 %v144, %v149
  %153 = vrot.lane.b32.xlu0 %v151, 32
  %v154 = vpop.permute.xlu0 %153
  %v156 = vadd.f32 %v146, %v154
  %v157 = vtanh.pop %v156
  %159 = vrot.lane.b32.xlu0 %v157, 64
  %v160 = vpop.permute.xlu0 %159
  %v162 = vmul.f32 %v144, %v160
  %vm163 = vcmp.gt.s32.totalorder %v96, 0
  %v164 = vsel %vm163, 1, 0
  %165 = vset.pattern.permute.xlu0 0
  %166 = vperm.xlu0 %165, %v164
  %v167 = vpop.permute.xlu0 %166
  %vm168 = vcmp.eq.s32.totalorder %v167, 1
  %v169 = vsel %vm168, %v162, 0.0
  %v170 = vsel %vm168, %v156, 0.0
  %v171 = vpack.c.bf16 %v169, %v169
  %173 = vrot.lane.b32.xlu0 %v171, 32
  %v174 = vpop.permute.xlu0 %173
  %v176 = vsel %vm75, %v174, 0
  %178 = vmatpush.bf16.msra.mxu0 0
  %179 = vmatpush.bf16.msra.mxu0 0
  %180 = vmatpush.bf16.msra.mxu0 0
  %181 = vmatpush.bf16.msra.mxu0 0
  %182 = vmatpush.bf16.msra.mxu0 0
  %183 = vmatpush.bf16.msra.mxu0 0
  %184 = vmatpush.bf16.msra.mxu0 %v106
  %185 = vmatpush.bf16.msra.mxu0 %v105
  %186 = vmatmul.bf16.gmra.mxu0 %v176
  %v187 = vpop.f32.mrf.mxu0
  %v188 = vadd.f32 0.0, %v187
  %v189 = vpop.f32.mrf.mxu0
  %190 = vdwg.mxu0
  %v192 = vrot.slane %v188, 6
  %v194 = vadd.f32 %v88, %v192
  %v195 = vxor.u32 %v194, 2147483648
  %v196 = vmul.f32 %v195, 1.442695
  %v197 = vpow.pop %v196
  %v198 = vadd.f32 %v197, 1.0
  %v199 = vrcp.pop %v198
  %v200 = vmul.f32 %v198, %v199
  %v201 = vsub.f32 1.0, %v200
  %v202 = vmul.f32 %v199, %v201
  %v203 = vadd.f32 %v199, %v202
  %vm204 = vweird.f32 %v198
  %vm205 = vweird.f32 %v199
  %vm206 = vmor %vm204, %vm205
  %v207 = vsel %vm206, %v199, %v203
  %v208 = vand.u32 2147483647, %v198
  %vm209 = vcmp.eq.f32.partialorder %v208, 8.507059e+37
  %v210 = vand.u32 %v198, 2147483648
  %v211 = vor.u32 1.1754944e-38, %v210
  %v212 = vsel %vm209, %v211, %v207
  %v213 = vmul.f32 1.0, %v212
  %v214 = vtanh.pop %v194
  %v216 = vrot.slane %v170, 6
  %v218 = vmul.f32 %v213, %v216
  %220 = vrot.lane.b32.xlu0 %v214, 64
  %v221 = vpop.permute.xlu0 %220
  %v223 = vmul.f32 %v213, %v221
  %225 = vrot.lane.b32.xlu0 %v223, 32
  %v226 = vpop.permute.xlu0 %225
  %v228 = vadd.f32 %v218, %v226
  %v229 = vtanh.pop %v228
  %231 = vrot.lane.b32.xlu0 %v229, 64
  %v232 = vpop.permute.xlu0 %231
  %v234 = vmul.f32 %v213, %v232
  %vm235 = vcmp.gt.s32.totalorder %v96, 1
  %v236 = vsel %vm235, 1, 0
  %237 = vset.pattern.permute.xlu0 0
  %238 = vperm.xlu0 %237, %v236
  %v239 = vpop.permute.xlu0 %238
  %vm240 = vcmp.eq.s32.totalorder %v239, 1
  %v242 = vrot.slane %v234, 2
  %243 = vrot.lane.b32.xlu0 %v242, 32
  %v244 = vpop.permute.xlu0 %243
  %247 = vrot.lane.b32.xlu0 %v169, 32
  %v248 = vpop.permute.xlu0 %247
  %v250 = vsel %vm240, %v244, %v248
  %v252 = vrot.slane %v228, 2
  %253 = vrot.lane.b32.xlu0 %v252, 96
  %v254 = vpop.permute.xlu0 %253
  %256 = vrot.lane.b32.xlu0 %v170, 96
  %v257 = vpop.permute.xlu0 %256
  %v259 = vsel %vm240, %v254, %v257
  %v260 = vsel %vm240, %v244, 0.0
  %v261 = vpack.c.bf16 %v250, %v250
  %v263 = vsel %vm75, %v261, 0
  %265 = vmatpush.bf16.msra.mxu0 0
  %266 = vmatpush.bf16.msra.mxu0 0
  %267 = vmatpush.bf16.msra.mxu0 0
  %268 = vmatpush.bf16.msra.mxu0 0
  %269 = vmatpush.bf16.msra.mxu0 0
  %270 = vmatpush.bf16.msra.mxu0 0
  %271 = vmatpush.bf16.msra.mxu0 %v106
  %272 = vmatpush.bf16.msra.mxu0 %v105
  %273 = vmatmul.bf16.gmra.mxu0 %v263
  %v274 = vpop.f32.mrf.mxu0
  %v275 = vadd.f32 0.0, %v274
  %v276 = vpop.f32.mrf.mxu0
  %277 = vdwg.mxu0
  %v279 = vrot.slane %v275, 4
  %v281 = vadd.f32 %v88, %v279
  %v282 = vxor.u32 %v281, 2147483648
  %v283 = vmul.f32 %v282, 1.442695
  %v284 = vpow.pop %v283
  %v285 = vadd.f32 %v284, 1.0
  %v286 = vrcp.pop %v285
  %v287 = vmul.f32 %v285, %v286
  %v288 = vsub.f32 1.0, %v287
  %v289 = vmul.f32 %v286, %v288
  %v290 = vadd.f32 %v286, %v289
  %vm291 = vweird.f32 %v285
  %vm292 = vweird.f32 %v286
  %vm293 = vmor %vm291, %vm292
  %v294 = vsel %vm293, %v286, %v290
  %v295 = vand.u32 2147483647, %v285
  %vm296 = vcmp.eq.f32.partialorder %v295, 8.507059e+37
  %v297 = vand.u32 %v285, 2147483648
  %v298 = vor.u32 1.1754944e-38, %v297
  %v299 = vsel %vm296, %v298, %v294
  %v300 = vmul.f32 1.0, %v299
  %v301 = vtanh.pop %v281
  %v303 = vrot.slane %v259, 4
  %304 = vrot.lane.b32.xlu0 %v303, 32
  %v305 = vpop.permute.xlu0 %304
  %v307 = vmul.f32 %v300, %v305
  %309 = vrot.lane.b32.xlu0 %v301, 64
  %v310 = vpop.permute.xlu0 %309
  %v312 = vmul.f32 %v300, %v310
  %314 = vrot.lane.b32.xlu0 %v312, 32
  %v315 = vpop.permute.xlu0 %314
  %v317 = vadd.f32 %v307, %v315
  %v318 = vtanh.pop %v317
  %320 = vrot.lane.b32.xlu0 %v318, 64
  %v321 = vpop.permute.xlu0 %320
  %v323 = vmul.f32 %v300, %v321
  %vm324 = vcmp.gt.s32.totalorder %v96, 2
  %v325 = vsel %vm324, 1, 0
  %326 = vset.pattern.permute.xlu0 0
  %327 = vperm.xlu0 %326, %v325
  %v328 = vpop.permute.xlu0 %327
  %vm329 = vcmp.eq.s32.totalorder %v328, 1
  %v331 = vrot.slane %v323, 4
  %332 = vrot.lane.b32.xlu0 %v331, 32
  %v333 = vpop.permute.xlu0 %332
  %v335 = vsel %vm329, %v333, %v250
  %v337 = vrot.slane %v317, 4
  %338 = vrot.lane.b32.xlu0 %v337, 96
  %v339 = vpop.permute.xlu0 %338
  %v341 = vsel %vm329, %v339, %v259
  %v342 = vsel %vm329, %v333, 0.0
  %v343 = vpack.c.bf16 %v335, %v335
  %v345 = vsel %vm75, %v343, 0
  %347 = vmatpush.bf16.msra.mxu0 0
  %348 = vmatpush.bf16.msra.mxu0 0
  %349 = vmatpush.bf16.msra.mxu0 0
  %350 = vmatpush.bf16.msra.mxu0 0
  %351 = vmatpush.bf16.msra.mxu0 0
  %352 = vmatpush.bf16.msra.mxu0 0
  %353 = vmatpush.bf16.msra.mxu0 %v106
  %354 = vmatpush.bf16.msra.mxu0 %v105
  %355 = vmatmul.bf16.gmra.mxu0 %v345
  %v356 = vpop.f32.mrf.mxu0
  %v357 = vadd.f32 0.0, %v356
  %v358 = vpop.f32.mrf.mxu0
  %359 = vdwg.mxu0
  %v361 = vrot.slane %v357, 2
  %v363 = vadd.f32 %v88, %v361
  %v364 = vxor.u32 %v363, 2147483648
  %v365 = vmul.f32 %v364, 1.442695
  %v366 = vpow.pop %v365
  %v367 = vadd.f32 %v366, 1.0
  %v368 = vrcp.pop %v367
  %v369 = vmul.f32 %v367, %v368
  %v370 = vsub.f32 1.0, %v369
  %v371 = vmul.f32 %v368, %v370
  %v372 = vadd.f32 %v368, %v371
  %vm373 = vweird.f32 %v367
  %vm374 = vweird.f32 %v368
  %vm375 = vmor %vm373, %vm374
  %v376 = vsel %vm375, %v368, %v372
  %v377 = vand.u32 2147483647, %v367
  %vm378 = vcmp.eq.f32.partialorder %v377, 8.507059e+37
  %v379 = vand.u32 %v367, 2147483648
  %v380 = vor.u32 1.1754944e-38, %v379
  %v381 = vsel %vm378, %v380, %v376
  %v382 = vmul.f32 1.0, %v381
  %v383 = vtanh.pop %v363
  %v385 = vrot.slane %v341, 2
  %386 = vrot.lane.b32.xlu0 %v385, 32
  %v387 = vpop.permute.xlu0 %386
  %v389 = vmul.f32 %v382, %v387
  %391 = vrot.lane.b32.xlu0 %v383, 64
  %v392 = vpop.permute.xlu0 %391
  %v394 = vmul.f32 %v382, %v392
  %396 = vrot.lane.b32.xlu0 %v394, 32
  %v397 = vpop.permute.xlu0 %396
  %v399 = vadd.f32 %v389, %v397
  %v400 = vtanh.pop %v399
  %402 = vrot.lane.b32.xlu0 %v400, 64
  %v403 = vpop.permute.xlu0 %402
  %v405 = vmul.f32 %v382, %v403
  %vm406 = vcmp.gt.s32.totalorder %v96, 3
  %v407 = vsel %vm406, 1, 0
  %408 = vset.pattern.permute.xlu0 0
  %409 = vperm.xlu0 %408, %v407
  %v410 = vpop.permute.xlu0 %409
  %vm411 = vcmp.eq.s32.totalorder %v410, 1
  %v413 = vrot.slane %v405, 6
  %414 = vrot.lane.b32.xlu0 %v413, 32
  %v415 = vpop.permute.xlu0 %414
  %v417 = vsel %vm411, %v415, %v335
  %v419 = vrot.slane %v399, 6
  %420 = vrot.lane.b32.xlu0 %v419, 96
  %v421 = vpop.permute.xlu0 %420
  %v423 = vsel %vm411, %v421, %v341
  %v424 = vsel %vm411, %v415, 0.0
  %v425 = vpack.c.bf16 %v417, %v417
  %v427 = vsel %vm75, %v425, 0
  %429 = vmatpush.bf16.msra.mxu0 0
  %430 = vmatpush.bf16.msra.mxu0 0
  %431 = vmatpush.bf16.msra.mxu0 0
  %432 = vmatpush.bf16.msra.mxu0 0
  %433 = vmatpush.bf16.msra.mxu0 0
  %434 = vmatpush.bf16.msra.mxu0 0
  %435 = vmatpush.bf16.msra.mxu0 %v106
  %436 = vmatpush.bf16.msra.mxu0 %v105
  %437 = vmatmul.bf16.gmra.mxu0 %v427
  %v438 = vpop.f32.mrf.mxu0
  %v439 = vadd.f32 0.0, %v438
  %v440 = vpop.f32.mrf.mxu0
  %441 = vdwg.mxu0
  %v442 = vadd.f32 %v90, %v439
  %v443 = vxor.u32 %v442, 2147483648
  %v444 = vmul.f32 %v443, 1.442695
  %v445 = vpow.pop %v444
  %v446 = vadd.f32 %v445, 1.0
  %v447 = vrcp.pop %v446
  %v448 = vmul.f32 %v446, %v447
  %v449 = vsub.f32 1.0, %v448
  %v450 = vmul.f32 %v447, %v449
  %v451 = vadd.f32 %v447, %v450
  %vm452 = vweird.f32 %v446
  %vm453 = vweird.f32 %v447
  %vm454 = vmor %vm452, %vm453
  %v455 = vsel %vm454, %v447, %v451
  %v456 = vand.u32 2147483647, %v446
  %vm457 = vcmp.eq.f32.partialorder %v456, 8.507059e+37
  %v458 = vand.u32 %v446, 2147483648
  %v459 = vor.u32 1.1754944e-38, %v458
  %v460 = vsel %vm457, %v459, %v455
  %v461 = vmul.f32 1.0, %v460
  %v462 = vtanh.pop %v442
  %464 = vrot.lane.b32.xlu0 %v423, 32
  %v465 = vpop.permute.xlu0 %464
  %v467 = vmul.f32 %v461, %v465
  %469 = vrot.lane.b32.xlu0 %v462, 64
  %v470 = vpop.permute.xlu0 %469
  %v472 = vmul.f32 %v461, %v470
  %474 = vrot.lane.b32.xlu0 %v472, 32
  %v475 = vpop.permute.xlu0 %474
  %v477 = vadd.f32 %v467, %v475
  %v478 = vtanh.pop %v477
  %480 = vrot.lane.b32.xlu0 %v478, 64
  %v481 = vpop.permute.xlu0 %480
  %v483 = vmul.f32 %v461, %v481
  %vm484 = vcmp.gt.s32.totalorder %v96, 4
  %v485 = vsel %vm484, 1, 0
  %486 = vset.pattern.permute.xlu0 0
  %487 = vperm.xlu0 %486, %v485
  %v488 = vpop.permute.xlu0 %487
  %vm489 = vcmp.eq.s32.totalorder %v488, 1
  %491 = vrot.lane.b32.xlu0 %v417, 96
  %v492 = vpop.permute.xlu0 %491
  %v494 = vsel %vm489, %v483, %v492
  %v495 = vsel %vm489, %v477, %v465
  %v496 = vsel %vm489, %v483, 0.0
  %v497 = vpack.c.bf16 %v494, %v494
  %499 = vrot.lane.b32.xlu0 %v497, 32
  %v500 = vpop.permute.xlu0 %499
  %v502 = vsel %vm75, %v500, 0
  %504 = vmatpush.bf16.msra.mxu0 0
  %505 = vmatpush.bf16.msra.mxu0 0
  %506 = vmatpush.bf16.msra.mxu0 0
  %507 = vmatpush.bf16.msra.mxu0 0
  %508 = vmatpush.bf16.msra.mxu0 0
  %509 = vmatpush.bf16.msra.mxu0 0
  %510 = vmatpush.bf16.msra.mxu0 %v106
  %511 = vmatpush.bf16.msra.mxu0 %v105
  %512 = vmatmul.bf16.gmra.mxu0 %v502
  %v513 = vpop.f32.mrf.mxu0
  %v514 = vadd.f32 0.0, %v513
  %v515 = vpop.f32.mrf.mxu0
  %516 = vdwg.mxu0
  %v518 = vrot.slane %v514, 6
  %v520 = vadd.f32 %v90, %v518
  %v521 = vxor.u32 %v520, 2147483648
  %v522 = vmul.f32 %v521, 1.442695
  %v523 = vpow.pop %v522
  %v524 = vadd.f32 %v523, 1.0
  %v525 = vrcp.pop %v524
  %v526 = vmul.f32 %v524, %v525
  %v527 = vsub.f32 1.0, %v526
  %v528 = vmul.f32 %v525, %v527
  %v529 = vadd.f32 %v525, %v528
  %vm530 = vweird.f32 %v524
  %vm531 = vweird.f32 %v525
  %vm532 = vmor %vm530, %vm531
  %v533 = vsel %vm532, %v525, %v529
  %v534 = vand.u32 2147483647, %v524
  %vm535 = vcmp.eq.f32.partialorder %v534, 8.507059e+37
  %v536 = vand.u32 %v524, 2147483648
  %v537 = vor.u32 1.1754944e-38, %v536
  %v538 = vsel %vm535, %v537, %v533
  %v539 = vmul.f32 1.0, %v538
  %v540 = vtanh.pop %v520
  %v542 = vrot.slane %v495, 6
  %v544 = vmul.f32 %v539, %v542
  %546 = vrot.lane.b32.xlu0 %v540, 64
  %v547 = vpop.permute.xlu0 %546
  %v549 = vmul.f32 %v539, %v547
  %551 = vrot.lane.b32.xlu0 %v549, 32
  %v552 = vpop.permute.xlu0 %551
  %v554 = vadd.f32 %v544, %v552
  %v555 = vtanh.pop %v554
  %557 = vrot.lane.b32.xlu0 %v555, 64
  %v558 = vpop.permute.xlu0 %557
  %v560 = vmul.f32 %v539, %v558
  %vm561 = vcmp.gt.s32.totalorder %v96, 5
  %v562 = vsel %vm561, 1, 0
  %563 = vset.pattern.permute.xlu0 0
  %564 = vperm.xlu0 %563, %v562
  %v565 = vpop.permute.xlu0 %564
  %vm566 = vcmp.eq.s32.totalorder %v565, 1
  %v568 = vrot.slane %v560, 2
  %569 = vrot.lane.b32.xlu0 %v568, 32
  %v570 = vpop.permute.xlu0 %569
  %573 = vrot.lane.b32.xlu0 %v494, 32
  %v574 = vpop.permute.xlu0 %573
  %v576 = vsel %vm566, %v570, %v574
  %v578 = vrot.slane %v554, 2
  %579 = vrot.lane.b32.xlu0 %v578, 96
  %v580 = vpop.permute.xlu0 %579
  %582 = vrot.lane.b32.xlu0 %v495, 96
  %v583 = vpop.permute.xlu0 %582
  %v585 = vsel %vm566, %v580, %v583
  %v586 = vsel %vm566, %v570, 0.0
  %v587 = vpack.c.bf16 %v576, %v576
  %v589 = vsel %vm75, %v587, 0
  %591 = vmatpush.bf16.msra.mxu0 0
  %592 = vmatpush.bf16.msra.mxu0 0
  %593 = vmatpush.bf16.msra.mxu0 0
  %594 = vmatpush.bf16.msra.mxu0 0
  %595 = vmatpush.bf16.msra.mxu0 0
  %596 = vmatpush.bf16.msra.mxu0 0
  %597 = vmatpush.bf16.msra.mxu0 %v106
  %598 = vmatpush.bf16.msra.mxu0 %v105
  %599 = vmatmul.bf16.gmra.mxu0 %v589
  %v600 = vpop.f32.mrf.mxu0
  %v601 = vadd.f32 0.0, %v600
  %v602 = vpop.f32.mrf.mxu0
  %603 = vdwg.mxu0
  %v605 = vrot.slane %v601, 4
  %v607 = vadd.f32 %v90, %v605
  %v608 = vxor.u32 %v607, 2147483648
  %v609 = vmul.f32 %v608, 1.442695
  %v610 = vpow.pop %v609
  %v611 = vadd.f32 %v610, 1.0
  %v612 = vrcp.pop %v611
  %v613 = vmul.f32 %v611, %v612
  %v614 = vsub.f32 1.0, %v613
  %v615 = vmul.f32 %v612, %v614
  %v616 = vadd.f32 %v612, %v615
  %vm617 = vweird.f32 %v611
  %vm618 = vweird.f32 %v612
  %vm619 = vmor %vm617, %vm618
  %v620 = vsel %vm619, %v612, %v616
  %v621 = vand.u32 2147483647, %v611
  %vm622 = vcmp.eq.f32.partialorder %v621, 8.507059e+37
  %v623 = vand.u32 %v611, 2147483648
  %v624 = vor.u32 1.1754944e-38, %v623
  %v625 = vsel %vm622, %v624, %v620
  %v626 = vmul.f32 1.0, %v625
  %v627 = vtanh.pop %v607
  %v629 = vrot.slane %v585, 4
  %630 = vrot.lane.b32.xlu0 %v629, 32
  %v631 = vpop.permute.xlu0 %630
  %v633 = vmul.f32 %v626, %v631
  %635 = vrot.lane.b32.xlu0 %v627, 64
  %v636 = vpop.permute.xlu0 %635
  %v638 = vmul.f32 %v626, %v636
  %640 = vrot.lane.b32.xlu0 %v638, 32
  %v641 = vpop.permute.xlu0 %640
  %v643 = vadd.f32 %v633, %v641
  %v644 = vtanh.pop %v643
  %646 = vrot.lane.b32.xlu0 %v644, 64
  %v647 = vpop.permute.xlu0 %646
  %v649 = vmul.f32 %v626, %v647
  %vm650 = vcmp.gt.s32.totalorder %v96, 6
  %v651 = vsel %vm650, 1, 0
  %652 = vset.pattern.permute.xlu0 0
  %653 = vperm.xlu0 %652, %v651
  %v654 = vpop.permute.xlu0 %653
  %vm655 = vcmp.eq.s32.totalorder %v654, 1
  %v657 = vrot.slane %v649, 4
  %658 = vrot.lane.b32.xlu0 %v657, 32
  %v659 = vpop.permute.xlu0 %658
  %v661 = vsel %vm655, %v659, %v576
  %v663 = vrot.slane %v643, 4
  %664 = vrot.lane.b32.xlu0 %v663, 96
  %v665 = vpop.permute.xlu0 %664
  %v667 = vsel %vm655, %v665, %v585
  %v668 = vsel %vm655, %v659, 0.0
  %v669 = vpack.c.bf16 %v661, %v661
  %v671 = vsel %vm75, %v669, 0
  %673 = vmatpush.bf16.msra.mxu0 0
  %674 = vmatpush.bf16.msra.mxu0 0
  %675 = vmatpush.bf16.msra.mxu0 0
  %676 = vmatpush.bf16.msra.mxu0 0
  %677 = vmatpush.bf16.msra.mxu0 0
  %678 = vmatpush.bf16.msra.mxu0 0
  %679 = vmatpush.bf16.msra.mxu0 %v106
  %680 = vmatpush.bf16.msra.mxu0 %v105
  %681 = vmatmul.bf16.gmra.mxu0 %v671
  %v682 = vpop.f32.mrf.mxu0
  %v683 = vadd.f32 0.0, %v682
  %v684 = vpop.f32.mrf.mxu0
  %685 = vdwg.mxu0
  %v687 = vrot.slane %v683, 2
  %v689 = vadd.f32 %v90, %v687
  %v690 = vxor.u32 %v689, 2147483648
  %v691 = vmul.f32 %v690, 1.442695
  %v692 = vpow.pop %v691
  %v693 = vadd.f32 %v692, 1.0
  %v694 = vrcp.pop %v693
  %v695 = vmul.f32 %v693, %v694
  %v696 = vsub.f32 1.0, %v695
  %v697 = vmul.f32 %v694, %v696
  %v698 = vadd.f32 %v694, %v697
  %vm699 = vweird.f32 %v693
  %vm700 = vweird.f32 %v694
  %vm701 = vmor %vm699, %vm700
  %v702 = vsel %vm701, %v694, %v698
  %v703 = vand.u32 2147483647, %v693
  %vm704 = vcmp.eq.f32.partialorder %v703, 8.507059e+37
  %v705 = vand.u32 %v693, 2147483648
  %v706 = vor.u32 1.1754944e-38, %v705
  %v707 = vsel %vm704, %v706, %v702
  %v708 = vmul.f32 1.0, %v707
  %v709 = vtanh.pop %v689
  %v711 = vrot.slane %v667, 2
  %712 = vrot.lane.b32.xlu0 %v711, 32
  %v713 = vpop.permute.xlu0 %712
  %v715 = vmul.f32 %v708, %v713
  %717 = vrot.lane.b32.xlu0 %v709, 64
  %v718 = vpop.permute.xlu0 %717
  %v720 = vmul.f32 %v708, %v718
  %722 = vrot.lane.b32.xlu0 %v720, 32
  %v723 = vpop.permute.xlu0 %722
  %v725 = vadd.f32 %v715, %v723
  %v726 = vtanh.pop %v725
  %728 = vrot.lane.b32.xlu0 %v726, 64
  %v729 = vpop.permute.xlu0 %728
  %v731 = vmul.f32 %v708, %v729
  %vm732 = vcmp.gt.s32.totalorder %v96, 7
  %v733 = vsel %vm732, 1, 0
  %734 = vset.pattern.permute.xlu0 0
  %735 = vperm.xlu0 %734, %v733
  %v736 = vpop.permute.xlu0 %735
  %vm737 = vcmp.eq.s32.totalorder %v736, 1
  %v739 = vrot.slane %v731, 6
  %740 = vrot.lane.b32.xlu0 %v739, 32
  %v741 = vpop.permute.xlu0 %740
  %v743 = vsel %vm737, %v741, %v661
  %v744 = vsel %vm737, %v741, 0.0
  %746 = vrot.lane.b32.xlu0 %v260, 32
  %v747 = vpop.permute.xlu0 %746
  %750 = vrot.lane.b32.xlu0 %v342, 64
  %v751 = vpop.permute.xlu0 %750
  %754 = vrot.lane.b32.xlu0 %v424, 96
  %v755 = vpop.permute.xlu0 %754
  %758 = vrot.lane.b32.xlu0 %v496, 32
  %v759 = vpop.permute.xlu0 %758
  %762 = vrot.lane.b32.xlu0 %v586, 32
  %v763 = vpop.permute.xlu0 %762
  %766 = vrot.lane.b32.xlu0 %v668, 64
  %v767 = vpop.permute.xlu0 %766
  %770 = vrot.lane.b32.xlu0 %v744, 96
  %v771 = vpop.permute.xlu0 %770
  %v773 = vsel %vm75, %v248, %v747
  %vm774 = vcmask 523264
  %v775 = vsel %vm774, %v773, %v751
  %vm776 = vcmask 785408
  %v777 = vsel %vm776, %v775, %v755
  %v778 = vsel %vm75, %v759, %v763
  %v779 = vsel %vm774, %v778, %v767
  %v780 = vsel %vm776, %v779, %v771
  %v783 = vrot.slane %v780, 6
  %vm784 = vcmask 1041408
  %v785 = vsel %vm784, %v777, %v783
  %787 = vst [vmem:[%s5] sm:$0xf] %v785
  %vm788 = vcmask 254976
  %789 = vst.msk [vmem:[%s6] sm:$0x3] %vm788, %v743
  // Predicated region
  $region22: #{coatt_encoder_forward.3} parent=0 // pred_check
    _
  $region23: #{coatt_encoder_forward.3} parent=0 // pred_check_branch
    %791 = sbr.rel (0) target = $region25
  $region24: #{coatt_encoder_forward.3} parent=0 // pred_region
    _
  $region25: #{coatt_encoder_forward.3} parent=0 // pred_fallthru
    _
  // Predicated region
  $region26: #{coatt_encoder_forward.3} parent=0 // pred_check
    _
  $region27: #{coatt_encoder_forward.3} parent=0 // pred_check_branch
    %793 = sbr.rel (0) target = $region29
  $region28: #{coatt_encoder_forward.3} parent=0 // pred_region
    _
  $region29: #{coatt_encoder_forward.3} parent=0 // pred_fallthru
    _
  // Predicated region
  $region30: #{coatt_encoder_forward.3} parent=0 // pred_check
    _
  $region31: #{coatt_encoder_forward.3} parent=0 // pred_check_branch
    %795 = sbr.rel (0) target = $region33
  $region32: #{coatt_encoder_forward.3} parent=0 // pred_region
    _
  $region33: #{coatt_encoder_forward.3} parent=0 // pred_fallthru
    _
  // Predicated region
  $region34: #{coatt_encoder_forward.3} parent=0 // pred_check
    _
  $region35: #{coatt_encoder_forward.3} parent=0 // pred_check_branch
    %797 = sbr.rel (0) target = $region37
  $region36: #{coatt_encoder_forward.3} parent=0 // pred_region
    _
  $region37: #{coatt_encoder_forward.3} parent=0 // pred_fallthru
    _

// kernel: coatt_encoder_forward.5
$region0: #{coatt_encoder_forward.5}
  #allocation0 [shape = 'u32[]', space=smem, size = 0x4, offset = 0x4, fixed_abs, tag = 'smem constant byte address 0x4 - core index']
  #allocation1 [shape = 'u32[72,128]{1,0:T(1,128)}', space=vmem, size = 0x9000, scoped, tag = 'internal scratch']
  %s0 = inlined_call_operand.vmem [shape: f32[2,32], index: 0, kind: input, shape index: {}]
  %s1 = inlined_call_operand.vmem [shape: f32[2,8,32], index: 1, kind: input, shape index: {}]
  %s2 = inlined_call_operand.vmem [shape: s32[2,1], index: 2, kind: input, shape index: {}]
  %s3 = inlined_call_operand.vmem [shape: f32[2,2,32], index: 3, kind: input, shape index: {}]
  %s4 = inlined_call_operand.vmem [shape: f32[2,16,64], index: 4, kind: input, shape index: {}]
  %s5 = inlined_call_operand.vmem [shape: bf16[32,64], index: 5, kind: input, shape index: {}]
  %s6 = inlined_call_operand.vmem [shape: bf16[64,64], index: 6, kind: input, shape index: {}]
  %s7 = inlined_call_operand.vmem [shape: f32[1,32], index: 7, kind: input, shape index: {}]
  %s8 = inlined_call_operand.vmem [shape: bf16[64,64], index: 8, kind: input, shape index: {}]
  %s9 = inlined_call_operand.vmem [shape: bf16[32,32], index: 9, kind: input, shape index: {}]
  %s10 = inlined_call_operand.vmem [shape: f32[1,32], index: 10, kind: input, shape index: {}]
  %s11 = inlined_call_operand.vmem [shape: bf16[32,32], index: 11, kind: input, shape index: {}]
  %s12 = inlined_call_operand.vmem [shape: bf16[32,96], index: 12, kind: input, shape index: {}]
  %s13 = inlined_call_operand.vmem [shape: f32[1,32], index: 13, kind: input, shape index: {}]
  %s14 = inlined_call_operand.vmem [shape: bf16[32,64], index: 14, kind: input, shape index: {}]
  %s15 = inlined_call_operand.vmem [shape: f32[1,32], index: 15, kind: input, shape index: {}]
  %s16 = inlined_call_operand.vmem [shape: bf16[64,32], index: 16, kind: input, shape index: {}]
  %s17 = inlined_call_operand.hbm [shape: f32[2,32], index: 17, kind: output, shape index: {}]
  %s18 = sld [smem:[#allocation0]]
  $region78: #{coatt_encoder_forward.5} parent=0
    _
  %s20 = ssub.s32 1, %s18
  %s21 = scalar_select 0, %s20, %s18
  $region1: #{coatt_encoder_forward.5} parent=0
    #allocation2 [shape = 'u8[1024]{0}', space=vmem, size = 0x400, scoped, tag = 'output window, operand 0, single buffered']
    #allocation3 [shape = 's32[1]{0}', space=sflag, size = 0x4, scoped, tag = 'scoped memory for coatt_encoder_forward.5']
    %22 = vsyncpa [#allocation3], 0
    // Predicated region
    $region2: #{coatt_encoder_forward.5} parent=1 // pred_check
      _
    $region3: #{coatt_encoder_forward.5} parent=1 // pred_check_branch
      %24 = sbr.rel (0) target = $region5
    $region4: #{coatt_encoder_forward.5} parent=1 // pred_region
      _
    $region5: #{coatt_encoder_forward.5} parent=1 // pred_fallthru
      _
    // Predicated region
    $region6: #{coatt_encoder_forward.5} parent=1 // pred_check
      _
    $region7: #{coatt_encoder_forward.5} parent=1 // pred_check_branch
      %26 = sbr.rel (0) target = $region9
    $region8: #{coatt_encoder_forward.5} parent=1 // pred_region
      _
    $region9: #{coatt_encoder_forward.5} parent=1 // pred_fallthru
      _
    // Predicated region
    $region10: #{coatt_encoder_forward.5} parent=1 // pred_check
      _
    $region11: #{coatt_encoder_forward.5} parent=1 // pred_check_branch
      %28 = sbr.rel (0) target = $region13
    $region12: #{coatt_encoder_forward.5} parent=1 // pred_region
      _
    $region13: #{coatt_encoder_forward.5} parent=1 // pred_fallthru
      _
    // Predicated region
    $region14: #{coatt_encoder_forward.5} parent=1 // pred_check
      _
    $region15: #{coatt_encoder_forward.5} parent=1 // pred_check_branch
      %30 = sbr.rel (0) target = $region17
    $region16: #{coatt_encoder_forward.5} parent=1 // pred_region
      _
    $region17: #{coatt_encoder_forward.5} parent=1 // pred_fallthru
      _
    // Predicated region
    $region18: #{coatt_encoder_forward.5} parent=1 // pred_check
      _
    $region19: #{coatt_encoder_forward.5} parent=1 // pred_check_branch
      %32 = sbr.rel (0) target = $region21
    $region20: #{coatt_encoder_forward.5} parent=1 // pred_region
      _
    $region21: #{coatt_encoder_forward.5} parent=1 // pred_fallthru
      _
    // Predicated region
    $region22: #{coatt_encoder_forward.5} parent=1 // pred_check
      _
    $region23: #{coatt_encoder_forward.5} parent=1 // pred_check_branch
      %34 = sbr.rel (0) target = $region25
    $region24: #{coatt_encoder_forward.5} parent=1 // pred_region
      _
    $region25: #{coatt_encoder_forward.5} parent=1 // pred_fallthru
      _
    // Predicated region
    $region26: #{coatt_encoder_forward.5} parent=1 // pred_check
      _
    $region27: #{coatt_encoder_forward.5} parent=1 // pred_check_branch
      %36 = sbr.rel (0) target = $region29
    $region28: #{coatt_encoder_forward.5} parent=1 // pred_region
      _
    $region29: #{coatt_encoder_forward.5} parent=1 // pred_fallthru
      _
    // Predicated region
    $region30: #{coatt_encoder_forward.5} parent=1 // pred_check
      _
    $region31: #{coatt_encoder_forward.5} parent=1 // pred_check_branch
      %38 = sbr.rel (0) target = $region33
    $region32: #{coatt_encoder_forward.5} parent=1 // pred_region
      _
    $region33: #{coatt_encoder_forward.5} parent=1 // pred_fallthru
      _
    // Predicated region
    $region34: #{coatt_encoder_forward.5} parent=1 // pred_check
      _
    $region35: #{coatt_encoder_forward.5} parent=1 // pred_check_branch
      %40 = sbr.rel (0) target = $region37
    $region36: #{coatt_encoder_forward.5} parent=1 // pred_region
      _
    $region37: #{coatt_encoder_forward.5} parent=1 // pred_fallthru
      _
    // Predicated region
    $region38: #{coatt_encoder_forward.5} parent=1 // pred_check
      _
    $region39: #{coatt_encoder_forward.5} parent=1 // pred_check_branch
      %42 = sbr.rel (0) target = $region41
    $region40: #{coatt_encoder_forward.5} parent=1 // pred_region
      _
    $region41: #{coatt_encoder_forward.5} parent=1 // pred_fallthru
      _
    // Predicated region
    $region42: #{coatt_encoder_forward.5} parent=1 // pred_check
      _
    $region43: #{coatt_encoder_forward.5} parent=1 // pred_check_branch
      %44 = sbr.rel (0) target = $region45
    $region44: #{coatt_encoder_forward.5} parent=1 // pred_region
      _
    $region45: #{coatt_encoder_forward.5} parent=1 // pred_fallthru
      _
    // Predicated region
    $region46: #{coatt_encoder_forward.5} parent=1 // pred_check
      _
    $region47: #{coatt_encoder_forward.5} parent=1 // pred_check_branch
      %46 = sbr.rel (0) target = $region49
    $region48: #{coatt_encoder_forward.5} parent=1 // pred_region
      _
    $region49: #{coatt_encoder_forward.5} parent=1 // pred_fallthru
      _
    // Predicated region
    $region50: #{coatt_encoder_forward.5} parent=1 // pred_check
      _
    $region51: #{coatt_encoder_forward.5} parent=1 // pred_check_branch
      %48 = sbr.rel (0) target = $region53
    $region52: #{coatt_encoder_forward.5} parent=1 // pred_region
      _
    $region53: #{coatt_encoder_forward.5} parent=1 // pred_fallthru
      _
    // Predicated region
    $region54: #{coatt_encoder_forward.5} parent=1 // pred_check
      _
    $region55: #{coatt_encoder_forward.5} parent=1 // pred_check_branch
      %50 = sbr.rel (0) target = $region57
    $region56: #{coatt_encoder_forward.5} parent=1 // pred_region
      _
    $region57: #{coatt_encoder_forward.5} parent=1 // pred_fallthru
      _
    // Predicated region
    $region58: #{coatt_encoder_forward.5} parent=1 // pred_check
      _
    $region59: #{coatt_encoder_forward.5} parent=1 // pred_check_branch
      %52 = sbr.rel (0) target = $region61
    $region60: #{coatt_encoder_forward.5} parent=1 // pred_region
      _
    $region61: #{coatt_encoder_forward.5} parent=1 // pred_fallthru
      _
    // Predicated region
    $region62: #{coatt_encoder_forward.5} parent=1 // pred_check
      _
    $region63: #{coatt_encoder_forward.5} parent=1 // pred_check_branch
      %54 = sbr.rel (0) target = $region65
    $region64: #{coatt_encoder_forward.5} parent=1 // pred_region
      _
    $region65: #{coatt_encoder_forward.5} parent=1 // pred_fallthru
      _
    // Predicated region
    $region66: #{coatt_encoder_forward.5} parent=1 // pred_check
      _
    $region67: #{coatt_encoder_forward.5} parent=1 // pred_check_branch
      %56 = sbr.rel (0) target = $region69
    $region68: #{coatt_encoder_forward.5} parent=1 // pred_region
      _
    $region69: #{coatt_encoder_forward.5} parent=1 // pred_fallthru
      _
    %v58 = vld [vmem:[%s0] sm:$0x3]
    %v59 = vld [vmem:[%s1] sm:$0xff]
    %v60 = vld [vmem:[%s1 + $0x8] sm:$0xff]
    %v61 = vld [vmem:[%s3] sm:$0x3]
    %v62 = vld [vmem:[%s3 + $0x2] sm:$0x3]
    %v63 = vld [vmem:[%s4] sm:$0xff]
    %v64 = vld [vmem:[%s4 + $0x8] sm:$0xff]
    %v65 = vld [vmem:[%s4 + $0x10] sm:$0xff]
    %v66 = vld [vmem:[%s4 + $0x18] sm:$0xff]
    %v67 = vld [vmem:[%s5] sm:$0xf]
    %v68 = vld [vmem:[%s5 + $0x4] sm:$0xf]
    %v69 = vld [vmem:[%s5 + $0x8] sm:$0xf]
    %v70 = vld [vmem:[%s5 + $0xc] sm:$0xf]
    %v71 = vpack.c.bf16 %v58, %v58
    %v76 = vunpack.c.l.b16 %v67
    %v77 = vunpack.c.l.b16 %v68
    %v78 = vunpack.c.l.b16 %v69
    %v79 = vunpack.c.l.b16 %v70
    %v80 = vpack.c.b16 %v77, %v76
    %v81 = vpack.c.b16 %v79, %v78
    %vm84 = vcmask 261120
    %v86 = vsel %vm84, %v71, 0
    %88 = vmatpush.bf16.msra.mxu0 0
    %89 = vmatpush.bf16.msra.mxu0 0
    %90 = vmatpush.bf16.msra.mxu0 0
    %91 = vmatpush.bf16.msra.mxu0 0
    %92 = vmatpush.bf16.msra.mxu0 0
    %93 = vmatpush.bf16.msra.mxu0 0
    %94 = vmatpush.bf16.msra.mxu0 %v81
    %95 = vmatpush.bf16.msra.mxu0 %v80
    %96 = vmatmul.bf16.gmra.mxu0 %v86
    %v97 = vpop.f32.mrf.mxu0
    %v98 = vadd.f32 0.0, %v97
    %v99 = vpop.f32.mrf.mxu0
    %100 = vdwg.mxu0
    %v101 = vld [vmem:[%s6] sm:$0xf]
    %v102 = vld [vmem:[%s6 + $0x4] sm:$0xf]
    %v103 = vld [vmem:[%s6 + $0x8] sm:$0xf]
    %v104 = vld [vmem:[%s6 + $0xc] sm:$0xf]
    %v105 = vld [vmem:[%s6 + $0x10] sm:$0xf]
    %v106 = vld [vmem:[%s6 + $0x14] sm:$0xf]
    %v107 = vld [vmem:[%s6 + $0x18] sm:$0xf]
    %v108 = vld [vmem:[%s6 + $0x1c] sm:$0xf]
    %v109 = vpack.c.bf16 %v64, %v63
    %v110 = vpack.c.bf16 %v66, %v65
    %v119 = vunpack.c.l.b16 %v101
    %v120 = vunpack.c.l.b16 %v102
    %v121 = vunpack.c.l.b16 %v103
    %v122 = vunpack.c.l.b16 %v104
    %v123 = vunpack.c.l.b16 %v105
    %v124 = vunpack.c.l.b16 %v106
    %v125 = vunpack.c.l.b16 %v107
    %v126 = vunpack.c.l.b16 %v108
    %v127 = vpack.c.b16 %v120, %v119
    %v128 = vpack.c.b16 %v122, %v121
    %v129 = vpack.c.b16 %v124, %v123
    %v130 = vpack.c.b16 %v126, %v125
    %vm135 = vcmask 523264
    %v137 = vsel %vm135, %v109, 0
    %v140 = vsel %vm135, %v110, 0
    %142 = vmatpush.bf16.msra.mxu0 0
    %143 = vmatpush.bf16.msra.mxu0 0
    %144 = vmatpush.bf16.msra.mxu0 0
    %145 = vmatpush.bf16.msra.mxu0 0
    %146 = vmatpush.bf16.msra.mxu0 %v130
    %147 = vmatpush.bf16.msra.mxu0 %v129
    %148 = vmatpush.bf16.msra.mxu0 %v128
    %149 = vmatpush.bf16.msra.mxu0 %v127
    %150 = vmatmul.bf16.gmra.mxu0 %v137
    %v151 = vpop.f32.mrf.mxu0
    %v152 = vadd.f32 0.0, %v151
    %v153 = vpop.f32.mrf.mxu0
    %v154 = vadd.f32 0.0, %v153
    %155 = vmatmul.bf16.gmra.mxu0 %v140
    %v156 = vpop.f32.mrf.mxu0
    %v157 = vadd.f32 0.0, %v156
    %v158 = vpop.f32.mrf.mxu0
    %v159 = vadd.f32 0.0, %v158
    %160 = vdwg.mxu0
    %v162 = vrot.slane %v98, 1
    %v163 = vperm.slane %v98, 0
    %v164 = vperm.slane %v162, 0
    %v167 = vadd.f32 %v152, %v163
    %v168 = vadd.f32 %v154, %v163
    %v169 = vadd.f32 %v157, %v164
    %v170 = vadd.f32 %v159, %v164
    %v171 = vtanh.pop %v167
    %v172 = vtanh.pop %v168
    %v173 = vtanh.pop %v169
    %v174 = vtanh.pop %v170
    %v175 = vld [vmem:[%s7] sm:$0x1]
    %v177 = vperm.slane %v175, 0
    %v179 = vmul.f32 %v171, %v177
    %v180 = vmul.f32 %v172, %v177
    %v181 = vmul.f32 %v173, %v177
    %v182 = vmul.f32 %v174, %v177
    %v183 = vsel %vm84, %v179, 0.0
    %184 = vadd.xlane.f32.xlu0 %v183
    %v185 = vpop.xlane.xlu0 %184
    %v186 = vsel %vm84, %v180, 0.0
    %187 = vadd.xlane.f32.xlu0 %v186
    %v188 = vpop.xlane.xlu0 %187
    %v189 = vsel %vm84, %v181, 0.0
    %190 = vadd.xlane.f32.xlu0 %v189
    %v191 = vpop.xlane.xlu0 %190
    %v192 = vsel %vm84, %v182, 0.0
    %193 = vadd.xlane.f32.xlu0 %v192
    %v194 = vpop.xlane.xlu0 %193
    %v199 = vlaneseq
    %v200 = vand.u32 %v199, 127
    %v201 = vperm.slane %v185, %v200
    %v202 = vadd.s32 %v200, 4294967288
    %v203 = vperm.slane %v188, %v202
    %vm204 = vcmask 130112
    %v205 = vsel %vm204, %v203, %v201
    %v206 = vperm.slane %v191, %v200
    %v207 = vperm.slane %v194, %v202
    %v208 = vsel %vm204, %v207, %v206
    %vm209 = vcmask 1041409
    %v210 = vsel %vm209, %v208, %v205
    %vm212 = vcmask 123904
    %v213 = vsel %vm212, %v210, -inf
    %214 = vmax.xlane.f32.xlu0 %v213
    %v215 = vpop.xlane.xlu0 %214
    %v217 = vperm.slane %v215, 0
    %v218 = vperm.slane %v215, 1
    %v221 = vsub.f32 %v185, %v217
    %v222 = vsub.f32 %v188, %v217
    %v223 = vsub.f32 %v191, %v218
    %v224 = vsub.f32 %v194, %v218
    %v225 = vmul.f32 %v221, 1.442695
    %v226 = vpow.pop %v225
    %v227 = vmul.f32 %v222, 1.442695
    %v228 = vpow.pop %v227
    %v229 = vmul.f32 %v223, 1.442695
    %v230 = vpow.pop %v229
    %v231 = vmul.f32 %v224, 1.442695
    %v232 = vpow.pop %v231
    %237 = vset.pattern.permute.xlu0 0
    %238 = vperm.xlu0 %237, %v226
    %v239 = vpop.permute.xlu0 %238
    %240 = vset.pattern.permute.xlu0 0
    %241 = vperm.xlu0 %240, %v228
    %v242 = vpop.permute.xlu0 %241
    %243 = vset.pattern.permute.xlu0 0
    %244 = vperm.xlu0 %243, %v230
    %v245 = vpop.permute.xlu0 %244
    %246 = vset.pattern.permute.xlu0 0
    %247 = vperm.xlu0 %246, %v232
    %v248 = vpop.permute.xlu0 %247
    %v249 = vperm.slane %v239, %v200
    %v250 = vperm.slane %v242, %v202
    %v251 = vsel %vm204, %v250, %v249
    %v252 = vperm.slane %v245, %v200
    %v253 = vperm.slane %v248, %v202
    %v254 = vsel %vm204, %v253, %v252
    %v255 = vsel %vm209, %v254, %v251
    %v257 = vsel %vm212, %v255, 0.0
    %258 = vadd.xlane.f32.xlu0 %v257
    %v259 = vpop.xlane.xlu0 %258
    %v261 = vperm.slane %v259, 0
    %v262 = vperm.slane %v259, 1
    %v265 = vrcp.pop %v261
    %v266 = vmul.f32 %v261, %v265
    %v267 = vsub.f32 1.0, %v266
    %v268 = vmul.f32 %v265, %v267
    %v269 = vadd.f32 %v265, %v268
    %vm270 = vweird.f32 %v261
    %vm271 = vweird.f32 %v265
    %vm272 = vmor %vm270, %vm271
    %v273 = vsel %vm272, %v265, %v269
    %v274 = vand.u32 2147483647, %v261
    %vm275 = vcmp.eq.f32.partialorder %v274, 8.507059e+37
    %v276 = vand.u32 %v261, 2147483648
    %v277 = vor.u32 1.1754944e-38, %v276
    %v278 = vsel %vm275, %v277, %v273
    %v279 = vmul.f32 %v226, %v278
    %v280 = vmul.f32 %v228, %v278
    %v281 = vrcp.pop %v262
    %v282 = vmul.f32 %v262, %v281
    %v283 = vsub.f32 1.0, %v282
    %v284 = vmul.f32 %v281, %v283
    %v285 = vadd.f32 %v281, %v284
    %vm286 = vweird.f32 %v262
    %vm287 = vweird.f32 %v281
    %vm288 = vmor %vm286, %vm287
    %v289 = vsel %vm288, %v281, %v285
    %v290 = vand.u32 2147483647, %v262
    %vm291 = vcmp.eq.f32.partialorder %v290, 8.507059e+37
    %v292 = vand.u32 %v262, 2147483648
    %v293 = vor.u32 1.1754944e-38, %v292
    %v294 = vsel %vm291, %v293, %v289
    %v295 = vmul.f32 %v230, %v294
    %v296 = vmul.f32 %v232, %v294
    %298 = vset.pattern.permute.xlu0 0
    %299 = vperm.xlu0 %298, %v279
    %v300 = vpop.permute.xlu0 %299
    %303 = vset.pattern.permute.xlu0 0
    %304 = vperm.xlu0 %303, %v280
    %v305 = vpop.permute.xlu0 %304
    %308 = vset.pattern.permute.xlu0 0
    %309 = vperm.xlu0 %308, %v295
    %v310 = vpop.permute.xlu0 %309
    %313 = vset.pattern.permute.xlu0 0
    %314 = vperm.xlu0 %313, %v296
    %v315 = vpop.permute.xlu0 %314
    %v317 = vmul.f32 %v300, %v63
    %v318 = vmul.f32 %v305, %v64
    %v319 = vmul.f32 %v310, %v65
    %v320 = vmul.f32 %v315, %v66
    %v321 = vsel %vm135, %v317, 0.0
    %v322 = vsel %vm135, %v318, 0.0
    %v323 = vadd.f32 %v321, %v322
    %v324 = vrot.slane %v323, 4
    %v325 = vadd.f32 %v323, %v324
    %v326 = vrot.slane %v325, 2
    %v327 = vadd.f32 %v325, %v326
    %v328 = vrot.slane %v327, 1
    %v329 = vadd.f32 %v327, %v328
    %v330 = vsel %vm135, %v319, 0.0
    %v331 = vsel %vm135, %v320, 0.0
    %v332 = vadd.f32 %v330, %v331
    %v333 = vrot.slane %v332, 4
    %v334 = vadd.f32 %v332, %v333
    %v335 = vrot.slane %v334, 2
    %v336 = vadd.f32 %v334, %v335
    %v337 = vrot.slane %v336, 1
    %v338 = vadd.f32 %v336, %v337
    %v339 = vld [vmem:[%s8] sm:$0xf]
    %v340 = vld [vmem:[%s8 + $0x4] sm:$0xf]
    %v341 = vld [vmem:[%s8 + $0x8] sm:$0xf]
    %v342 = vld [vmem:[%s8 + $0xc] sm:$0xf]
    %v343 = vld [vmem:[%s8 + $0x10] sm:$0xf]
    %v344 = vld [vmem:[%s8 + $0x14] sm:$0xf]
    %v345 = vld [vmem:[%s8 + $0x18] sm:$0xf]
    %v346 = vld [vmem:[%s8 + $0x1c] sm:$0xf]
    %v347 = vpack.c.bf16 %v329, %v329
    %v348 = vpack.c.bf16 %v338, %v338
    %v351 = vunpack.c.l.b16 %v347
    %v352 = vunpack.c.l.b16 %v348
    %v353 = vsel %vm209, %v352, %v351
    %v354 = vpack.c.b16 %v353, %v353
    %v363 = vunpack.c.l.b16 %v339
    %v364 = vunpack.c.l.b16 %v340
    %v365 = vunpack.c.l.b16 %v341
    %v366 = vunpack.c.l.b16 %v342
    %v367 = vunpack.c.l.b16 %v343
    %v368 = vunpack.c.l.b16 %v344
    %v369 = vunpack.c.l.b16 %v345
    %v370 = vunpack.c.l.b16 %v346
    %v371 = vpack.c.b16 %v364, %v363
    %v372 = vpack.c.b16 %v366, %v365
    %v373 = vpack.c.b16 %v368, %v367
    %v374 = vpack.c.b16 %v370, %v369
    %v380 = vsel %vm135, %v354, 0
    %382 = vmatpush.bf16.msra.mxu0 0
    %383 = vmatpush.bf16.msra.mxu0 0
    %384 = vmatpush.bf16.msra.mxu0 0
    %385 = vmatpush.bf16.msra.mxu0 0
    %386 = vmatpush.bf16.msra.mxu0 %v374
    %387 = vmatpush.bf16.msra.mxu0 %v373
    %388 = vmatpush.bf16.msra.mxu0 %v372
    %389 = vmatpush.bf16.msra.mxu0 %v371
    %390 = vmatmul.bf16.gmra.mxu0 %v380
    %v391 = vpop.f32.mrf.mxu0
    %v392 = vadd.f32 0.0, %v391
    %v393 = vpop.f32.mrf.mxu0
    %394 = vdwg.mxu0
    %v395 = vld [vmem:[%s9] sm:$0xf]
    %v396 = vld [vmem:[%s9 + $0x4] sm:$0xf]
    %v397 = vld [vmem:[%s9 + $0x8] sm:$0xf]
    %v398 = vld [vmem:[%s9 + $0xc] sm:$0xf]
    %401 = vst [vmem:[#allocation1] ss:$4 sm:$0xff] %v61
    %s402 = scalar_lea.vmem [#allocation1], 1
    %403 = vst [vmem:[%s402] ss:$4 sm:$0xff] %v62
    %v404 = vld.sshfl [vmem:[#allocation1] sm:$0xff pattern:$0x73625140]
    %v406 = vpack.c.bf16 %v404, %v404
    %v411 = vunpack.c.l.b16 %v395
    %v412 = vunpack.c.l.b16 %v396
    %v413 = vunpack.c.l.b16 %v397
    %v414 = vunpack.c.l.b16 %v398
    %v415 = vpack.c.b16 %v412, %v411
    %v416 = vpack.c.b16 %v414, %v413
    %v420 = vsel %vm84, %v406, 0
    %422 = vmatpush.bf16.msra.mxu0 0
    %423 = vmatpush.bf16.msra.mxu0 0
    %424 = vmatpush.bf16.msra.mxu0 0
    %425 = vmatpush.bf16.msra.mxu0 0
    %426 = vmatpush.bf16.msra.mxu0 0
    %427 = vmatpush.bf16.msra.mxu0 0
    %428 = vmatpush.bf16.msra.mxu0 %v416
    %429 = vmatpush.bf16.msra.mxu0 %v415
    %430 = vmatmul.bf16.gmra.mxu0 %v420
    %v431 = vpop.f32.mrf.mxu0
    %v432 = vadd.f32 0.0, %v431
    %v433 = vpop.f32.mrf.mxu0
    %434 = vdwg.mxu0
    %v436 = vrot.slane %v432, 2
    %438 = vrot.lane.b32.xlu0 %v163, 96
    %v439 = vpop.permute.xlu0 %438
    %440 = vrot.lane.b32.xlu0 %v164, 96
    %v441 = vpop.permute.xlu0 %440
    %v444 = vadd.f32 %v432, %v439
    %v445 = vadd.f32 %v436, %v441
    %v447 = vrot.slane %v392, 1
    %v448 = vperm.slane %v392, 0
    %v449 = vperm.slane %v447, 0
    %v452 = vadd.f32 %v444, %v448
    %v453 = vadd.f32 %v445, %v449
    %v454 = vtanh.pop %v452
    %v455 = vtanh.pop %v453
    %v456 = vld [vmem:[%s10] sm:$0x1]
    %v458 = vperm.slane %v456, 0
    %v460 = vmul.f32 %v454, %v458
    %v461 = vmul.f32 %v455, %v458
    %vm462 = vcmask 254976
    %v463 = vsel %vm462, %v460, 0.0
    %464 = vadd.xlane.f32.xlu0 %v463
    %v465 = vpop.xlane.xlu0 %464
    %v466 = vsel %vm462, %v461, 0.0
    %467 = vadd.xlane.f32.xlu0 %v466
    %v468 = vpop.xlane.xlu0 %467
    %v471 = vperm.slane %v465, %v200
    %v472 = vperm.slane %v468, %v200
    %v473 = vsel %vm209, %v472, %v471
    %vm475 = vcmask 9216
    %v476 = vsel %vm475, %v473, -inf
    %477 = vmax.xlane.f32.xlu0 %v476
    %v478 = vpop.xlane.xlu0 %477
    %v480 = vperm.slane %v478, 0
    %v481 = vperm.slane %v478, 1
    %v484 = vsub.f32 %v465, %v480
    %v485 = vsub.f32 %v468, %v481
    %v486 = vmul.f32 %v484, 1.442695
    %v487 = vpow.pop %v486
    %v488 = vmul.f32 %v485, 1.442695
    %v489 = vpow.pop %v488
    %492 = vset.pattern.permute.xlu0 0
    %493 = vperm.xlu0 %492, %v487
    %v494 = vpop.permute.xlu0 %493
    %495 = vset.pattern.permute.xlu0 0
    %496 = vperm.xlu0 %495, %v489
    %v497 = vpop.permute.xlu0 %496
    %v498 = vperm.slane %v494, %v200
    %v499 = vperm.slane %v497, %v200
    %v500 = vsel %vm209, %v499, %v498
    %v502 = vsel %vm475, %v500, 0.0
    %503 = vadd.xlane.f32.xlu0 %v502
    %v504 = vpop.xlane.xlu0 %503
    %v506 = vperm.slane %v504, 0
    %v507 = vperm.slane %v504, 1
    %v510 = vrcp.pop %v506
    %v511 = vmul.f32 %v506, %v510
    %v512 = vsub.f32 1.0, %v511
    %v513 = vmul.f32 %v510, %v512
    %v514 = vadd.f32 %v510, %v513
    %vm515 = vweird.f32 %v506
    %vm516 = vweird.f32 %v510
    %vm517 = vmor %vm515, %vm516
    %v518 = vsel %vm517, %v510, %v514
    %v519 = vand.u32 2147483647, %v506
    %vm520 = vcmp.eq.f32.partialorder %v519, 8.507059e+37
    %v521 = vand.u32 %v506, 2147483648
    %v522 = vor.u32 1.1754944e-38, %v521
    %v523 = vsel %vm520, %v522, %v518
    %v524 = vmul.f32 %v487, %v523
    %v525 = vrcp.pop %v507
    %v526 = vmul.f32 %v507, %v525
    %v527 = vsub.f32 1.0, %v526
    %v528 = vmul.f32 %v525, %v527
    %v529 = vadd.f32 %v525, %v528
    %vm530 = vweird.f32 %v507
    %vm531 = vweird.f32 %v525
    %vm532 = vmor %vm530, %vm531
    %v533 = vsel %vm532, %v525, %v529
    %v534 = vand.u32 2147483647, %v507
    %vm535 = vcmp.eq.f32.partialorder %v534, 8.507059e+37
    %v536 = vand.u32 %v507, 2147483648
    %v537 = vor.u32 1.1754944e-38, %v536
    %v538 = vsel %vm535, %v537, %v533
    %v539 = vmul.f32 %v489, %v538
    %541 = vset.pattern.permute.xlu0 0
    %542 = vperm.xlu0 %541, %v524
    %v543 = vpop.permute.xlu0 %542
    %546 = vset.pattern.permute.xlu0 0
    %547 = vperm.xlu0 %546, %v539
    %v548 = vpop.permute.xlu0 %547
    %v550 = vmul.f32 %v543, %v61
    %v551 = vmul.f32 %v548, %v62
    %v552 = vsel %vm462, %v550, 0.0
    %v553 = vrot.slane %v552, 4
    %v554 = vadd.f32 %v552, %v553
    %v555 = vrot.slane %v554, 2
    %v556 = vadd.f32 %v554, %v555
    %v557 = vrot.slane %v556, 1
    %v558 = vadd.f32 %v556, %v557
    %v559 = vsel %vm462, %v551, 0.0
    %v560 = vrot.slane %v559, 4
    %v561 = vadd.f32 %v559, %v560
    %v562 = vrot.slane %v561, 2
    %v563 = vadd.f32 %v561, %v562
    %v564 = vrot.slane %v563, 1
    %v565 = vadd.f32 %v563, %v564
    %v566 = vld [vmem:[%s12] sm:$0xf]
    %v567 = vld [vmem:[%s12 + $0x4] sm:$0xf]
    %v568 = vld [vmem:[%s12 + $0x8] sm:$0xf]
    %v569 = vld [vmem:[%s12 + $0xc] sm:$0xf]
    %v570 = vpack.c.bf16 %v558, %v558
    %v571 = vpack.c.bf16 %v565, %v565
    %v574 = vunpack.c.l.b16 %v570
    %v575 = vunpack.c.l.b16 %v571
    %v576 = vsel %vm209, %v575, %v574
    %v577 = vpack.c.b16 %v576, %v576
    %v582 = vunpack.c.l.b16 %v566
    %v583 = vunpack.c.l.b16 %v567
    %v584 = vunpack.c.l.b16 %v568
    %v585 = vunpack.c.l.b16 %v569
    %v586 = vpack.c.b16 %v583, %v582
    %v587 = vpack.c.b16 %v585, %v584
    %v591 = vsel %vm84, %v577, 0
    %593 = vmatpush.bf16.msra.mxu0 0
    %594 = vmatpush.bf16.msra.mxu0 0
    %595 = vmatpush.bf16.msra.mxu0 0
    %596 = vmatpush.bf16.msra.mxu0 0
    %597 = vmatpush.bf16.msra.mxu0 0
    %598 = vmatpush.bf16.msra.mxu0 0
    %599 = vmatpush.bf16.msra.mxu0 %v587
    %600 = vmatpush.bf16.msra.mxu0 %v586
    %601 = vmatmul.bf16.gmra.mxu0 %v591
    %v602 = vpop.f32.mrf.mxu0
    %v603 = vadd.f32 0.0, %v602
    %v604 = vpop.f32.mrf.mxu0
    %605 = vdwg.mxu0
    %v606 = vld [vmem:[%s11] sm:$0xf]
    %v607 = vld [vmem:[%s11 + $0x4] sm:$0xf]
    %v608 = vld [vmem:[%s11 + $0x8] sm:$0xf]
    %v609 = vld [vmem:[%s11 + $0xc] sm:$0xf]
    %v610 = vpack.c.bf16 %v60, %v59
    %v615 = vunpack.c.l.b16 %v606
    %v616 = vunpack.c.l.b16 %v607
    %v617 = vunpack.c.l.b16 %v608
    %v618 = vunpack.c.l.b16 %v609
    %v619 = vpack.c.b16 %v616, %v615
    %v620 = vpack.c.b16 %v618, %v617
    %v624 = vsel %vm84, %v610, 0
    %626 = vmatpush.bf16.msra.mxu0 0
    %627 = vmatpush.bf16.msra.mxu0 0
    %628 = vmatpush.bf16.msra.mxu0 0
    %629 = vmatpush.bf16.msra.mxu0 0
    %630 = vmatpush.bf16.msra.mxu0 0
    %631 = vmatpush.bf16.msra.mxu0 0
    %632 = vmatpush.bf16.msra.mxu0 %v620
    %633 = vmatpush.bf16.msra.mxu0 %v619
    %634 = vmatmul.bf16.gmra.mxu0 %v624
    %v635 = vpop.f32.mrf.mxu0
    %v636 = vadd.f32 0.0, %v635
    %v637 = vpop.f32.mrf.mxu0
    %v638 = vadd.f32 0.0, %v637
    %639 = vdwg.mxu0
    %v641 = vrot.slane %v603, 1
    %v642 = vperm.slane %v603, 0
    %v643 = vperm.slane %v641, 0
    %v646 = vadd.f32 %v636, %v642
    %v647 = vadd.f32 %v638, %v643
    %648 = vrot.lane.b32.xlu0 %v448, 96
    %v649 = vpop.permute.xlu0 %648
    %650 = vrot.lane.b32.xlu0 %v449, 96
    %v651 = vpop.permute.xlu0 %650
    %v654 = vadd.f32 %v646, %v649
    %v655 = vadd.f32 %v647, %v651
    %v656 = vtanh.pop %v654
    %v657 = vtanh.pop %v655
    %v658 = vld [vmem:[%s13] sm:$0x1]
    %v660 = vperm.slane %v658, 0
    %v662 = vmul.f32 %v656, %v660
    %v663 = vmul.f32 %v657, %v660
    %v664 = vsel %vm84, %v662, 0.0
    %665 = vadd.xlane.f32.xlu0 %v664
    %v666 = vpop.xlane.xlu0 %665
    %v667 = vsel %vm84, %v663, 0.0
    %668 = vadd.xlane.f32.xlu0 %v667
    %v669 = vpop.xlane.xlu0 %668
    %vm670 = vcmp.eq.f32.partialorder %v666, 0.0
    %vm671 = vcmp.eq.f32.partialorder %v669, 0.0
    %v672 = vld [vmem:[%s2] sm:$0x3]
    %673 = vset.pattern.permute.xlu0 0
    %674 = vperm.xlu0 %673, %v672
    %v675 = vpop.permute.xlu0 %674
    %vm676 = vcmp.ge.s32.totalorder %v200, %v675
    %v677 = vsel %vm676, 1, 0
    %v678 = vperm.slane %v677, 0
    %v679 = vlaneseq
    %v680 = vshrl.u32 %v679, 7
    %682 = vset.pattern.permute.xlu0 %v680
    %683 = vperm.xlu0 %682, %v678
    %v684 = vpop.permute.xlu0 %683
    %v685 = vperm.slane %v677, 1
    %v686 = vlaneseq
    %v687 = vshrl.u32 %v686, 7
    %689 = vset.pattern.permute.xlu0 %v687
    %690 = vperm.xlu0 %689, %v685
    %v691 = vpop.permute.xlu0 %690
    %vm692 = vcmp.ne.s32.totalorder %v684, 0
    %vm693 = vcmp.ne.s32.totalorder %v691, 0
    %vm694 = vmor %vm670, %vm692
    %vm695 = vmor %vm671, %vm693
    %v696 = vsel %vm694, -100000.0, %v666
    %v697 = vsel %vm695, -100000.0, %v669
    %700 = vset.pattern.permute.xlu0 0
    %701 = vperm.xlu0 %700, %v696
    %v702 = vpop.permute.xlu0 %701
    %703 = vset.pattern.permute.xlu0 0
    %704 = vperm.xlu0 %703, %v697
    %v705 = vpop.permute.xlu0 %704
    %v706 = vperm.slane %v702, %v200
    %v707 = vperm.slane %v705, %v200
    %v708 = vsel %vm209, %v707, %v706
    %vm710 = vcmask 58368
    %v711 = vsel %vm710, %v708, -inf
    %712 = vmax.xlane.f32.xlu0 %v711
    %v713 = vpop.xlane.xlu0 %712
    %v715 = vperm.slane %v713, 0
    %v716 = vperm.slane %v713, 1
    %v719 = vsub.f32 %v696, %v715
    %v720 = vsub.f32 %v697, %v716
    %v721 = vmul.f32 %v719, 1.442695
    %v722 = vpow.pop %v721
    %v723 = vmul.f32 %v720, 1.442695
    %v724 = vpow.pop %v723
    %727 = vset.pattern.permute.xlu0 0
    %728 = vperm.xlu0 %727, %v722
    %v729 = vpop.permute.xlu0 %728
    %730 = vset.pattern.permute.xlu0 0
    %731 = vperm.xlu0 %730, %v724
    %v732 = vpop.permute.xlu0 %731
    %v733 = vperm.slane %v729, %v200
    %v734 = vperm.slane %v732, %v200
    %v735 = vsel %vm209, %v734, %v733
    %v737 = vsel %vm710, %v735, 0.0
    %738 = vadd.xlane.f32.xlu0 %v737
    %v739 = vpop.xlane.xlu0 %738
    %v741 = vperm.slane %v739, 0
    %v742 = vperm.slane %v739, 1
    %v745 = vrcp.pop %v741
    %v746 = vmul.f32 %v741, %v745
    %v747 = vsub.f32 1.0, %v746
    %v748 = vmul.f32 %v745, %v747
    %v749 = vadd.f32 %v745, %v748
    %vm750 = vweird.f32 %v741
    %vm751 = vweird.f32 %v745
    %vm752 = vmor %vm750, %vm751
    %v753 = vsel %vm752, %v745, %v749
    %v754 = vand.u32 2147483647, %v741
    %vm755 = vcmp.eq.f32.partialorder %v754, 8.507059e+37
    %v756 = vand.u32 %v741, 2147483648
    %v757 = vor.u32 1.1754944e-38, %v756
    %v758 = vsel %vm755, %v757, %v753
    %v759 = vmul.f32 %v722, %v758
    %v760 = vrcp.pop %v742
    %v761 = vmul.f32 %v742, %v760
    %v762 = vsub.f32 1.0, %v761
    %v763 = vmul.f32 %v760, %v762
    %v764 = vadd.f32 %v760, %v763
    %vm765 = vweird.f32 %v742
    %vm766 = vweird.f32 %v760
    %vm767 = vmor %vm765, %vm766
    %v768 = vsel %vm767, %v760, %v764
    %v769 = vand.u32 2147483647, %v742
    %vm770 = vcmp.eq.f32.partialorder %v769, 8.507059e+37
    %v771 = vand.u32 %v742, 2147483648
    %v772 = vor.u32 1.1754944e-38, %v771
    %v773 = vsel %vm770, %v772, %v768
    %v774 = vmul.f32 %v724, %v773
    %776 = vset.pattern.permute.xlu0 0
    %777 = vperm.xlu0 %776, %v759
    %v778 = vpop.permute.xlu0 %777
    %781 = vset.pattern.permute.xlu0 0
    %782 = vperm.xlu0 %781, %v774
    %v783 = vpop.permute.xlu0 %782
    %v785 = vmul.f32 %v778, %v59
    %v786 = vmul.f32 %v783, %v60
    %v787 = vsel %vm84, %v785, 0.0
    %v788 = vrot.slane %v787, 4
    %v789 = vadd.f32 %v787, %v788
    %v790 = vrot.slane %v789, 2
    %v791 = vadd.f32 %v789, %v790
    %v792 = vrot.slane %v791, 1
    %v793 = vadd.f32 %v791, %v792
    %v794 = vsel %vm84, %v786, 0.0
    %v795 = vrot.slane %v794, 4
    %v796 = vadd.f32 %v794, %v795
    %v797 = vrot.slane %v796, 2
    %v798 = vadd.f32 %v796, %v797
    %v799 = vrot.slane %v798, 1
    %v800 = vadd.f32 %v798, %v799
    %v801 = vld [vmem:[%s14] sm:$0xf]
    %v802 = vld [vmem:[%s14 + $0x4] sm:$0xf]
    %v803 = vld [vmem:[%s14 + $0x8] sm:$0xf]
    %v804 = vld [vmem:[%s14 + $0xc] sm:$0xf]
    %v805 = vpack.c.bf16 %v793, %v793
    %v806 = vpack.c.bf16 %v800, %v800
    %v809 = vunpack.c.l.b16 %v805
    %v810 = vunpack.c.l.b16 %v806
    %v811 = vsel %vm209, %v810, %v809
    %v812 = vpack.c.b16 %v811, %v811
    %v817 = vunpack.c.l.b16 %v801
    %v818 = vunpack.c.l.b16 %v802
    %v819 = vunpack.c.l.b16 %v803
    %v820 = vunpack.c.l.b16 %v804
    %v821 = vpack.c.b16 %v818, %v817
    %v822 = vpack.c.b16 %v820, %v819
    %v826 = vsel %vm84, %v812, 0
    %828 = vmatpush.bf16.msra.mxu0 0
    %829 = vmatpush.bf16.msra.mxu0 0
    %830 = vmatpush.bf16.msra.mxu0 0
    %831 = vmatpush.bf16.msra.mxu0 0
    %832 = vmatpush.bf16.msra.mxu0 0
    %833 = vmatpush.bf16.msra.mxu0 0
    %834 = vmatpush.bf16.msra.mxu0 %v822
    %835 = vmatpush.bf16.msra.mxu0 %v821
    %836 = vmatmul.bf16.gmra.mxu0 %v826
    %v837 = vpop.f32.mrf.mxu0
    %v838 = vadd.f32 0.0, %v837
    %v839 = vpop.f32.mrf.mxu0
    %840 = vdwg.mxu0
    %v842 = vrot.slane %v838, 1
    %v843 = vperm.slane %v838, 0
    %v844 = vperm.slane %v842, 0
    %845 = vrot.lane.b32.xlu0 %v843, 32
    %v846 = vpop.permute.xlu0 %845
    %847 = vrot.lane.b32.xlu0 %v844, 32
    %v848 = vpop.permute.xlu0 %847
    %v851 = vadd.f32 %v152, %v846
    %v852 = vadd.f32 %v154, %v846
    %v853 = vadd.f32 %v157, %v848
    %v854 = vadd.f32 %v159, %v848
    %v855 = vadd.f32 %v851, %v642
    %v856 = vadd.f32 %v852, %v642
    %v857 = vadd.f32 %v853, %v643
    %v858 = vadd.f32 %v854, %v643
    %v859 = vtanh.pop %v855
    %v860 = vtanh.pop %v856
    %v861 = vtanh.pop %v857
    %v862 = vtanh.pop %v858
    %v863 = vld [vmem:[%s15] sm:$0x1]
    %v865 = vperm.slane %v863, 0
    %866 = vrot.lane.b32.xlu0 %v865, 32
    %v867 = vpop.permute.xlu0 %866
    %v869 = vmul.f32 %v859, %v867
    %v870 = vmul.f32 %v860, %v867
    %v871 = vmul.f32 %v861, %v867
    %v872 = vmul.f32 %v862, %v867
    %877 = vrot.lane.b32.xlu0 %v869, 96
    %v878 = vpop.permute.xlu0 %877
    %879 = vrot.lane.b32.xlu0 %v870, 96
    %v880 = vpop.permute.xlu0 %879
    %881 = vrot.lane.b32.xlu0 %v871, 96
    %v882 = vpop.permute.xlu0 %881
    %883 = vrot.lane.b32.xlu0 %v872, 96
    %v884 = vpop.permute.xlu0 %883
    %v889 = vsel %vm84, %v878, 0.0
    %890 = vadd.xlane.f32.xlu0 %v889
    %v891 = vpop.xlane.xlu0 %890
    %v892 = vsel %vm84, %v880, 0.0
    %893 = vadd.xlane.f32.xlu0 %v892
    %v894 = vpop.xlane.xlu0 %893
    %v895 = vsel %vm84, %v882, 0.0
    %896 = vadd.xlane.f32.xlu0 %v895
    %v897 = vpop.xlane.xlu0 %896
    %v898 = vsel %vm84, %v884, 0.0
    %899 = vadd.xlane.f32.xlu0 %v898
    %v900 = vpop.xlane.xlu0 %899
    %v905 = vperm.slane %v891, %v200
    %v906 = vperm.slane %v894, %v202
    %v907 = vsel %vm204, %v906, %v905
    %v908 = vperm.slane %v897, %v200
    %v909 = vperm.slane %v900, %v202
    %v910 = vsel %vm204, %v909, %v908
    %v911 = vsel %vm209, %v910, %v907
    %v913 = vsel %vm212, %v911, -inf
    %914 = vmax.xlane.f32.xlu0 %v913
    %v915 = vpop.xlane.xlu0 %914
    %v917 = vperm.slane %v915, 0
    %v918 = vperm.slane %v915, 1
    %v921 = vsub.f32 %v891, %v917
    %v922 = vsub.f32 %v894, %v917
    %v923 = vsub.f32 %v897, %v918
    %v924 = vsub.f32 %v900, %v918
    %v925 = vmul.f32 %v921, 1.442695
    %v926 = vpow.pop %v925
    %v927 = vmul.f32 %v922, 1.442695
    %v928 = vpow.pop %v927
    %v929 = vmul.f32 %v923, 1.442695
    %v930 = vpow.pop %v929
    %v931 = vmul.f32 %v924, 1.442695
    %v932 = vpow.pop %v931
    %937 = vset.pattern.permute.xlu0 0
    %938 = vperm.xlu0 %937, %v926
    %v939 = vpop.permute.xlu0 %938
    %940 = vset.pattern.permute.xlu0 0
    %941 = vperm.xlu0 %940, %v928
    %v942 = vpop.permute.xlu0 %941
    %943 = vset.pattern.permute.xlu0 0
    %944 = vperm.xlu0 %943, %v930
    %v945 = vpop.permute.xlu0 %944
    %946 = vset.pattern.permute.xlu0 0
    %947 = vperm.xlu0 %946, %v932
    %v948 = vpop.permute.xlu0 %947
    %v949 = vperm.slane %v939, %v200
    %v950 = vperm.slane %v942, %v202
    %v951 = vsel %vm204, %v950, %v949
    %v952 = vperm.slane %v945, %v200
    %v953 = vperm.slane %v948, %v202
    %v954 = vsel %vm204, %v953, %v952
    %v955 = vsel %vm209, %v954, %v951
    %v957 = vsel %vm212, %v955, 0.0
    %958 = vadd.xlane.f32.xlu0 %v957
    %v959 = vpop.xlane.xlu0 %958
    %v961 = vperm.slane %v959, 0
    %v962 = vperm.slane %v959, 1
    %v965 = vrcp.pop %v961
    %v966 = vmul.f32 %v961, %v965
    %v967 = vsub.f32 1.0, %v966
    %v968 = vmul.f32 %v965, %v967
    %v969 = vadd.f32 %v965, %v968
    %vm970 = vweird.f32 %v961
    %vm971 = vweird.f32 %v965
    %vm972 = vmor %vm970, %vm971
    %v973 = vsel %vm972, %v965, %v969
    %v974 = vand.u32 2147483647, %v961
    %vm975 = vcmp.eq.f32.partialorder %v974, 8.507059e+37
    %v976 = vand.u32 %v961, 2147483648
    %v977 = vor.u32 1.1754944e-38, %v976
    %v978 = vsel %vm975, %v977, %v973
    %v979 = vmul.f32 %v926, %v978
    %v980 = vmul.f32 %v928, %v978
    %v981 = vrcp.pop %v962
    %v982 = vmul.f32 %v962, %v981
    %v983 = vsub.f32 1.0, %v982
    %v984 = vmul.f32 %v981, %v983
    %v985 = vadd.f32 %v981, %v984
    %vm986 = vweird.f32 %v962
    %vm987 = vweird.f32 %v981
    %vm988 = vmor %vm986, %vm987
    %v989 = vsel %vm988, %v981, %v985
    %v990 = vand.u32 2147483647, %v962
    %vm991 = vcmp.eq.f32.partialorder %v990, 8.507059e+37
    %v992 = vand.u32 %v962, 2147483648
    %v993 = vor.u32 1.1754944e-38, %v992
    %v994 = vsel %vm991, %v993, %v989
    %v995 = vmul.f32 %v930, %v994
    %v996 = vmul.f32 %v932, %v994
    %998 = vset.pattern.permute.xlu0 0
    %999 = vperm.xlu0 %998, %v979
    %v1000 = vpop.permute.xlu0 %999
    %1003 = vset.pattern.permute.xlu0 0
    %1004 = vperm.xlu0 %1003, %v980
    %v1005 = vpop.permute.xlu0 %1004
    %1008 = vset.pattern.permute.xlu0 0
    %1009 = vperm.xlu0 %1008, %v995
    %v1010 = vpop.permute.xlu0 %1009
    %1013 = vset.pattern.permute.xlu0 0
    %1014 = vperm.xlu0 %1013, %v996
    %v1015 = vpop.permute.xlu0 %1014
    %v1017 = vmul.f32 %v1000, %v63
    %v1018 = vmul.f32 %v1005, %v64
    %v1019 = vmul.f32 %v1010, %v65
    %v1020 = vmul.f32 %v1015, %v66
    %v1021 = vsel %vm135, %v1017, 0.0
    %v1022 = vsel %vm135, %v1018, 0.0
    %v1023 = vadd.f32 %v1021, %v1022
    %v1024 = vrot.slane %v1023, 4
    %v1025 = vadd.f32 %v1023, %v1024
    %v1026 = vrot.slane %v1025, 2
    %v1027 = vadd.f32 %v1025, %v1026
    %v1028 = vrot.slane %v1027, 1
    %v1029 = vadd.f32 %v1027, %v1028
    %v1030 = vsel %vm135, %v1019, 0.0
    %v1031 = vsel %vm135, %v1020, 0.0
    %v1032 = vadd.f32 %v1030, %v1031
    %v1033 = vrot.slane %v1032, 4
    %v1034 = vadd.f32 %v1032, %v1033
    %v1035 = vrot.slane %v1034, 2
    %v1036 = vadd.f32 %v1034, %v1035
    %v1037 = vrot.slane %v1036, 1
    %v1038 = vadd.f32 %v1036, %v1037
    %1039 = vrot.lane.b32.xlu0 %v603, 96
    %v1040 = vpop.permute.xlu0 %1039
    %v1042 = vadd.f32 %v838, %v1040
    %v1043 = vld [vmem:[%s16] sm:$0xf]
    %v1044 = vld [vmem:[%s16 + $0x4] sm:$0xf]
    %v1045 = vld [vmem:[%s16 + $0x8] sm:$0xf]
    %v1046 = vld [vmem:[%s16 + $0xc] sm:$0xf]
    %v1047 = vld [vmem:[%s16 + $0x10] sm:$0xf]
    %v1048 = vld [vmem:[%s16 + $0x14] sm:$0xf]
    %v1049 = vld [vmem:[%s16 + $0x18] sm:$0xf]
    %v1050 = vld [vmem:[%s16 + $0x1c] sm:$0xf]
    %v1051 = vpack.c.bf16 %v1029, %v1029
    %v1052 = vpack.c.bf16 %v1038, %v1038
    %v1055 = vunpack.c.l.b16 %v1051
    %v1056 = vunpack.c.l.b16 %v1052
    %v1057 = vsel %vm209, %v1056, %v1055
    %v1058 = vpack.c.b16 %v1057, %v1057
    %v1067 = vunpack.c.l.b16 %v1043
    %v1068 = vunpack.c.l.b16 %v1044
    %v1069 = vunpack.c.l.b16 %v1045
    %v1070 = vunpack.c.l.b16 %v1046
    %v1071 = vunpack.c.l.b16 %v1047
    %v1072 = vunpack.c.l.b16 %v1048
    %v1073 = vunpack.c.l.b16 %v1049
    %v1074 = vunpack.c.l.b16 %v1050
    %v1075 = vpack.c.b16 %v1068, %v1067
    %v1076 = vpack.c.b16 %v1070, %v1069
    %v1077 = vpack.c.b16 %v1072, %v1071
    %v1078 = vpack.c.b16 %v1074, %v1073
    %v1084 = vsel %vm135, %v1058, 0
    %1086 = vmatpush.bf16.msra.mxu0 0
    %1087 = vmatpush.bf16.msra.mxu0 0
    %1088 = vmatpush.bf16.msra.mxu0 0
    %1089 = vmatpush.bf16.msra.mxu0 0
    %1090 = vmatpush.bf16.msra.mxu0 %v1078
    %1091 = vmatpush.bf16.msra.mxu0 %v1077
    %1092 = vmatpush.bf16.msra.mxu0 %v1076
    %1093 = vmatpush.bf16.msra.mxu0 %v1075
    %1094 = vmatmul.bf16.gmra.mxu0 %v1084
    %v1095 = vpop.f32.mrf.mxu0
    %v1096 = vadd.f32 0.0, %v1095
    %v1097 = vpop.f32.mrf.mxu0
    %1098 = vdwg.mxu0
    %1100 = vrot.lane.b32.xlu0 %v1096, 32
    %v1101 = vpop.permute.xlu0 %1100
    %v1103 = vadd.f32 %v1042, %v1101
    %v1104 = vtanh.pop %v1103
    %1106 = vrot.lane.b32.xlu0 %v1104, 96
    %v1107 = vpop.permute.xlu0 %1106
    %1109 = vst.msk [vmem:[#allocation2] sm:$0x3] %vm462, %v1107
    // Predicated region
    $region70: #{coatt_encoder_forward.5} parent=1 // pred_check
      _
    $region71: #{coatt_encoder_forward.5} parent=1 // pred_check_branch
      %1111 = sbr.rel (0) target = $region73
    $region72: #{coatt_encoder_forward.5} parent=1 // pred_region
      %1113 = vsyncadd [#allocation3], 0
      %s1115 = sshll.u32 [#allocation2], 4
      %s1116 = int_to_ptr.vmem [resolvable:$true] %s1115
      %s1117 = sshll.u32 %s17, 4
      %s1118 = int_to_ptr.hbm [resolvable:$true] %s1117
      %1120 = dma.vmem_to_hbm [thread:$0]  %s1116, 32, %s1118, [#allocation3]
    $region73: #{coatt_encoder_forward.5} parent=1 // pred_fallthru
      _
    // Predicated region
    $region74: #{coatt_encoder_forward.5} parent=1 // pred_check
      _
    $region75: #{coatt_encoder_forward.5} parent=1 // pred_check_branch
      %1122 = sbr.rel (0) target = $region77
    $region76: #{coatt_encoder_forward.5} parent=1 // pred_region
      %1124 = dma.done [#allocation3], 32
    $region77: #{coatt_encoder_forward.5} parent=1 // pred_fallthru
      _
    %1125 = vsyncpa [#allocation3], 1

</llo_original>
